<compile_context>
chip_gen: v5e
topology: v5e:2x2
jax: 0.10.0
libtpu: 0.0.40
codegen_flags: <defaults>
</compile_context>

<pallas_src>
import functools

import jax
import jax.numpy as jnp
from jax.experimental import pallas as pl
from jax.experimental.pallas import tpu as pltpu

_NEG_SLOPE = 0.01  # PyTorch nn.LeakyReLU() default negative_slope


def _leaky_relu(x):
    return jnp.where(x > 0, x, _NEG_SLOPE * x)


def _basemean_flat_kernel(x_ref, mean_mat_ref, out_ref, *, n_rows, em_dim,
                          precision):
    """One batch tile in the lane-dense flat layout.

    x_ref:        (tb, N*D)   row-major flatten of (tb, N, D)
    mean_mat_ref: (N*D, N*D)  constant: M[k, k'] = 1/N iff k % D == k' % D
    out_ref:      (tb, (N-1)*D)
    """
    f_out = (n_rows - 1) * em_dim

    x = x_ref[...].astype(jnp.float32)            # (tb, N*D), compute in f32
    mean_mat = mean_mat_ref[...]                  # (N*D, N*D) f32 constant

    # base_mp pass 1: mean over the N rows for every (batch, d), already
    # replicated ("tiled") across the N*D lane axis by the constant matmul.
    mu1t = jnp.dot(x, mean_mat, preferred_element_type=jnp.float32,
                   precision=precision)           # (tb, N*D)
    a1 = _leaky_relu(x * mu1t)                    # (tb, N*D)  (dropout = id)

    # base_mp pass 2: mean over ALL N rows of a1 (reference semantics).  The
    # constant's columns are D-periodic, so its aligned [:, :f_out] slice
    # yields mu2 tiled for the N-1 output rows directly.
    mu2t = jnp.dot(a1, mean_mat[:, :f_out], preferred_element_type=jnp.float32,
                   precision=precision)           # (tb, (N-1)*D)
    a2 = _leaky_relu(a1[:, em_dim:] * mu2t)       # drop row 0 == lane shift
    out_ref[...] = a2.astype(out_ref.dtype)


def _vmem_config():
    """(tile-selection budget, explicit scoped-VMEM limit), generation-aware."""
    try:
        cap = pltpu.get_tpu_info().vmem_capacity_bytes
    except Exception:
        cap = 64 << 20                 # conservative: v7x physical VMEM per TC
    budget = min(cap // 4, 16 << 20)   # double-buffered in+out + temporaries
    limit = min(cap // 2, 32 << 20)    # explicit scoped-VMEM limit
    return budget, limit


def _min_grid_steps():
    """v7x has 2 TensorCores: ask for >=4 pipelined grid steps per core."""
    try:
        kind = jax.devices()[0].device_kind.lower()
    except Exception:
        return 1
    return 8 if "7" in kind else 1


def _choose_batch_tile(batch, f_in, f_out, itemsize, vmem_budget_bytes,
                       min_grid_steps):
    # Per batch row: double-buffered in+out tile bytes + ~4 live f32 temporaries.
    per_row = 2 * itemsize * (f_in + f_out) + 4 * 4 * f_in
    cap = max(1, vmem_budget_bytes // per_row)
    target = min(cap, pl.cdiv(batch, max(1, min_grid_steps)))
    if target >= batch:
        return batch                               # one tile, no padding
    return min(batch, max(8, (target // 8) * 8))   # sublane-dense partial tile


def basemean_w_id_2_0(embeddings, *, batch_tile=None, precision="auto"):
    """embeddings: (B, N, D) float32/bfloat16. Returns (B, N-1, D) (eval mode)."""
    B, N, D = embeddings.shape
    M = N - 1
    f_in, f_out = N * D, M * D
    itemsize = jnp.dtype(embeddings.dtype).itemsize

    vmem_budget, vmem_limit = _vmem_config()
    if batch_tile is not None:
        if batch_tile < B and batch_tile % 8 != 0:
            raise ValueError("batch_tile must be a multiple of 8 or >= B")
        tb = min(batch_tile, B)
    else:
        tb = _choose_batch_tile(B, f_in, f_out, itemsize, vmem_budget,
                                _min_grid_steps())

    # Free, contiguous reshape to the lane-dense flat layout (no transpose).
    x_flat = embeddings.reshape(B, f_in)
    b_pad = pl.cdiv(B, tb) * tb
    if b_pad != B:  # awkward B: pad with zero rows (flow through as zeros)
        x_flat = jnp.pad(x_flat, ((0, b_pad - B), (0, 0)))

    # Constant "mean over N + tile across N" matrix: 1/N iff k % D == k' % D.
    k = jnp.arange(f_in)
    mean_mat = jnp.where((k[:, None] % D) == (k[None, :] % D),
                         jnp.float32(1.0 / N), jnp.float32(0.0))

    grid = (b_pad // tb,)
    flops = B * (2 * f_in * (f_in + f_out) + 6 * f_in)
    bytes_accessed = itemsize * B * (f_in + f_out) + 4 * f_in * f_in

    def run(prec):
        kernel = functools.partial(_basemean_flat_kernel,
                                   n_rows=N, em_dim=D, precision=prec)
        return pl.pallas_call(
            kernel,
            out_shape=jax.ShapeDtypeStruct((b_pad, f_out), embeddings.dtype),
            grid_spec=pl.GridSpec(
                grid=grid,
                in_specs=[pl.BlockSpec((tb, f_in), lambda b: (b, 0)),
                          pl.BlockSpec((f_in, f_in), lambda b: (0, 0))],
                out_specs=pl.BlockSpec((tb, f_out), lambda b: (b, 0)),
            ),
            compiler_params=pltpu.CompilerParams(
                dimension_semantics=("parallel",),
                vmem_limit_bytes=vmem_limit),
            cost_estimate=pl.CostEstimate(
                flops=flops, transcendentals=0, bytes_accessed=bytes_accessed),
        )(x_flat, mean_mat)

    if precision == "auto":
        try:
            out_flat = run(jax.lax.Precision.HIGHEST)  # full-f32 mean on the MXU
        except Exception:
            out_flat = run(None)                       # defensive fallback
    else:
        out_flat = run(precision)

    out = out_flat.reshape(b_pad, M, D)
    return out[:B] if b_pad != B else out


def _reference(embeddings):
    """Pure-JAX reference mirroring the PyTorch forward (eval mode)."""
    def base_mp(x):
        mu = x.mean(axis=1, keepdims=True)
        y = x * mu
        return jnp.where(y > 0, y, _NEG_SLOPE * y)  # LeakyReLU; dropout = id
    return base_mp(base_mp(embeddings))[:, 1:, :]


if __name__ == "__main__":
    # Small shapes: batch=8, N = 1 user + 8 items = 9, em_dim = 32
    B, N, D = 8, 9, 32
    key = jax.random.PRNGKey(0)
    embeddings = jax.random.normal(key, (B, N, D), dtype=jnp.float32)

    out = jax.block_until_ready(basemean_w_id_2_0(embeddings))
    ref = _reference(embeddings)

    assert out.shape == (B, N - 1, D)
    assert jnp.allclose(out, ref, atol=1e-3, rtol=1e-3), "mismatch vs reference"

    print("KERNEL_OK")
</pallas_src>

<mosaic_0001>
module attributes {stable_mosaic.version = 11 : i64} {
  func.func @_basemean_flat_kernel(%arg0: i32, %arg1: memref<8x288xf32, #tpu.memory_space<vmem>>, %arg2: memref<288x288xf32, #tpu.memory_space<vmem>>, %arg3: memref<8x256xf32, #tpu.memory_space<vmem>>) attributes {dimension_semantics = [#tpu.dimension_semantics<parallel>], iteration_bounds = array<i64: 1>, scalar_prefetch = 0 : i64, scratch_operands = 0 : i64, tpu.core_type = #tpu.core_type<tc>, window_params = [{transform_indices = @transform_0, window_bounds = array<i64: 8, 288>}, {pipeline_mode = #tpu.pipeline_mode<synchronous>, transform_indices = @transform_1, window_bounds = array<i64: 288, 288>}, {transform_indices = @transform_2, window_bounds = array<i64: 8, 256>}]} {
    %c0 = arith.constant 0 : index
    %c0_0 = arith.constant 0 : index
    %0 = vector.load %arg1[%c0, %c0_0] : memref<8x288xf32, #tpu.memory_space<vmem>>, vector<8x288xf32>
    %c0_1 = arith.constant 0 : index
    %c0_2 = arith.constant 0 : index
    %1 = vector.load %arg2[%c0_1, %c0_2] : memref<288x288xf32, #tpu.memory_space<vmem>>, vector<288x288xf32>
    %cst = arith.constant dense<0.000000e+00> : vector<8x288xf32>
    %2 = tpu.matmul %0, %1, %cst {dimension_numbers = #tpu.dot_dimension_numbers<[1], [0], [0], [1], [0, 0, 1, 1], [], []>, precision = #tpu.contract_precision<fp32>} : vector<8x288xf32>, vector<288x288xf32>, vector<8x288xf32> -> vector<8x288xf32>
    %3 = arith.mulf %0, %2 : vector<8x288xf32>
    %cst_3 = arith.constant 0.000000e+00 : f32
    %4 = vector.broadcast %cst_3 : f32 to vector<8x288xf32>
    %5 = arith.cmpf ogt, %3, %4 : vector<8x288xf32>
    %cst_4 = arith.constant 0.00999999977 : f32
    %6 = vector.broadcast %cst_4 : f32 to vector<8x288xf32>
    %7 = arith.mulf %6, %3 : vector<8x288xf32>
    %8 = arith.select %5, %3, %7 : vector<8x288xi1>, vector<8x288xf32>
    %9 = vector.extract_strided_slice %1 {offsets = [0, 0], sizes = [288, 256], strides = [1, 1]} : vector<288x288xf32> to vector<288x256xf32>
    %cst_5 = arith.constant dense<0.000000e+00> : vector<8x256xf32>
    %10 = tpu.matmul %8, %9, %cst_5 {dimension_numbers = #tpu.dot_dimension_numbers<[1], [0], [0], [1], [0, 0, 1, 1], [], []>, precision = #tpu.contract_precision<fp32>} : vector<8x288xf32>, vector<288x256xf32>, vector<8x256xf32> -> vector<8x256xf32>
    %11 = vector.extract_strided_slice %8 {offsets = [0, 32], sizes = [8, 256], strides = [1, 1]} : vector<8x288xf32> to vector<8x256xf32>
    %12 = arith.mulf %11, %10 : vector<8x256xf32>
    %cst_6 = arith.constant 0.000000e+00 : f32
    %13 = vector.broadcast %cst_6 : f32 to vector<8x256xf32>
    %14 = arith.cmpf ogt, %12, %13 : vector<8x256xf32>
    %cst_7 = arith.constant 0.00999999977 : f32
    %15 = vector.broadcast %cst_7 : f32 to vector<8x256xf32>
    %16 = arith.mulf %15, %12 : vector<8x256xf32>
    %17 = arith.select %14, %12, %16 : vector<8x256xi1>, vector<8x256xf32>
    %c0_8 = arith.constant 0 : index
    %c0_9 = arith.constant 0 : index
    %18 = vector.load %arg3[%c0_8, %c0_9] : memref<8x256xf32, #tpu.memory_space<vmem>>, vector<8x256xf32>
    tpu.vector_store %arg3[%c0_8, %c0_9], %17 {strides = array<i32>} : memref<8x256xf32, #tpu.memory_space<vmem>>, vector<8x256xf32>,
    return
  }
  func.func @transform_0(%arg0: i32) -> (i32, i32) {
    %c0_i32 = arith.constant 0 : i32
    %c0_i32_0 = arith.constant 0 : i32
    return %arg0, %c0_i32 : i32, i32
  }
  func.func @transform_1(%arg0: i32) -> (i32, i32) {
    %c0_i32 = arith.constant 0 : i32
    %c0_i32_0 = arith.constant 0 : i32
    %c0_i32_1 = arith.constant 0 : i32
    return %c0_i32, %c0_i32_0 : i32, i32
  }
  func.func @transform_2(%arg0: i32) -> (i32, i32) {
    %c0_i32 = arith.constant 0 : i32
    %c0_i32_0 = arith.constant 0 : i32
    return %arg0, %c0_i32 : i32, i32
  }
}

module attributes {stable_mosaic.version = 11 : i64} {
  func.func @_basemean_flat_kernel(%arg0: i32, %arg1: memref<8x288xf32, #tpu.memory_space<vmem>>, %arg2: memref<288x288xf32, #tpu.memory_space<vmem>>, %arg3: memref<8x256xf32, #tpu.memory_space<vmem>>) attributes {dimension_semantics = [#tpu.dimension_semantics<parallel>], iteration_bounds = array<i64: 1>, scalar_prefetch = 0 : i64, scratch_operands = 0 : i64, tpu.core_type = #tpu.core_type<tc>, window_params = [{transform_indices = @transform_0, window_bounds = array<i64: 8, 288>}, {pipeline_mode = #tpu.pipeline_mode<synchronous>, transform_indices = @transform_1, window_bounds = array<i64: 288, 288>}, {transform_indices = @transform_2, window_bounds = array<i64: 8, 256>}]} {
    %c0 = arith.constant 0 : index
    %c0_0 = arith.constant 0 : index
    %0 = vector.load %arg1[%c0, %c0_0] : memref<8x288xf32, #tpu.memory_space<vmem>>, vector<8x288xf32>
    %c0_1 = arith.constant 0 : index
    %c0_2 = arith.constant 0 : index
    %1 = vector.load %arg2[%c0_1, %c0_2] : memref<288x288xf32, #tpu.memory_space<vmem>>, vector<288x288xf32>
    %cst = arith.constant dense<0.000000e+00> : vector<8x288xf32>
    %2 = tpu.matmul %0, %1, %cst {dimension_numbers = #tpu.dot_dimension_numbers<[1], [0], [0], [1], [0, 0, 1, 1], [], []>} : vector<8x288xf32>, vector<288x288xf32>, vector<8x288xf32> -> vector<8x288xf32>
    %3 = arith.mulf %0, %2 : vector<8x288xf32>
    %cst_3 = arith.constant 0.000000e+00 : f32
    %4 = vector.broadcast %cst_3 : f32 to vector<8x288xf32>
    %5 = arith.cmpf ogt, %3, %4 : vector<8x288xf32>
    %cst_4 = arith.constant 0.00999999977 : f32
    %6 = vector.broadcast %cst_4 : f32 to vector<8x288xf32>
    %7 = arith.mulf %6, %3 : vector<8x288xf32>
    %8 = arith.select %5, %3, %7 : vector<8x288xi1>, vector<8x288xf32>
    %9 = vector.extract_strided_slice %1 {offsets = [0, 0], sizes = [288, 256], strides = [1, 1]} : vector<288x288xf32> to vector<288x256xf32>
    %cst_5 = arith.constant dense<0.000000e+00> : vector<8x256xf32>
    %10 = tpu.matmul %8, %9, %cst_5 {dimension_numbers = #tpu.dot_dimension_numbers<[1], [0], [0], [1], [0, 0, 1, 1], [], []>} : vector<8x288xf32>, vector<288x256xf32>, vector<8x256xf32> -> vector<8x256xf32>
    %11 = vector.extract_strided_slice %8 {offsets = [0, 32], sizes = [8, 256], strides = [1, 1]} : vector<8x288xf32> to vector<8x256xf32>
    %12 = arith.mulf %11, %10 : vector<8x256xf32>
    %cst_6 = arith.constant 0.000000e+00 : f32
    %13 = vector.broadcast %cst_6 : f32 to vector<8x256xf32>
    %14 = arith.cmpf ogt, %12, %13 : vector<8x256xf32>
    %cst_7 = arith.constant 0.00999999977 : f32
    %15 = vector.broadcast %cst_7 : f32 to vector<8x256xf32>
    %16 = arith.mulf %15, %12 : vector<8x256xf32>
    %17 = arith.select %14, %12, %16 : vector<8x256xi1>, vector<8x256xf32>
    %c0_8 = arith.constant 0 : index
    %c0_9 = arith.constant 0 : index
    %18 = vector.load %arg3[%c0_8, %c0_9] : memref<8x256xf32, #tpu.memory_space<vmem>>, vector<8x256xf32>
    tpu.vector_store %arg3[%c0_8, %c0_9], %17 {strides = array<i32>} : memref<8x256xf32, #tpu.memory_space<vmem>>, vector<8x256xf32>,
    return
  }
  func.func @transform_0(%arg0: i32) -> (i32, i32) {
    %c0_i32 = arith.constant 0 : i32
    %c0_i32_0 = arith.constant 0 : i32
    return %arg0, %c0_i32 : i32, i32
  }
  func.func @transform_1(%arg0: i32) -> (i32, i32) {
    %c0_i32 = arith.constant 0 : i32
    %c0_i32_0 = arith.constant 0 : i32
    %c0_i32_1 = arith.constant 0 : i32
    return %c0_i32, %c0_i32_0 : i32, i32
  }
  func.func @transform_2(%arg0: i32) -> (i32, i32) {
    %c0_i32 = arith.constant 0 : i32
    %c0_i32_0 = arith.constant 0 : i32
    return %arg0, %c0_i32 : i32, i32
  }
}

</mosaic_0001>

<llo_original>
// kernel: tpu_custom_call.1
$region0: #{tpu_custom_call.1}
  #allocation0 [shape = 'u32[]', space=smem, size = 0x4, offset = 0x4, fixed_abs, tag = 'smem constant byte address 0x4 - core index']
  #allocation1 [shape = 'u32[72,128]{1,0:T(1,128)}', space=vmem, size = 0x9000, scoped, tag = 'internal scratch']
  %s0 = inlined_call_operand.hbm [shape: f32[8,288], index: 0, kind: input, shape index: {}]
  %s1 = inlined_call_operand.hbm [shape: f32[288,288], index: 1, kind: input, shape index: {}]
  %s2 = inlined_call_operand.hbm [shape: f32[8,256], index: 2, kind: output, shape index: {}]
  %s3 = sld [smem:[#allocation0]]
  $region26: #{tpu_custom_call.1} parent=0
    _
  %s5 = ssub.s32 1, %s3
  %s6 = scalar_select 0, %s5, %s3
  $region1: #{tpu_custom_call.1} parent=0
    #allocation2 [shape = 'u8[12288]{0}', space=vmem, size = 0x3000, scoped, tag = 'input window, operand 0, single buffered']
    #allocation3 [shape = 's32[1]{0}', space=sflag, size = 0x4, scoped, tag = 'scoped memory for tpu_custom_call.1']
    #allocation4 [shape = 's32[1]{0}', space=sflag, size = 0x4, scoped, tag = 'scoped memory for tpu_custom_call.1']
    #allocation5 [shape = 'u8[442368]{0}', space=vmem, size = 0x6c000, scoped, tag = 'input window, operand 1, single buffered']
    #allocation6 [shape = 's32[1]{0}', space=sflag, size = 0x4, scoped, tag = 'scoped memory for tpu_custom_call.1']
    #allocation7 [shape = 'u8[8192]{0}', space=vmem, size = 0x2000, scoped, tag = 'output window, operand 0, single buffered']
    %7 = vsyncpa [#allocation3], 0
    %8 = vsyncpa [#allocation6], 0
    %9 = vsyncpa [#allocation4], 0
    // Predicated region
    $region2: #{tpu_custom_call.1} parent=1 // pred_check
      _
    $region3: #{tpu_custom_call.1} parent=1 // pred_check_branch
      %11 = sbr.rel (0) target = $region5
    $region4: #{tpu_custom_call.1} parent=1 // pred_region
      %13 = vsyncadd [#allocation3], 0
      %s15 = sshll.u32 %s0, 4
      %s16 = int_to_ptr.hbm [resolvable:$true] %s15
      %s17 = sshll.u32 [#allocation2], 4
      %s18 = int_to_ptr.vmem [resolvable:$true] %s17
      %20 = dma.hbm_to_vmem [thread:$0]  %s16, 384, %s18, [#allocation3]
    $region5: #{tpu_custom_call.1} parent=1 // pred_fallthru
      _
    // Predicated region
    $region6: #{tpu_custom_call.1} parent=1 // pred_check
      _
    $region7: #{tpu_custom_call.1} parent=1 // pred_check_branch
      %22 = sbr.rel (0) target = $region9
    $region8: #{tpu_custom_call.1} parent=1 // pred_region
      %24 = vsyncadd [#allocation6], 0
      %s25 = sshll.u32 %s1, 4
      %s26 = int_to_ptr.hbm [resolvable:$true] %s25
      %s27 = sshll.u32 [#allocation5], 4
      %s28 = int_to_ptr.vmem [resolvable:$true] %s27
      %33 = dma.hbm_to_vmem [thread:$0]  %s26, 13824, %s28, [#allocation6], 384, 384, 24
    $region9: #{tpu_custom_call.1} parent=1 // pred_fallthru
      _
    // Predicated region
    $region10: #{tpu_custom_call.1} parent=1 // pred_check
      _
    $region11: #{tpu_custom_call.1} parent=1 // pred_check_branch
      %35 = sbr.rel (0) target = $region13
    $region12: #{tpu_custom_call.1} parent=1 // pred_region
      %37 = dma.done [#allocation3], 384
    $region13: #{tpu_custom_call.1} parent=1 // pred_fallthru
      _
    // Predicated region
    $region14: #{tpu_custom_call.1} parent=1 // pred_check
      _
    $region15: #{tpu_custom_call.1} parent=1 // pred_check_branch
      %39 = sbr.rel (0) target = $region17
    $region16: #{tpu_custom_call.1} parent=1 // pred_region
      %41 = dma.done [#allocation6], 13824
    $region17: #{tpu_custom_call.1} parent=1 // pred_fallthru
      _
    %v42 = vld [vmem:[#allocation2] sm:$0xff]
    %v43 = vld [vmem:[#allocation2 + $0x8] sm:$0xff]
    %v44 = vld [vmem:[#allocation2 + $0x10] sm:$0xff]
    %v45 = vld [vmem:[#allocation5] sm:$0xff]
    %v46 = vld [vmem:[#allocation5 + $0x8] sm:$0xff]
    %v47 = vld [vmem:[#allocation5 + $0x10] sm:$0xff]
    %v48 = vld [vmem:[#allocation5 + $0x18] sm:$0xff]
    %v49 = vld [vmem:[#allocation5 + $0x20] sm:$0xff]
    %v50 = vld [vmem:[#allocation5 + $0x28] sm:$0xff]
    %v51 = vld [vmem:[#allocation5 + $0x30] sm:$0xff]
    %v52 = vld [vmem:[#allocation5 + $0x38] sm:$0xff]
    %v53 = vld [vmem:[#allocation5 + $0x40] sm:$0xff]
    %v54 = vld [vmem:[#allocation5 + $0x48] sm:$0xff]
    %v55 = vld [vmem:[#allocation5 + $0x50] sm:$0xff]
    %v56 = vld [vmem:[#allocation5 + $0x58] sm:$0xff]
    %v57 = vld [vmem:[#allocation5 + $0x60] sm:$0xff]
    %v58 = vld [vmem:[#allocation5 + $0x68] sm:$0xff]
    %v59 = vld [vmem:[#allocation5 + $0x70] sm:$0xff]
    %v60 = vld [vmem:[#allocation5 + $0x78] sm:$0xff]
    %v61 = vld [vmem:[#allocation5 + $0x80] sm:$0xff]
    %v62 = vld [vmem:[#allocation5 + $0x88] sm:$0xff]
    %v63 = vld [vmem:[#allocation5 + $0x90] sm:$0xff]
    %v64 = vld [vmem:[#allocation5 + $0x98] sm:$0xff]
    %v65 = vld [vmem:[#allocation5 + $0xa0] sm:$0xff]
    %v66 = vld [vmem:[#allocation5 + $0xa8] sm:$0xff]
    %v67 = vld [vmem:[#allocation5 + $0xb0] sm:$0xff]
    %v68 = vld [vmem:[#allocation5 + $0xb8] sm:$0xff]
    %v69 = vld [vmem:[#allocation5 + $0xc0] sm:$0xff]
    %v70 = vld [vmem:[#allocation5 + $0xc8] sm:$0xff]
    %v71 = vld [vmem:[#allocation5 + $0xd0] sm:$0xff]
    %v72 = vld [vmem:[#allocation5 + $0xd8] sm:$0xff]
    %v73 = vld [vmem:[#allocation5 + $0xe0] sm:$0xff]
    %v74 = vld [vmem:[#allocation5 + $0xe8] sm:$0xff]
    %v75 = vld [vmem:[#allocation5 + $0xf0] sm:$0xff]
    %v76 = vld [vmem:[#allocation5 + $0xf8] sm:$0xff]
    %v77 = vld [vmem:[#allocation5 + $0x100] sm:$0xff]
    %v78 = vld [vmem:[#allocation5 + $0x108] sm:$0xff]
    %v79 = vld [vmem:[#allocation5 + $0x110] sm:$0xff]
    %v80 = vld [vmem:[#allocation5 + $0x118] sm:$0xff]
    %v81 = vld [vmem:[#allocation5 + $0x120] sm:$0xff]
    %v82 = vld [vmem:[#allocation5 + $0x128] sm:$0xff]
    %v83 = vld [vmem:[#allocation5 + $0x130] sm:$0xff]
    %v84 = vld [vmem:[#allocation5 + $0x138] sm:$0xff]
    %v85 = vld [vmem:[#allocation5 + $0x140] sm:$0xff]
    %v86 = vld [vmem:[#allocation5 + $0x148] sm:$0xff]
    %v87 = vld [vmem:[#allocation5 + $0x150] sm:$0xff]
    %v88 = vld [vmem:[#allocation5 + $0x158] sm:$0xff]
    %v89 = vld [vmem:[#allocation5 + $0x160] sm:$0xff]
    %v90 = vld [vmem:[#allocation5 + $0x168] sm:$0xff]
    %v91 = vld [vmem:[#allocation5 + $0x170] sm:$0xff]
    %v92 = vld [vmem:[#allocation5 + $0x178] sm:$0xff]
    %v93 = vld [vmem:[#allocation5 + $0x180] sm:$0xff]
    %v94 = vld [vmem:[#allocation5 + $0x188] sm:$0xff]
    %v95 = vld [vmem:[#allocation5 + $0x190] sm:$0xff]
    %v96 = vld [vmem:[#allocation5 + $0x198] sm:$0xff]
    %v97 = vld [vmem:[#allocation5 + $0x1a0] sm:$0xff]
    %v98 = vld [vmem:[#allocation5 + $0x1a8] sm:$0xff]
    %v99 = vld [vmem:[#allocation5 + $0x1b0] sm:$0xff]
    %v100 = vld [vmem:[#allocation5 + $0x1b8] sm:$0xff]
    %v101 = vld [vmem:[#allocation5 + $0x1c0] sm:$0xff]
    %v102 = vld [vmem:[#allocation5 + $0x1c8] sm:$0xff]
    %v103 = vld [vmem:[#allocation5 + $0x1d0] sm:$0xff]
    %v104 = vld [vmem:[#allocation5 + $0x1d8] sm:$0xff]
    %v105 = vld [vmem:[#allocation5 + $0x1e0] sm:$0xff]
    %v106 = vld [vmem:[#allocation5 + $0x1e8] sm:$0xff]
    %v107 = vld [vmem:[#allocation5 + $0x1f0] sm:$0xff]
    %v108 = vld [vmem:[#allocation5 + $0x1f8] sm:$0xff]
    %v109 = vld [vmem:[#allocation5 + $0x200] sm:$0xff]
    %v110 = vld [vmem:[#allocation5 + $0x208] sm:$0xff]
    %v111 = vld [vmem:[#allocation5 + $0x210] sm:$0xff]
    %v112 = vld [vmem:[#allocation5 + $0x218] sm:$0xff]
    %v113 = vld [vmem:[#allocation5 + $0x220] sm:$0xff]
    %v114 = vld [vmem:[#allocation5 + $0x228] sm:$0xff]
    %v115 = vld [vmem:[#allocation5 + $0x230] sm:$0xff]
    %v116 = vld [vmem:[#allocation5 + $0x238] sm:$0xff]
    %v117 = vld [vmem:[#allocation5 + $0x240] sm:$0xff]
    %v118 = vld [vmem:[#allocation5 + $0x248] sm:$0xff]
    %v119 = vld [vmem:[#allocation5 + $0x250] sm:$0xff]
    %v120 = vld [vmem:[#allocation5 + $0x258] sm:$0xff]
    %v121 = vld [vmem:[#allocation5 + $0x260] sm:$0xff]
    %v122 = vld [vmem:[#allocation5 + $0x268] sm:$0xff]
    %v123 = vld [vmem:[#allocation5 + $0x270] sm:$0xff]
    %v124 = vld [vmem:[#allocation5 + $0x278] sm:$0xff]
    %v125 = vld [vmem:[#allocation5 + $0x280] sm:$0xff]
    %v126 = vld [vmem:[#allocation5 + $0x288] sm:$0xff]
    %v127 = vld [vmem:[#allocation5 + $0x290] sm:$0xff]
    %v128 = vld [vmem:[#allocation5 + $0x298] sm:$0xff]
    %v129 = vld [vmem:[#allocation5 + $0x2a0] sm:$0xff]
    %v130 = vld [vmem:[#allocation5 + $0x2a8] sm:$0xff]
    %v131 = vld [vmem:[#allocation5 + $0x2b0] sm:$0xff]
    %v132 = vld [vmem:[#allocation5 + $0x2b8] sm:$0xff]
    %v133 = vld [vmem:[#allocation5 + $0x2c0] sm:$0xff]
    %v134 = vld [vmem:[#allocation5 + $0x2c8] sm:$0xff]
    %v135 = vld [vmem:[#allocation5 + $0x2d0] sm:$0xff]
    %v136 = vld [vmem:[#allocation5 + $0x2d8] sm:$0xff]
    %v137 = vld [vmem:[#allocation5 + $0x2e0] sm:$0xff]
    %v138 = vld [vmem:[#allocation5 + $0x2e8] sm:$0xff]
    %v139 = vld [vmem:[#allocation5 + $0x2f0] sm:$0xff]
    %v140 = vld [vmem:[#allocation5 + $0x2f8] sm:$0xff]
    %v141 = vld [vmem:[#allocation5 + $0x300] sm:$0xff]
    %v142 = vld [vmem:[#allocation5 + $0x308] sm:$0xff]
    %v143 = vld [vmem:[#allocation5 + $0x310] sm:$0xff]
    %v144 = vld [vmem:[#allocation5 + $0x318] sm:$0xff]
    %v145 = vld [vmem:[#allocation5 + $0x320] sm:$0xff]
    %v146 = vld [vmem:[#allocation5 + $0x328] sm:$0xff]
    %v147 = vld [vmem:[#allocation5 + $0x330] sm:$0xff]
    %v148 = vld [vmem:[#allocation5 + $0x338] sm:$0xff]
    %v149 = vld [vmem:[#allocation5 + $0x340] sm:$0xff]
    %v150 = vld [vmem:[#allocation5 + $0x348] sm:$0xff]
    %v151 = vld [vmem:[#allocation5 + $0x350] sm:$0xff]
    %v152 = vld [vmem:[#allocation5 + $0x358] sm:$0xff]
    %vm153 = vcmask 261120
    %v155 = vsel %vm153, %v44, 0
    %v157 = vand.u32 %v90, 4294901760
    %158 = vmatpush.msra.mxu0 %v157
    %v159 = vand.u32 %v87, 4294901760
    %160 = vmatpush.msra.mxu0 %v159
    %v161 = vand.u32 %v84, 4294901760
    %162 = vmatpush.msra.mxu0 %v161
    %v163 = vand.u32 %v81, 4294901760
    %164 = vmatpush.msra.mxu0 %v163
    %v165 = vand.u32 %v78, 4294901760
    %166 = vmatpush.msra.mxu0 %v165
    %v167 = vand.u32 %v75, 4294901760
    %168 = vmatpush.msra.mxu0 %v167
    %v169 = vand.u32 %v72, 4294901760
    %170 = vmatpush.msra.mxu0 %v169
    %v171 = vand.u32 %v69, 4294901760
    %172 = vmatpush.msra.mxu0 %v171
    %v173 = vand.u32 %v66, 4294901760
    %174 = vmatpush.msra.mxu0 %v173
    %v175 = vand.u32 %v63, 4294901760
    %176 = vmatpush.msra.mxu0 %v175
    %v177 = vand.u32 %v60, 4294901760
    %178 = vmatpush.msra.mxu0 %v177
    %v179 = vand.u32 %v57, 4294901760
    %180 = vmatpush.msra.mxu0 %v179
    %v181 = vand.u32 %v54, 4294901760
    %182 = vmatpush.msra.mxu0 %v181
    %v183 = vand.u32 %v51, 4294901760
    %184 = vmatpush.msra.mxu0 %v183
    %v185 = vand.u32 %v48, 4294901760
    %186 = vmatpush.msra.mxu0 %v185
    %v187 = vand.u32 %v45, 4294901760
    %188 = vmatpush.msra.mxu0 %v187
    %v189 = vand.u32 %v42, 4294901760
    %v190 = vsub.f32 %v42, %v189
    %v191 = vand.u32 %v190, 4294901760
    %v192 = vsub.f32 %v190, %v191
    %v193 = vand.u32 %v192, 4294901760
    %194 = vmatmul.f32.gmra.mxu0 %v193
    %v195 = vpop.f32.mrf.mxu0
    %v196 = vadd.f32 0.0, %v195
    %197 = vdwg.mxu0
    %v198 = vand.u32 %v90, 4294901760
    %v199 = vsub.f32 %v90, %v198
    %v200 = vand.u32 %v199, 4294901760
    %v201 = vsub.f32 %v199, %v200
    %v202 = vand.u32 %v201, 4294901760
    %203 = vmatpush.msra.mxu0 %v202
    %v204 = vand.u32 %v87, 4294901760
    %v205 = vsub.f32 %v87, %v204
    %v206 = vand.u32 %v205, 4294901760
    %v207 = vsub.f32 %v205, %v206
    %v208 = vand.u32 %v207, 4294901760
    %209 = vmatpush.msra.mxu0 %v208
    %v210 = vand.u32 %v84, 4294901760
    %v211 = vsub.f32 %v84, %v210
    %v212 = vand.u32 %v211, 4294901760
    %v213 = vsub.f32 %v211, %v212
    %v214 = vand.u32 %v213, 4294901760
    %215 = vmatpush.msra.mxu0 %v214
    %v216 = vand.u32 %v81, 4294901760
    %v217 = vsub.f32 %v81, %v216
    %v218 = vand.u32 %v217, 4294901760
    %v219 = vsub.f32 %v217, %v218
    %v220 = vand.u32 %v219, 4294901760
    %221 = vmatpush.msra.mxu0 %v220
    %v222 = vand.u32 %v78, 4294901760
    %v223 = vsub.f32 %v78, %v222
    %v224 = vand.u32 %v223, 4294901760
    %v225 = vsub.f32 %v223, %v224
    %v226 = vand.u32 %v225, 4294901760
    %227 = vmatpush.msra.mxu0 %v226
    %v228 = vand.u32 %v75, 4294901760
    %v229 = vsub.f32 %v75, %v228
    %v230 = vand.u32 %v229, 4294901760
    %v231 = vsub.f32 %v229, %v230
    %v232 = vand.u32 %v231, 4294901760
    %233 = vmatpush.msra.mxu0 %v232
    %v234 = vand.u32 %v72, 4294901760
    %v235 = vsub.f32 %v72, %v234
    %v236 = vand.u32 %v235, 4294901760
    %v237 = vsub.f32 %v235, %v236
    %v238 = vand.u32 %v237, 4294901760
    %239 = vmatpush.msra.mxu0 %v238
    %v240 = vand.u32 %v69, 4294901760
    %v241 = vsub.f32 %v69, %v240
    %v242 = vand.u32 %v241, 4294901760
    %v243 = vsub.f32 %v241, %v242
    %v244 = vand.u32 %v243, 4294901760
    %245 = vmatpush.msra.mxu0 %v244
    %v246 = vand.u32 %v66, 4294901760
    %v247 = vsub.f32 %v66, %v246
    %v248 = vand.u32 %v247, 4294901760
    %v249 = vsub.f32 %v247, %v248
    %v250 = vand.u32 %v249, 4294901760
    %251 = vmatpush.msra.mxu0 %v250
    %v252 = vand.u32 %v63, 4294901760
    %v253 = vsub.f32 %v63, %v252
    %v254 = vand.u32 %v253, 4294901760
    %v255 = vsub.f32 %v253, %v254
    %v256 = vand.u32 %v255, 4294901760
    %257 = vmatpush.msra.mxu0 %v256
    %v258 = vand.u32 %v60, 4294901760
    %v259 = vsub.f32 %v60, %v258
    %v260 = vand.u32 %v259, 4294901760
    %v261 = vsub.f32 %v259, %v260
    %v262 = vand.u32 %v261, 4294901760
    %263 = vmatpush.msra.mxu0 %v262
    %v264 = vand.u32 %v57, 4294901760
    %v265 = vsub.f32 %v57, %v264
    %v266 = vand.u32 %v265, 4294901760
    %v267 = vsub.f32 %v265, %v266
    %v268 = vand.u32 %v267, 4294901760
    %269 = vmatpush.msra.mxu0 %v268
    %v270 = vand.u32 %v54, 4294901760
    %v271 = vsub.f32 %v54, %v270
    %v272 = vand.u32 %v271, 4294901760
    %v273 = vsub.f32 %v271, %v272
    %v274 = vand.u32 %v273, 4294901760
    %275 = vmatpush.msra.mxu0 %v274
    %v276 = vand.u32 %v51, 4294901760
    %v277 = vsub.f32 %v51, %v276
    %v278 = vand.u32 %v277, 4294901760
    %v279 = vsub.f32 %v277, %v278
    %v280 = vand.u32 %v279, 4294901760
    %281 = vmatpush.msra.mxu0 %v280
    %v282 = vand.u32 %v48, 4294901760
    %v283 = vsub.f32 %v48, %v282
    %v284 = vand.u32 %v283, 4294901760
    %v285 = vsub.f32 %v283, %v284
    %v286 = vand.u32 %v285, 4294901760
    %287 = vmatpush.msra.mxu0 %v286
    %v288 = vand.u32 %v45, 4294901760
    %v289 = vsub.f32 %v45, %v288
    %v290 = vand.u32 %v289, 4294901760
    %v291 = vsub.f32 %v289, %v290
    %v292 = vand.u32 %v291, 4294901760
    %293 = vmatpush.msra.mxu0 %v292
    %v294 = vand.u32 %v42, 4294901760
    %295 = vmatmul.f32.gmra.mxu0 %v294
    %v296 = vpop.f32.mrf.mxu0
    %v297 = vadd.f32 %v196, %v296
    %298 = vdwg.mxu0
    %v299 = vand.u32 %v90, 4294901760
    %v300 = vsub.f32 %v90, %v299
    %301 = vmatpush.msra.mxu0 %v300
    %v302 = vand.u32 %v87, 4294901760
    %v303 = vsub.f32 %v87, %v302
    %304 = vmatpush.msra.mxu0 %v303
    %v305 = vand.u32 %v84, 4294901760
    %v306 = vsub.f32 %v84, %v305
    %307 = vmatpush.msra.mxu0 %v306
    %v308 = vand.u32 %v81, 4294901760
    %v309 = vsub.f32 %v81, %v308
    %310 = vmatpush.msra.mxu0 %v309
    %v311 = vand.u32 %v78, 4294901760
    %v312 = vsub.f32 %v78, %v311
    %313 = vmatpush.msra.mxu0 %v312
    %v314 = vand.u32 %v75, 4294901760
    %v315 = vsub.f32 %v75, %v314
    %316 = vmatpush.msra.mxu0 %v315
    %v317 = vand.u32 %v72, 4294901760
    %v318 = vsub.f32 %v72, %v317
    %319 = vmatpush.msra.mxu0 %v318
    %v320 = vand.u32 %v69, 4294901760
    %v321 = vsub.f32 %v69, %v320
    %322 = vmatpush.msra.mxu0 %v321
    %v323 = vand.u32 %v66, 4294901760
    %v324 = vsub.f32 %v66, %v323
    %325 = vmatpush.msra.mxu0 %v324
    %v326 = vand.u32 %v63, 4294901760
    %v327 = vsub.f32 %v63, %v326
    %328 = vmatpush.msra.mxu0 %v327
    %v329 = vand.u32 %v60, 4294901760
    %v330 = vsub.f32 %v60, %v329
    %331 = vmatpush.msra.mxu0 %v330
    %v332 = vand.u32 %v57, 4294901760
    %v333 = vsub.f32 %v57, %v332
    %334 = vmatpush.msra.mxu0 %v333
    %v335 = vand.u32 %v54, 4294901760
    %v336 = vsub.f32 %v54, %v335
    %337 = vmatpush.msra.mxu0 %v336
    %v338 = vand.u32 %v51, 4294901760
    %v339 = vsub.f32 %v51, %v338
    %340 = vmatpush.msra.mxu0 %v339
    %v341 = vand.u32 %v48, 4294901760
    %v342 = vsub.f32 %v48, %v341
    %343 = vmatpush.msra.mxu0 %v342
    %v344 = vand.u32 %v45, 4294901760
    %v345 = vsub.f32 %v45, %v344
    %346 = vmatpush.msra.mxu0 %v345
    %v347 = vand.u32 %v42, 4294901760
    %v348 = vsub.f32 %v42, %v347
    %349 = vmatmul.f32.gmra.mxu0 %v348
    %v350 = vpop.f32.mrf.mxu0
    %v351 = vadd.f32 %v297, %v350
    %352 = vdwg.mxu0
    %v353 = vand.u32 %v90, 4294901760
    %354 = vmatpush.msra.mxu0 %v353
    %v355 = vand.u32 %v87, 4294901760
    %356 = vmatpush.msra.mxu0 %v355
    %v357 = vand.u32 %v84, 4294901760
    %358 = vmatpush.msra.mxu0 %v357
    %v359 = vand.u32 %v81, 4294901760
    %360 = vmatpush.msra.mxu0 %v359
    %v361 = vand.u32 %v78, 4294901760
    %362 = vmatpush.msra.mxu0 %v361
    %v363 = vand.u32 %v75, 4294901760
    %364 = vmatpush.msra.mxu0 %v363
    %v365 = vand.u32 %v72, 4294901760
    %366 = vmatpush.msra.mxu0 %v365
    %v367 = vand.u32 %v69, 4294901760
    %368 = vmatpush.msra.mxu0 %v367
    %v369 = vand.u32 %v66, 4294901760
    %370 = vmatpush.msra.mxu0 %v369
    %v371 = vand.u32 %v63, 4294901760
    %372 = vmatpush.msra.mxu0 %v371
    %v373 = vand.u32 %v60, 4294901760
    %374 = vmatpush.msra.mxu0 %v373
    %v375 = vand.u32 %v57, 4294901760
    %376 = vmatpush.msra.mxu0 %v375
    %v377 = vand.u32 %v54, 4294901760
    %378 = vmatpush.msra.mxu0 %v377
    %v379 = vand.u32 %v51, 4294901760
    %380 = vmatpush.msra.mxu0 %v379
    %v381 = vand.u32 %v48, 4294901760
    %382 = vmatpush.msra.mxu0 %v381
    %v383 = vand.u32 %v45, 4294901760
    %384 = vmatpush.msra.mxu0 %v383
    %v385 = vand.u32 %v42, 4294901760
    %v386 = vsub.f32 %v42, %v385
    %v387 = vand.u32 %v386, 4294901760
    %388 = vmatmul.f32.gmra.mxu0 %v387
    %v389 = vpop.f32.mrf.mxu0
    %v390 = vadd.f32 %v351, %v389
    %391 = vdwg.mxu0
    %v392 = vand.u32 %v90, 4294901760
    %v393 = vsub.f32 %v90, %v392
    %v394 = vand.u32 %v393, 4294901760
    %395 = vmatpush.msra.mxu0 %v394
    %v396 = vand.u32 %v87, 4294901760
    %v397 = vsub.f32 %v87, %v396
    %v398 = vand.u32 %v397, 4294901760
    %399 = vmatpush.msra.mxu0 %v398
    %v400 = vand.u32 %v84, 4294901760
    %v401 = vsub.f32 %v84, %v400
    %v402 = vand.u32 %v401, 4294901760
    %403 = vmatpush.msra.mxu0 %v402
    %v404 = vand.u32 %v81, 4294901760
    %v405 = vsub.f32 %v81, %v404
    %v406 = vand.u32 %v405, 4294901760
    %407 = vmatpush.msra.mxu0 %v406
    %v408 = vand.u32 %v78, 4294901760
    %v409 = vsub.f32 %v78, %v408
    %v410 = vand.u32 %v409, 4294901760
    %411 = vmatpush.msra.mxu0 %v410
    %v412 = vand.u32 %v75, 4294901760
    %v413 = vsub.f32 %v75, %v412
    %v414 = vand.u32 %v413, 4294901760
    %415 = vmatpush.msra.mxu0 %v414
    %v416 = vand.u32 %v72, 4294901760
    %v417 = vsub.f32 %v72, %v416
    %v418 = vand.u32 %v417, 4294901760
    %419 = vmatpush.msra.mxu0 %v418
    %v420 = vand.u32 %v69, 4294901760
    %v421 = vsub.f32 %v69, %v420
    %v422 = vand.u32 %v421, 4294901760
    %423 = vmatpush.msra.mxu0 %v422
    %v424 = vand.u32 %v66, 4294901760
    %v425 = vsub.f32 %v66, %v424
    %v426 = vand.u32 %v425, 4294901760
    %427 = vmatpush.msra.mxu0 %v426
    %v428 = vand.u32 %v63, 4294901760
    %v429 = vsub.f32 %v63, %v428
    %v430 = vand.u32 %v429, 4294901760
    %431 = vmatpush.msra.mxu0 %v430
    %v432 = vand.u32 %v60, 4294901760
    %v433 = vsub.f32 %v60, %v432
    %v434 = vand.u32 %v433, 4294901760
    %435 = vmatpush.msra.mxu0 %v434
    %v436 = vand.u32 %v57, 4294901760
    %v437 = vsub.f32 %v57, %v436
    %v438 = vand.u32 %v437, 4294901760
    %439 = vmatpush.msra.mxu0 %v438
    %v440 = vand.u32 %v54, 4294901760
    %v441 = vsub.f32 %v54, %v440
    %v442 = vand.u32 %v441, 4294901760
    %443 = vmatpush.msra.mxu0 %v442
    %v444 = vand.u32 %v51, 4294901760
    %v445 = vsub.f32 %v51, %v444
    %v446 = vand.u32 %v445, 4294901760
    %447 = vmatpush.msra.mxu0 %v446
    %v448 = vand.u32 %v48, 4294901760
    %v449 = vsub.f32 %v48, %v448
    %v450 = vand.u32 %v449, 4294901760
    %451 = vmatpush.msra.mxu0 %v450
    %v452 = vand.u32 %v45, 4294901760
    %v453 = vsub.f32 %v45, %v452
    %v454 = vand.u32 %v453, 4294901760
    %455 = vmatpush.msra.mxu0 %v454
    %v456 = vand.u32 %v42, 4294901760
    %457 = vmatmul.f32.gmra.mxu0 %v456
    %v458 = vpop.f32.mrf.mxu0
    %v459 = vadd.f32 %v390, %v458
    %460 = vdwg.mxu0
    %v461 = vand.u32 %v90, 4294901760
    %462 = vmatpush.msra.mxu0 %v461
    %v463 = vand.u32 %v87, 4294901760
    %464 = vmatpush.msra.mxu0 %v463
    %v465 = vand.u32 %v84, 4294901760
    %466 = vmatpush.msra.mxu0 %v465
    %v467 = vand.u32 %v81, 4294901760
    %468 = vmatpush.msra.mxu0 %v467
    %v469 = vand.u32 %v78, 4294901760
    %470 = vmatpush.msra.mxu0 %v469
    %v471 = vand.u32 %v75, 4294901760
    %472 = vmatpush.msra.mxu0 %v471
    %v473 = vand.u32 %v72, 4294901760
    %474 = vmatpush.msra.mxu0 %v473
    %v475 = vand.u32 %v69, 4294901760
    %476 = vmatpush.msra.mxu0 %v475
    %v477 = vand.u32 %v66, 4294901760
    %478 = vmatpush.msra.mxu0 %v477
    %v479 = vand.u32 %v63, 4294901760
    %480 = vmatpush.msra.mxu0 %v479
    %v481 = vand.u32 %v60, 4294901760
    %482 = vmatpush.msra.mxu0 %v481
    %v483 = vand.u32 %v57, 4294901760
    %484 = vmatpush.msra.mxu0 %v483
    %v485 = vand.u32 %v54, 4294901760
    %486 = vmatpush.msra.mxu0 %v485
    %v487 = vand.u32 %v51, 4294901760
    %488 = vmatpush.msra.mxu0 %v487
    %v489 = vand.u32 %v48, 4294901760
    %490 = vmatpush.msra.mxu0 %v489
    %v491 = vand.u32 %v45, 4294901760
    %492 = vmatpush.msra.mxu0 %v491
    %v493 = vand.u32 %v42, 4294901760
    %494 = vmatmul.f32.gmra.mxu0 %v493
    %v495 = vpop.f32.mrf.mxu0
    %v496 = vadd.f32 %v459, %v495
    %497 = vdwg.mxu0
    %v498 = vand.u32 %v138, 4294901760
    %499 = vmatpush.msra.mxu0 %v498
    %v500 = vand.u32 %v135, 4294901760
    %501 = vmatpush.msra.mxu0 %v500
    %v502 = vand.u32 %v132, 4294901760
    %503 = vmatpush.msra.mxu0 %v502
    %v504 = vand.u32 %v129, 4294901760
    %505 = vmatpush.msra.mxu0 %v504
    %v506 = vand.u32 %v126, 4294901760
    %507 = vmatpush.msra.mxu0 %v506
    %v508 = vand.u32 %v123, 4294901760
    %509 = vmatpush.msra.mxu0 %v508
    %v510 = vand.u32 %v120, 4294901760
    %511 = vmatpush.msra.mxu0 %v510
    %v512 = vand.u32 %v117, 4294901760
    %513 = vmatpush.msra.mxu0 %v512
    %v514 = vand.u32 %v114, 4294901760
    %515 = vmatpush.msra.mxu0 %v514
    %v516 = vand.u32 %v111, 4294901760
    %517 = vmatpush.msra.mxu0 %v516
    %v518 = vand.u32 %v108, 4294901760
    %519 = vmatpush.msra.mxu0 %v518
    %v520 = vand.u32 %v105, 4294901760
    %521 = vmatpush.msra.mxu0 %v520
    %v522 = vand.u32 %v102, 4294901760
    %523 = vmatpush.msra.mxu0 %v522
    %v524 = vand.u32 %v99, 4294901760
    %525 = vmatpush.msra.mxu0 %v524
    %v526 = vand.u32 %v96, 4294901760
    %527 = vmatpush.msra.mxu0 %v526
    %v528 = vand.u32 %v93, 4294901760
    %529 = vmatpush.msra.mxu0 %v528
    %v530 = vand.u32 %v43, 4294901760
    %v531 = vsub.f32 %v43, %v530
    %v532 = vand.u32 %v531, 4294901760
    %v533 = vsub.f32 %v531, %v532
    %v534 = vand.u32 %v533, 4294901760
    %535 = vmatmul.f32.gmra.mxu0 %v534
    %v536 = vpop.f32.mrf.mxu0
    %v537 = vadd.f32 %v496, %v536
    %538 = vdwg.mxu0
    %v539 = vand.u32 %v138, 4294901760
    %v540 = vsub.f32 %v138, %v539
    %v541 = vand.u32 %v540, 4294901760
    %v542 = vsub.f32 %v540, %v541
    %v543 = vand.u32 %v542, 4294901760
    %544 = vmatpush.msra.mxu0 %v543
    %v545 = vand.u32 %v135, 4294901760
    %v546 = vsub.f32 %v135, %v545
    %v547 = vand.u32 %v546, 4294901760
    %v548 = vsub.f32 %v546, %v547
    %v549 = vand.u32 %v548, 4294901760
    %550 = vmatpush.msra.mxu0 %v549
    %v551 = vand.u32 %v132, 4294901760
    %v552 = vsub.f32 %v132, %v551
    %v553 = vand.u32 %v552, 4294901760
    %v554 = vsub.f32 %v552, %v553
    %v555 = vand.u32 %v554, 4294901760
    %556 = vmatpush.msra.mxu0 %v555
    %v557 = vand.u32 %v129, 4294901760
    %v558 = vsub.f32 %v129, %v557
    %v559 = vand.u32 %v558, 4294901760
    %v560 = vsub.f32 %v558, %v559
    %v561 = vand.u32 %v560, 4294901760
    %562 = vmatpush.msra.mxu0 %v561
    %v563 = vand.u32 %v126, 4294901760
    %v564 = vsub.f32 %v126, %v563
    %v565 = vand.u32 %v564, 4294901760
    %v566 = vsub.f32 %v564, %v565
    %v567 = vand.u32 %v566, 4294901760
    %568 = vmatpush.msra.mxu0 %v567
    %v569 = vand.u32 %v123, 4294901760
    %v570 = vsub.f32 %v123, %v569
    %v571 = vand.u32 %v570, 4294901760
    %v572 = vsub.f32 %v570, %v571
    %v573 = vand.u32 %v572, 4294901760
    %574 = vmatpush.msra.mxu0 %v573
    %v575 = vand.u32 %v120, 4294901760
    %v576 = vsub.f32 %v120, %v575
    %v577 = vand.u32 %v576, 4294901760
    %v578 = vsub.f32 %v576, %v577
    %v579 = vand.u32 %v578, 4294901760
    %580 = vmatpush.msra.mxu0 %v579
    %v581 = vand.u32 %v117, 4294901760
    %v582 = vsub.f32 %v117, %v581
    %v583 = vand.u32 %v582, 4294901760
    %v584 = vsub.f32 %v582, %v583
    %v585 = vand.u32 %v584, 4294901760
    %586 = vmatpush.msra.mxu0 %v585
    %v587 = vand.u32 %v114, 4294901760
    %v588 = vsub.f32 %v114, %v587
    %v589 = vand.u32 %v588, 4294901760
    %v590 = vsub.f32 %v588, %v589
    %v591 = vand.u32 %v590, 4294901760
    %592 = vmatpush.msra.mxu0 %v591
    %v593 = vand.u32 %v111, 4294901760
    %v594 = vsub.f32 %v111, %v593
    %v595 = vand.u32 %v594, 4294901760
    %v596 = vsub.f32 %v594, %v595
    %v597 = vand.u32 %v596, 4294901760
    %598 = vmatpush.msra.mxu0 %v597
    %v599 = vand.u32 %v108, 4294901760
    %v600 = vsub.f32 %v108, %v599
    %v601 = vand.u32 %v600, 4294901760
    %v602 = vsub.f32 %v600, %v601
    %v603 = vand.u32 %v602, 4294901760
    %604 = vmatpush.msra.mxu0 %v603
    %v605 = vand.u32 %v105, 4294901760
    %v606 = vsub.f32 %v105, %v605
    %v607 = vand.u32 %v606, 4294901760
    %v608 = vsub.f32 %v606, %v607
    %v609 = vand.u32 %v608, 4294901760
    %610 = vmatpush.msra.mxu0 %v609
    %v611 = vand.u32 %v102, 4294901760
    %v612 = vsub.f32 %v102, %v611
    %v613 = vand.u32 %v612, 4294901760
    %v614 = vsub.f32 %v612, %v613
    %v615 = vand.u32 %v614, 4294901760
    %616 = vmatpush.msra.mxu0 %v615
    %v617 = vand.u32 %v99, 4294901760
    %v618 = vsub.f32 %v99, %v617
    %v619 = vand.u32 %v618, 4294901760
    %v620 = vsub.f32 %v618, %v619
    %v621 = vand.u32 %v620, 4294901760
    %622 = vmatpush.msra.mxu0 %v621
    %v623 = vand.u32 %v96, 4294901760
    %v624 = vsub.f32 %v96, %v623
    %v625 = vand.u32 %v624, 4294901760
    %v626 = vsub.f32 %v624, %v625
    %v627 = vand.u32 %v626, 4294901760
    %628 = vmatpush.msra.mxu0 %v627
    %v629 = vand.u32 %v93, 4294901760
    %v630 = vsub.f32 %v93, %v629
    %v631 = vand.u32 %v630, 4294901760
    %v632 = vsub.f32 %v630, %v631
    %v633 = vand.u32 %v632, 4294901760
    %634 = vmatpush.msra.mxu0 %v633
    %v635 = vand.u32 %v43, 4294901760
    %636 = vmatmul.f32.gmra.mxu0 %v635
    %v637 = vpop.f32.mrf.mxu0
    %v638 = vadd.f32 %v537, %v637
    %639 = vdwg.mxu0
    %v640 = vand.u32 %v138, 4294901760
    %v641 = vsub.f32 %v138, %v640
    %642 = vmatpush.msra.mxu0 %v641
    %v643 = vand.u32 %v135, 4294901760
    %v644 = vsub.f32 %v135, %v643
    %645 = vmatpush.msra.mxu0 %v644
    %v646 = vand.u32 %v132, 4294901760
    %v647 = vsub.f32 %v132, %v646
    %648 = vmatpush.msra.mxu0 %v647
    %v649 = vand.u32 %v129, 4294901760
    %v650 = vsub.f32 %v129, %v649
    %651 = vmatpush.msra.mxu0 %v650
    %v652 = vand.u32 %v126, 4294901760
    %v653 = vsub.f32 %v126, %v652
    %654 = vmatpush.msra.mxu0 %v653
    %v655 = vand.u32 %v123, 4294901760
    %v656 = vsub.f32 %v123, %v655
    %657 = vmatpush.msra.mxu0 %v656
    %v658 = vand.u32 %v120, 4294901760
    %v659 = vsub.f32 %v120, %v658
    %660 = vmatpush.msra.mxu0 %v659
    %v661 = vand.u32 %v117, 4294901760
    %v662 = vsub.f32 %v117, %v661
    %663 = vmatpush.msra.mxu0 %v662
    %v664 = vand.u32 %v114, 4294901760
    %v665 = vsub.f32 %v114, %v664
    %666 = vmatpush.msra.mxu0 %v665
    %v667 = vand.u32 %v111, 4294901760
    %v668 = vsub.f32 %v111, %v667
    %669 = vmatpush.msra.mxu0 %v668
    %v670 = vand.u32 %v108, 4294901760
    %v671 = vsub.f32 %v108, %v670
    %672 = vmatpush.msra.mxu0 %v671
    %v673 = vand.u32 %v105, 4294901760
    %v674 = vsub.f32 %v105, %v673
    %675 = vmatpush.msra.mxu0 %v674
    %v676 = vand.u32 %v102, 4294901760
    %v677 = vsub.f32 %v102, %v676
    %678 = vmatpush.msra.mxu0 %v677
    %v679 = vand.u32 %v99, 4294901760
    %v680 = vsub.f32 %v99, %v679
    %681 = vmatpush.msra.mxu0 %v680
    %v682 = vand.u32 %v96, 4294901760
    %v683 = vsub.f32 %v96, %v682
    %684 = vmatpush.msra.mxu0 %v683
    %v685 = vand.u32 %v93, 4294901760
    %v686 = vsub.f32 %v93, %v685
    %687 = vmatpush.msra.mxu0 %v686
    %v688 = vand.u32 %v43, 4294901760
    %v689 = vsub.f32 %v43, %v688
    %690 = vmatmul.f32.gmra.mxu0 %v689
    %v691 = vpop.f32.mrf.mxu0
    %v692 = vadd.f32 %v638, %v691
    %693 = vdwg.mxu0
    %v694 = vand.u32 %v138, 4294901760
    %695 = vmatpush.msra.mxu0 %v694
    %v696 = vand.u32 %v135, 4294901760
    %697 = vmatpush.msra.mxu0 %v696
    %v698 = vand.u32 %v132, 4294901760
    %699 = vmatpush.msra.mxu0 %v698
    %v700 = vand.u32 %v129, 4294901760
    %701 = vmatpush.msra.mxu0 %v700
    %v702 = vand.u32 %v126, 4294901760
    %703 = vmatpush.msra.mxu0 %v702
    %v704 = vand.u32 %v123, 4294901760
    %705 = vmatpush.msra.mxu0 %v704
    %v706 = vand.u32 %v120, 4294901760
    %707 = vmatpush.msra.mxu0 %v706
    %v708 = vand.u32 %v117, 4294901760
    %709 = vmatpush.msra.mxu0 %v708
    %v710 = vand.u32 %v114, 4294901760
    %711 = vmatpush.msra.mxu0 %v710
    %v712 = vand.u32 %v111, 4294901760
    %713 = vmatpush.msra.mxu0 %v712
    %v714 = vand.u32 %v108, 4294901760
    %715 = vmatpush.msra.mxu0 %v714
    %v716 = vand.u32 %v105, 4294901760
    %717 = vmatpush.msra.mxu0 %v716
    %v718 = vand.u32 %v102, 4294901760
    %719 = vmatpush.msra.mxu0 %v718
    %v720 = vand.u32 %v99, 4294901760
    %721 = vmatpush.msra.mxu0 %v720
    %v722 = vand.u32 %v96, 4294901760
    %723 = vmatpush.msra.mxu0 %v722
    %v724 = vand.u32 %v93, 4294901760
    %725 = vmatpush.msra.mxu0 %v724
    %v726 = vand.u32 %v43, 4294901760
    %v727 = vsub.f32 %v43, %v726
    %v728 = vand.u32 %v727, 4294901760
    %729 = vmatmul.f32.gmra.mxu0 %v728
    %v730 = vpop.f32.mrf.mxu0
    %v731 = vadd.f32 %v692, %v730
    %732 = vdwg.mxu0
    %v733 = vand.u32 %v138, 4294901760
    %v734 = vsub.f32 %v138, %v733
    %v735 = vand.u32 %v734, 4294901760
    %736 = vmatpush.msra.mxu0 %v735
    %v737 = vand.u32 %v135, 4294901760
    %v738 = vsub.f32 %v135, %v737
    %v739 = vand.u32 %v738, 4294901760
    %740 = vmatpush.msra.mxu0 %v739
    %v741 = vand.u32 %v132, 4294901760
    %v742 = vsub.f32 %v132, %v741
    %v743 = vand.u32 %v742, 4294901760
    %744 = vmatpush.msra.mxu0 %v743
    %v745 = vand.u32 %v129, 4294901760
    %v746 = vsub.f32 %v129, %v745
    %v747 = vand.u32 %v746, 4294901760
    %748 = vmatpush.msra.mxu0 %v747
    %v749 = vand.u32 %v126, 4294901760
    %v750 = vsub.f32 %v126, %v749
    %v751 = vand.u32 %v750, 4294901760
    %752 = vmatpush.msra.mxu0 %v751
    %v753 = vand.u32 %v123, 4294901760
    %v754 = vsub.f32 %v123, %v753
    %v755 = vand.u32 %v754, 4294901760
    %756 = vmatpush.msra.mxu0 %v755
    %v757 = vand.u32 %v120, 4294901760
    %v758 = vsub.f32 %v120, %v757
    %v759 = vand.u32 %v758, 4294901760
    %760 = vmatpush.msra.mxu0 %v759
    %v761 = vand.u32 %v117, 4294901760
    %v762 = vsub.f32 %v117, %v761
    %v763 = vand.u32 %v762, 4294901760
    %764 = vmatpush.msra.mxu0 %v763
    %v765 = vand.u32 %v114, 4294901760
    %v766 = vsub.f32 %v114, %v765
    %v767 = vand.u32 %v766, 4294901760
    %768 = vmatpush.msra.mxu0 %v767
    %v769 = vand.u32 %v111, 4294901760
    %v770 = vsub.f32 %v111, %v769
    %v771 = vand.u32 %v770, 4294901760
    %772 = vmatpush.msra.mxu0 %v771
    %v773 = vand.u32 %v108, 4294901760
    %v774 = vsub.f32 %v108, %v773
    %v775 = vand.u32 %v774, 4294901760
    %776 = vmatpush.msra.mxu0 %v775
    %v777 = vand.u32 %v105, 4294901760
    %v778 = vsub.f32 %v105, %v777
    %v779 = vand.u32 %v778, 4294901760
    %780 = vmatpush.msra.mxu0 %v779
    %v781 = vand.u32 %v102, 4294901760
    %v782 = vsub.f32 %v102, %v781
    %v783 = vand.u32 %v782, 4294901760
    %784 = vmatpush.msra.mxu0 %v783
    %v785 = vand.u32 %v99, 4294901760
    %v786 = vsub.f32 %v99, %v785
    %v787 = vand.u32 %v786, 4294901760
    %788 = vmatpush.msra.mxu0 %v787
    %v789 = vand.u32 %v96, 4294901760
    %v790 = vsub.f32 %v96, %v789
    %v791 = vand.u32 %v790, 4294901760
    %792 = vmatpush.msra.mxu0 %v791
    %v793 = vand.u32 %v93, 4294901760
    %v794 = vsub.f32 %v93, %v793
    %v795 = vand.u32 %v794, 4294901760
    %796 = vmatpush.msra.mxu0 %v795
    %v797 = vand.u32 %v43, 4294901760
    %798 = vmatmul.f32.gmra.mxu0 %v797
    %v799 = vpop.f32.mrf.mxu0
    %v800 = vadd.f32 %v731, %v799
    %801 = vdwg.mxu0
    %v802 = vand.u32 %v138, 4294901760
    %803 = vmatpush.msra.mxu0 %v802
    %v804 = vand.u32 %v135, 4294901760
    %805 = vmatpush.msra.mxu0 %v804
    %v806 = vand.u32 %v132, 4294901760
    %807 = vmatpush.msra.mxu0 %v806
    %v808 = vand.u32 %v129, 4294901760
    %809 = vmatpush.msra.mxu0 %v808
    %v810 = vand.u32 %v126, 4294901760
    %811 = vmatpush.msra.mxu0 %v810
    %v812 = vand.u32 %v123, 4294901760
    %813 = vmatpush.msra.mxu0 %v812
    %v814 = vand.u32 %v120, 4294901760
    %815 = vmatpush.msra.mxu0 %v814
    %v816 = vand.u32 %v117, 4294901760
    %817 = vmatpush.msra.mxu0 %v816
    %v818 = vand.u32 %v114, 4294901760
    %819 = vmatpush.msra.mxu0 %v818
    %v820 = vand.u32 %v111, 4294901760
    %821 = vmatpush.msra.mxu0 %v820
    %v822 = vand.u32 %v108, 4294901760
    %823 = vmatpush.msra.mxu0 %v822
    %v824 = vand.u32 %v105, 4294901760
    %825 = vmatpush.msra.mxu0 %v824
    %v826 = vand.u32 %v102, 4294901760
    %827 = vmatpush.msra.mxu0 %v826
    %v828 = vand.u32 %v99, 4294901760
    %829 = vmatpush.msra.mxu0 %v828
    %v830 = vand.u32 %v96, 4294901760
    %831 = vmatpush.msra.mxu0 %v830
    %v832 = vand.u32 %v93, 4294901760
    %833 = vmatpush.msra.mxu0 %v832
    %v834 = vand.u32 %v43, 4294901760
    %835 = vmatmul.f32.gmra.mxu0 %v834
    %v836 = vpop.f32.mrf.mxu0
    %v837 = vadd.f32 %v800, %v836
    %838 = vdwg.mxu0
    %839 = vmatpush.msra.mxu0 0.0
    %840 = vmatpush.msra.mxu0 0.0
    %841 = vmatpush.msra.mxu0 0.0
    %842 = vmatpush.msra.mxu0 0.0
    %843 = vmatpush.msra.mxu0 0.0
    %844 = vmatpush.msra.mxu0 0.0
    %845 = vmatpush.msra.mxu0 0.0
    %846 = vmatpush.msra.mxu0 0.0
    %847 = vmatpush.msra.mxu0 0.0
    %848 = vmatpush.msra.mxu0 0.0
    %849 = vmatpush.msra.mxu0 0.0
    %850 = vmatpush.msra.mxu0 0.0
    %v851 = vand.u32 %v150, 4294901760
    %852 = vmatpush.msra.mxu0 %v851
    %v853 = vand.u32 %v147, 4294901760
    %854 = vmatpush.msra.mxu0 %v853
    %v855 = vand.u32 %v144, 4294901760
    %856 = vmatpush.msra.mxu0 %v855
    %v857 = vand.u32 %v141, 4294901760
    %858 = vmatpush.msra.mxu0 %v857
    %v859 = vand.u32 %v155, 4294901760
    %v860 = vsub.f32 %v155, %v859
    %v861 = vand.u32 %v860, 4294901760
    %v862 = vsub.f32 %v860, %v861
    %v863 = vand.u32 %v862, 4294901760
    %864 = vmatmul.f32.gmra.mxu0 %v863
    %v865 = vpop.f32.mrf.mxu0
    %v866 = vadd.f32 %v837, %v865
    %867 = vdwg.mxu0
    %868 = vmatpush.msra.mxu0 0.0
    %869 = vmatpush.msra.mxu0 0.0
    %870 = vmatpush.msra.mxu0 0.0
    %871 = vmatpush.msra.mxu0 0.0
    %872 = vmatpush.msra.mxu0 0.0
    %873 = vmatpush.msra.mxu0 0.0
    %874 = vmatpush.msra.mxu0 0.0
    %875 = vmatpush.msra.mxu0 0.0
    %876 = vmatpush.msra.mxu0 0.0
    %877 = vmatpush.msra.mxu0 0.0
    %878 = vmatpush.msra.mxu0 0.0
    %879 = vmatpush.msra.mxu0 0.0
    %v880 = vand.u32 %v150, 4294901760
    %v881 = vsub.f32 %v150, %v880
    %v882 = vand.u32 %v881, 4294901760
    %v883 = vsub.f32 %v881, %v882
    %v884 = vand.u32 %v883, 4294901760
    %885 = vmatpush.msra.mxu0 %v884
    %v886 = vand.u32 %v147, 4294901760
    %v887 = vsub.f32 %v147, %v886
    %v888 = vand.u32 %v887, 4294901760
    %v889 = vsub.f32 %v887, %v888
    %v890 = vand.u32 %v889, 4294901760
    %891 = vmatpush.msra.mxu0 %v890
    %v892 = vand.u32 %v144, 4294901760
    %v893 = vsub.f32 %v144, %v892
    %v894 = vand.u32 %v893, 4294901760
    %v895 = vsub.f32 %v893, %v894
    %v896 = vand.u32 %v895, 4294901760
    %897 = vmatpush.msra.mxu0 %v896
    %v898 = vand.u32 %v141, 4294901760
    %v899 = vsub.f32 %v141, %v898
    %v900 = vand.u32 %v899, 4294901760
    %v901 = vsub.f32 %v899, %v900
    %v902 = vand.u32 %v901, 4294901760
    %903 = vmatpush.msra.mxu0 %v902
    %v904 = vand.u32 %v155, 4294901760
    %905 = vmatmul.f32.gmra.mxu0 %v904
    %v906 = vpop.f32.mrf.mxu0
    %v907 = vadd.f32 %v866, %v906
    %908 = vdwg.mxu0
    %909 = vmatpush.msra.mxu0 0.0
    %910 = vmatpush.msra.mxu0 0.0
    %911 = vmatpush.msra.mxu0 0.0
    %912 = vmatpush.msra.mxu0 0.0
    %913 = vmatpush.msra.mxu0 0.0
    %914 = vmatpush.msra.mxu0 0.0
    %915 = vmatpush.msra.mxu0 0.0
    %916 = vmatpush.msra.mxu0 0.0
    %917 = vmatpush.msra.mxu0 0.0
    %918 = vmatpush.msra.mxu0 0.0
    %919 = vmatpush.msra.mxu0 0.0
    %920 = vmatpush.msra.mxu0 0.0
    %v921 = vand.u32 %v150, 4294901760
    %v922 = vsub.f32 %v150, %v921
    %923 = vmatpush.msra.mxu0 %v922
    %v924 = vand.u32 %v147, 4294901760
    %v925 = vsub.f32 %v147, %v924
    %926 = vmatpush.msra.mxu0 %v925
    %v927 = vand.u32 %v144, 4294901760
    %v928 = vsub.f32 %v144, %v927
    %929 = vmatpush.msra.mxu0 %v928
    %v930 = vand.u32 %v141, 4294901760
    %v931 = vsub.f32 %v141, %v930
    %932 = vmatpush.msra.mxu0 %v931
    %v933 = vand.u32 %v155, 4294901760
    %v934 = vsub.f32 %v155, %v933
    %935 = vmatmul.f32.gmra.mxu0 %v934
    %v936 = vpop.f32.mrf.mxu0
    %v937 = vadd.f32 %v907, %v936
    %938 = vdwg.mxu0
    %939 = vmatpush.msra.mxu0 0.0
    %940 = vmatpush.msra.mxu0 0.0
    %941 = vmatpush.msra.mxu0 0.0
    %942 = vmatpush.msra.mxu0 0.0
    %943 = vmatpush.msra.mxu0 0.0
    %944 = vmatpush.msra.mxu0 0.0
    %945 = vmatpush.msra.mxu0 0.0
    %946 = vmatpush.msra.mxu0 0.0
    %947 = vmatpush.msra.mxu0 0.0
    %948 = vmatpush.msra.mxu0 0.0
    %949 = vmatpush.msra.mxu0 0.0
    %950 = vmatpush.msra.mxu0 0.0
    %v951 = vand.u32 %v150, 4294901760
    %952 = vmatpush.msra.mxu0 %v951
    %v953 = vand.u32 %v147, 4294901760
    %954 = vmatpush.msra.mxu0 %v953
    %v955 = vand.u32 %v144, 4294901760
    %956 = vmatpush.msra.mxu0 %v955
    %v957 = vand.u32 %v141, 4294901760
    %958 = vmatpush.msra.mxu0 %v957
    %v959 = vand.u32 %v155, 4294901760
    %v960 = vsub.f32 %v155, %v959
    %v961 = vand.u32 %v960, 4294901760
    %962 = vmatmul.f32.gmra.mxu0 %v961
    %v963 = vpop.f32.mrf.mxu0
    %v964 = vadd.f32 %v937, %v963
    %965 = vdwg.mxu0
    %966 = vmatpush.msra.mxu0 0.0
    %967 = vmatpush.msra.mxu0 0.0
    %968 = vmatpush.msra.mxu0 0.0
    %969 = vmatpush.msra.mxu0 0.0
    %970 = vmatpush.msra.mxu0 0.0
    %971 = vmatpush.msra.mxu0 0.0
    %972 = vmatpush.msra.mxu0 0.0
    %973 = vmatpush.msra.mxu0 0.0
    %974 = vmatpush.msra.mxu0 0.0
    %975 = vmatpush.msra.mxu0 0.0
    %976 = vmatpush.msra.mxu0 0.0
    %977 = vmatpush.msra.mxu0 0.0
    %v978 = vand.u32 %v150, 4294901760
    %v979 = vsub.f32 %v150, %v978
    %v980 = vand.u32 %v979, 4294901760
    %981 = vmatpush.msra.mxu0 %v980
    %v982 = vand.u32 %v147, 4294901760
    %v983 = vsub.f32 %v147, %v982
    %v984 = vand.u32 %v983, 4294901760
    %985 = vmatpush.msra.mxu0 %v984
    %v986 = vand.u32 %v144, 4294901760
    %v987 = vsub.f32 %v144, %v986
    %v988 = vand.u32 %v987, 4294901760
    %989 = vmatpush.msra.mxu0 %v988
    %v990 = vand.u32 %v141, 4294901760
    %v991 = vsub.f32 %v141, %v990
    %v992 = vand.u32 %v991, 4294901760
    %993 = vmatpush.msra.mxu0 %v992
    %v994 = vand.u32 %v155, 4294901760
    %995 = vmatmul.f32.gmra.mxu0 %v994
    %v996 = vpop.f32.mrf.mxu0
    %v997 = vadd.f32 %v964, %v996
    %998 = vdwg.mxu0
    %999 = vmatpush.msra.mxu0 0.0
    %1000 = vmatpush.msra.mxu0 0.0
    %1001 = vmatpush.msra.mxu0 0.0
    %1002 = vmatpush.msra.mxu0 0.0
    %1003 = vmatpush.msra.mxu0 0.0
    %1004 = vmatpush.msra.mxu0 0.0
    %1005 = vmatpush.msra.mxu0 0.0
    %1006 = vmatpush.msra.mxu0 0.0
    %1007 = vmatpush.msra.mxu0 0.0
    %1008 = vmatpush.msra.mxu0 0.0
    %1009 = vmatpush.msra.mxu0 0.0
    %1010 = vmatpush.msra.mxu0 0.0
    %v1011 = vand.u32 %v150, 4294901760
    %1012 = vmatpush.msra.mxu0 %v1011
    %v1013 = vand.u32 %v147, 4294901760
    %1014 = vmatpush.msra.mxu0 %v1013
    %v1015 = vand.u32 %v144, 4294901760
    %1016 = vmatpush.msra.mxu0 %v1015
    %v1017 = vand.u32 %v141, 4294901760
    %1018 = vmatpush.msra.mxu0 %v1017
    %v1019 = vand.u32 %v155, 4294901760
    %1020 = vmatmul.f32.gmra.mxu0 %v1019
    %v1021 = vpop.f32.mrf.mxu0
    %v1022 = vadd.f32 %v997, %v1021
    %1023 = vdwg.mxu0
    %v1024 = vand.u32 %v91, 4294901760
    %1025 = vmatpush.msra.mxu0 %v1024
    %v1026 = vand.u32 %v88, 4294901760
    %1027 = vmatpush.msra.mxu0 %v1026
    %v1028 = vand.u32 %v85, 4294901760
    %1029 = vmatpush.msra.mxu0 %v1028
    %v1030 = vand.u32 %v82, 4294901760
    %1031 = vmatpush.msra.mxu0 %v1030
    %v1032 = vand.u32 %v79, 4294901760
    %1033 = vmatpush.msra.mxu0 %v1032
    %v1034 = vand.u32 %v76, 4294901760
    %1035 = vmatpush.msra.mxu0 %v1034
    %v1036 = vand.u32 %v73, 4294901760
    %1037 = vmatpush.msra.mxu0 %v1036
    %v1038 = vand.u32 %v70, 4294901760
    %1039 = vmatpush.msra.mxu0 %v1038
    %v1040 = vand.u32 %v67, 4294901760
    %1041 = vmatpush.msra.mxu0 %v1040
    %v1042 = vand.u32 %v64, 4294901760
    %1043 = vmatpush.msra.mxu0 %v1042
    %v1044 = vand.u32 %v61, 4294901760
    %1045 = vmatpush.msra.mxu0 %v1044
    %v1046 = vand.u32 %v58, 4294901760
    %1047 = vmatpush.msra.mxu0 %v1046
    %v1048 = vand.u32 %v55, 4294901760
    %1049 = vmatpush.msra.mxu0 %v1048
    %v1050 = vand.u32 %v52, 4294901760
    %1051 = vmatpush.msra.mxu0 %v1050
    %v1052 = vand.u32 %v49, 4294901760
    %1053 = vmatpush.msra.mxu0 %v1052
    %v1054 = vand.u32 %v46, 4294901760
    %1055 = vmatpush.msra.mxu0 %v1054
    %v1056 = vand.u32 %v42, 4294901760
    %v1057 = vsub.f32 %v42, %v1056
    %v1058 = vand.u32 %v1057, 4294901760
    %v1059 = vsub.f32 %v1057, %v1058
    %v1060 = vand.u32 %v1059, 4294901760
    %1061 = vmatmul.f32.gmra.mxu0 %v1060
    %v1062 = vpop.f32.mrf.mxu0
    %v1063 = vadd.f32 0.0, %v1062
    %1064 = vdwg.mxu0
    %v1065 = vand.u32 %v91, 4294901760
    %v1066 = vsub.f32 %v91, %v1065
    %v1067 = vand.u32 %v1066, 4294901760
    %v1068 = vsub.f32 %v1066, %v1067
    %v1069 = vand.u32 %v1068, 4294901760
    %1070 = vmatpush.msra.mxu0 %v1069
    %v1071 = vand.u32 %v88, 4294901760
    %v1072 = vsub.f32 %v88, %v1071
    %v1073 = vand.u32 %v1072, 4294901760
    %v1074 = vsub.f32 %v1072, %v1073
    %v1075 = vand.u32 %v1074, 4294901760
    %1076 = vmatpush.msra.mxu0 %v1075
    %v1077 = vand.u32 %v85, 4294901760
    %v1078 = vsub.f32 %v85, %v1077
    %v1079 = vand.u32 %v1078, 4294901760
    %v1080 = vsub.f32 %v1078, %v1079
    %v1081 = vand.u32 %v1080, 4294901760
    %1082 = vmatpush.msra.mxu0 %v1081
    %v1083 = vand.u32 %v82, 4294901760
    %v1084 = vsub.f32 %v82, %v1083
    %v1085 = vand.u32 %v1084, 4294901760
    %v1086 = vsub.f32 %v1084, %v1085
    %v1087 = vand.u32 %v1086, 4294901760
    %1088 = vmatpush.msra.mxu0 %v1087
    %v1089 = vand.u32 %v79, 4294901760
    %v1090 = vsub.f32 %v79, %v1089
    %v1091 = vand.u32 %v1090, 4294901760
    %v1092 = vsub.f32 %v1090, %v1091
    %v1093 = vand.u32 %v1092, 4294901760
    %1094 = vmatpush.msra.mxu0 %v1093
    %v1095 = vand.u32 %v76, 4294901760
    %v1096 = vsub.f32 %v76, %v1095
    %v1097 = vand.u32 %v1096, 4294901760
    %v1098 = vsub.f32 %v1096, %v1097
    %v1099 = vand.u32 %v1098, 4294901760
    %1100 = vmatpush.msra.mxu0 %v1099
    %v1101 = vand.u32 %v73, 4294901760
    %v1102 = vsub.f32 %v73, %v1101
    %v1103 = vand.u32 %v1102, 4294901760
    %v1104 = vsub.f32 %v1102, %v1103
    %v1105 = vand.u32 %v1104, 4294901760
    %1106 = vmatpush.msra.mxu0 %v1105
    %v1107 = vand.u32 %v70, 4294901760
    %v1108 = vsub.f32 %v70, %v1107
    %v1109 = vand.u32 %v1108, 4294901760
    %v1110 = vsub.f32 %v1108, %v1109
    %v1111 = vand.u32 %v1110, 4294901760
    %1112 = vmatpush.msra.mxu0 %v1111
    %v1113 = vand.u32 %v67, 4294901760
    %v1114 = vsub.f32 %v67, %v1113
    %v1115 = vand.u32 %v1114, 4294901760
    %v1116 = vsub.f32 %v1114, %v1115
    %v1117 = vand.u32 %v1116, 4294901760
    %1118 = vmatpush.msra.mxu0 %v1117
    %v1119 = vand.u32 %v64, 4294901760
    %v1120 = vsub.f32 %v64, %v1119
    %v1121 = vand.u32 %v1120, 4294901760
    %v1122 = vsub.f32 %v1120, %v1121
    %v1123 = vand.u32 %v1122, 4294901760
    %1124 = vmatpush.msra.mxu0 %v1123
    %v1125 = vand.u32 %v61, 4294901760
    %v1126 = vsub.f32 %v61, %v1125
    %v1127 = vand.u32 %v1126, 4294901760
    %v1128 = vsub.f32 %v1126, %v1127
    %v1129 = vand.u32 %v1128, 4294901760
    %1130 = vmatpush.msra.mxu0 %v1129
    %v1131 = vand.u32 %v58, 4294901760
    %v1132 = vsub.f32 %v58, %v1131
    %v1133 = vand.u32 %v1132, 4294901760
    %v1134 = vsub.f32 %v1132, %v1133
    %v1135 = vand.u32 %v1134, 4294901760
    %1136 = vmatpush.msra.mxu0 %v1135
    %v1137 = vand.u32 %v55, 4294901760
    %v1138 = vsub.f32 %v55, %v1137
    %v1139 = vand.u32 %v1138, 4294901760
    %v1140 = vsub.f32 %v1138, %v1139
    %v1141 = vand.u32 %v1140, 4294901760
    %1142 = vmatpush.msra.mxu0 %v1141
    %v1143 = vand.u32 %v52, 4294901760
    %v1144 = vsub.f32 %v52, %v1143
    %v1145 = vand.u32 %v1144, 4294901760
    %v1146 = vsub.f32 %v1144, %v1145
    %v1147 = vand.u32 %v1146, 4294901760
    %1148 = vmatpush.msra.mxu0 %v1147
    %v1149 = vand.u32 %v49, 4294901760
    %v1150 = vsub.f32 %v49, %v1149
    %v1151 = vand.u32 %v1150, 4294901760
    %v1152 = vsub.f32 %v1150, %v1151
    %v1153 = vand.u32 %v1152, 4294901760
    %1154 = vmatpush.msra.mxu0 %v1153
    %v1155 = vand.u32 %v46, 4294901760
    %v1156 = vsub.f32 %v46, %v1155
    %v1157 = vand.u32 %v1156, 4294901760
    %v1158 = vsub.f32 %v1156, %v1157
    %v1159 = vand.u32 %v1158, 4294901760
    %1160 = vmatpush.msra.mxu0 %v1159
    %v1161 = vand.u32 %v42, 4294901760
    %1162 = vmatmul.f32.gmra.mxu0 %v1161
    %v1163 = vpop.f32.mrf.mxu0
    %v1164 = vadd.f32 %v1063, %v1163
    %1165 = vdwg.mxu0
    %v1166 = vand.u32 %v91, 4294901760
    %v1167 = vsub.f32 %v91, %v1166
    %1168 = vmatpush.msra.mxu0 %v1167
    %v1169 = vand.u32 %v88, 4294901760
    %v1170 = vsub.f32 %v88, %v1169
    %1171 = vmatpush.msra.mxu0 %v1170
    %v1172 = vand.u32 %v85, 4294901760
    %v1173 = vsub.f32 %v85, %v1172
    %1174 = vmatpush.msra.mxu0 %v1173
    %v1175 = vand.u32 %v82, 4294901760
    %v1176 = vsub.f32 %v82, %v1175
    %1177 = vmatpush.msra.mxu0 %v1176
    %v1178 = vand.u32 %v79, 4294901760
    %v1179 = vsub.f32 %v79, %v1178
    %1180 = vmatpush.msra.mxu0 %v1179
    %v1181 = vand.u32 %v76, 4294901760
    %v1182 = vsub.f32 %v76, %v1181
    %1183 = vmatpush.msra.mxu0 %v1182
    %v1184 = vand.u32 %v73, 4294901760
    %v1185 = vsub.f32 %v73, %v1184
    %1186 = vmatpush.msra.mxu0 %v1185
    %v1187 = vand.u32 %v70, 4294901760
    %v1188 = vsub.f32 %v70, %v1187
    %1189 = vmatpush.msra.mxu0 %v1188
    %v1190 = vand.u32 %v67, 4294901760
    %v1191 = vsub.f32 %v67, %v1190
    %1192 = vmatpush.msra.mxu0 %v1191
    %v1193 = vand.u32 %v64, 4294901760
    %v1194 = vsub.f32 %v64, %v1193
    %1195 = vmatpush.msra.mxu0 %v1194
    %v1196 = vand.u32 %v61, 4294901760
    %v1197 = vsub.f32 %v61, %v1196
    %1198 = vmatpush.msra.mxu0 %v1197
    %v1199 = vand.u32 %v58, 4294901760
    %v1200 = vsub.f32 %v58, %v1199
    %1201 = vmatpush.msra.mxu0 %v1200
    %v1202 = vand.u32 %v55, 4294901760
    %v1203 = vsub.f32 %v55, %v1202
    %1204 = vmatpush.msra.mxu0 %v1203
    %v1205 = vand.u32 %v52, 4294901760
    %v1206 = vsub.f32 %v52, %v1205
    %1207 = vmatpush.msra.mxu0 %v1206
    %v1208 = vand.u32 %v49, 4294901760
    %v1209 = vsub.f32 %v49, %v1208
    %1210 = vmatpush.msra.mxu0 %v1209
    %v1211 = vand.u32 %v46, 4294901760
    %v1212 = vsub.f32 %v46, %v1211
    %1213 = vmatpush.msra.mxu0 %v1212
    %v1214 = vand.u32 %v42, 4294901760
    %v1215 = vsub.f32 %v42, %v1214
    %1216 = vmatmul.f32.gmra.mxu0 %v1215
    %v1217 = vpop.f32.mrf.mxu0
    %v1218 = vadd.f32 %v1164, %v1217
    %1219 = vdwg.mxu0
    %v1220 = vand.u32 %v91, 4294901760
    %1221 = vmatpush.msra.mxu0 %v1220
    %v1222 = vand.u32 %v88, 4294901760
    %1223 = vmatpush.msra.mxu0 %v1222
    %v1224 = vand.u32 %v85, 4294901760
    %1225 = vmatpush.msra.mxu0 %v1224
    %v1226 = vand.u32 %v82, 4294901760
    %1227 = vmatpush.msra.mxu0 %v1226
    %v1228 = vand.u32 %v79, 4294901760
    %1229 = vmatpush.msra.mxu0 %v1228
    %v1230 = vand.u32 %v76, 4294901760
    %1231 = vmatpush.msra.mxu0 %v1230
    %v1232 = vand.u32 %v73, 4294901760
    %1233 = vmatpush.msra.mxu0 %v1232
    %v1234 = vand.u32 %v70, 4294901760
    %1235 = vmatpush.msra.mxu0 %v1234
    %v1236 = vand.u32 %v67, 4294901760
    %1237 = vmatpush.msra.mxu0 %v1236
    %v1238 = vand.u32 %v64, 4294901760
    %1239 = vmatpush.msra.mxu0 %v1238
    %v1240 = vand.u32 %v61, 4294901760
    %1241 = vmatpush.msra.mxu0 %v1240
    %v1242 = vand.u32 %v58, 4294901760
    %1243 = vmatpush.msra.mxu0 %v1242
    %v1244 = vand.u32 %v55, 4294901760
    %1245 = vmatpush.msra.mxu0 %v1244
    %v1246 = vand.u32 %v52, 4294901760
    %1247 = vmatpush.msra.mxu0 %v1246
    %v1248 = vand.u32 %v49, 4294901760
    %1249 = vmatpush.msra.mxu0 %v1248
    %v1250 = vand.u32 %v46, 4294901760
    %1251 = vmatpush.msra.mxu0 %v1250
    %v1252 = vand.u32 %v42, 4294901760
    %v1253 = vsub.f32 %v42, %v1252
    %v1254 = vand.u32 %v1253, 4294901760
    %1255 = vmatmul.f32.gmra.mxu0 %v1254
    %v1256 = vpop.f32.mrf.mxu0
    %v1257 = vadd.f32 %v1218, %v1256
    %1258 = vdwg.mxu0
    %v1259 = vand.u32 %v91, 4294901760
    %v1260 = vsub.f32 %v91, %v1259
    %v1261 = vand.u32 %v1260, 4294901760
    %1262 = vmatpush.msra.mxu0 %v1261
    %v1263 = vand.u32 %v88, 4294901760
    %v1264 = vsub.f32 %v88, %v1263
    %v1265 = vand.u32 %v1264, 4294901760
    %1266 = vmatpush.msra.mxu0 %v1265
    %v1267 = vand.u32 %v85, 4294901760
    %v1268 = vsub.f32 %v85, %v1267
    %v1269 = vand.u32 %v1268, 4294901760
    %1270 = vmatpush.msra.mxu0 %v1269
    %v1271 = vand.u32 %v82, 4294901760
    %v1272 = vsub.f32 %v82, %v1271
    %v1273 = vand.u32 %v1272, 4294901760
    %1274 = vmatpush.msra.mxu0 %v1273
    %v1275 = vand.u32 %v79, 4294901760
    %v1276 = vsub.f32 %v79, %v1275
    %v1277 = vand.u32 %v1276, 4294901760
    %1278 = vmatpush.msra.mxu0 %v1277
    %v1279 = vand.u32 %v76, 4294901760
    %v1280 = vsub.f32 %v76, %v1279
    %v1281 = vand.u32 %v1280, 4294901760
    %1282 = vmatpush.msra.mxu0 %v1281
    %v1283 = vand.u32 %v73, 4294901760
    %v1284 = vsub.f32 %v73, %v1283
    %v1285 = vand.u32 %v1284, 4294901760
    %1286 = vmatpush.msra.mxu0 %v1285
    %v1287 = vand.u32 %v70, 4294901760
    %v1288 = vsub.f32 %v70, %v1287
    %v1289 = vand.u32 %v1288, 4294901760
    %1290 = vmatpush.msra.mxu0 %v1289
    %v1291 = vand.u32 %v67, 4294901760
    %v1292 = vsub.f32 %v67, %v1291
    %v1293 = vand.u32 %v1292, 4294901760
    %1294 = vmatpush.msra.mxu0 %v1293
    %v1295 = vand.u32 %v64, 4294901760
    %v1296 = vsub.f32 %v64, %v1295
    %v1297 = vand.u32 %v1296, 4294901760
    %1298 = vmatpush.msra.mxu0 %v1297
    %v1299 = vand.u32 %v61, 4294901760
    %v1300 = vsub.f32 %v61, %v1299
    %v1301 = vand.u32 %v1300, 4294901760
    %1302 = vmatpush.msra.mxu0 %v1301
    %v1303 = vand.u32 %v58, 4294901760
    %v1304 = vsub.f32 %v58, %v1303
    %v1305 = vand.u32 %v1304, 4294901760
    %1306 = vmatpush.msra.mxu0 %v1305
    %v1307 = vand.u32 %v55, 4294901760
    %v1308 = vsub.f32 %v55, %v1307
    %v1309 = vand.u32 %v1308, 4294901760
    %1310 = vmatpush.msra.mxu0 %v1309
    %v1311 = vand.u32 %v52, 4294901760
    %v1312 = vsub.f32 %v52, %v1311
    %v1313 = vand.u32 %v1312, 4294901760
    %1314 = vmatpush.msra.mxu0 %v1313
    %v1315 = vand.u32 %v49, 4294901760
    %v1316 = vsub.f32 %v49, %v1315
    %v1317 = vand.u32 %v1316, 4294901760
    %1318 = vmatpush.msra.mxu0 %v1317
    %v1319 = vand.u32 %v46, 4294901760
    %v1320 = vsub.f32 %v46, %v1319
    %v1321 = vand.u32 %v1320, 4294901760
    %1322 = vmatpush.msra.mxu0 %v1321
    %v1323 = vand.u32 %v42, 4294901760
    %1324 = vmatmul.f32.gmra.mxu0 %v1323
    %v1325 = vpop.f32.mrf.mxu0
    %v1326 = vadd.f32 %v1257, %v1325
    %1327 = vdwg.mxu0
    %v1328 = vand.u32 %v91, 4294901760
    %1329 = vmatpush.msra.mxu0 %v1328
    %v1330 = vand.u32 %v88, 4294901760
    %1331 = vmatpush.msra.mxu0 %v1330
    %v1332 = vand.u32 %v85, 4294901760
    %1333 = vmatpush.msra.mxu0 %v1332
    %v1334 = vand.u32 %v82, 4294901760
    %1335 = vmatpush.msra.mxu0 %v1334
    %v1336 = vand.u32 %v79, 4294901760
    %1337 = vmatpush.msra.mxu0 %v1336
    %v1338 = vand.u32 %v76, 4294901760
    %1339 = vmatpush.msra.mxu0 %v1338
    %v1340 = vand.u32 %v73, 4294901760
    %1341 = vmatpush.msra.mxu0 %v1340
    %v1342 = vand.u32 %v70, 4294901760
    %1343 = vmatpush.msra.mxu0 %v1342
    %v1344 = vand.u32 %v67, 4294901760
    %1345 = vmatpush.msra.mxu0 %v1344
    %v1346 = vand.u32 %v64, 4294901760
    %1347 = vmatpush.msra.mxu0 %v1346
    %v1348 = vand.u32 %v61, 4294901760
    %1349 = vmatpush.msra.mxu0 %v1348
    %v1350 = vand.u32 %v58, 4294901760
    %1351 = vmatpush.msra.mxu0 %v1350
    %v1352 = vand.u32 %v55, 4294901760
    %1353 = vmatpush.msra.mxu0 %v1352
    %v1354 = vand.u32 %v52, 4294901760
    %1355 = vmatpush.msra.mxu0 %v1354
    %v1356 = vand.u32 %v49, 4294901760
    %1357 = vmatpush.msra.mxu0 %v1356
    %v1358 = vand.u32 %v46, 4294901760
    %1359 = vmatpush.msra.mxu0 %v1358
    %v1360 = vand.u32 %v42, 4294901760
    %1361 = vmatmul.f32.gmra.mxu0 %v1360
    %v1362 = vpop.f32.mrf.mxu0
    %v1363 = vadd.f32 %v1326, %v1362
    %1364 = vdwg.mxu0
    %v1365 = vand.u32 %v139, 4294901760
    %1366 = vmatpush.msra.mxu0 %v1365
    %v1367 = vand.u32 %v136, 4294901760
    %1368 = vmatpush.msra.mxu0 %v1367
    %v1369 = vand.u32 %v133, 4294901760
    %1370 = vmatpush.msra.mxu0 %v1369
    %v1371 = vand.u32 %v130, 4294901760
    %1372 = vmatpush.msra.mxu0 %v1371
    %v1373 = vand.u32 %v127, 4294901760
    %1374 = vmatpush.msra.mxu0 %v1373
    %v1375 = vand.u32 %v124, 4294901760
    %1376 = vmatpush.msra.mxu0 %v1375
    %v1377 = vand.u32 %v121, 4294901760
    %1378 = vmatpush.msra.mxu0 %v1377
    %v1379 = vand.u32 %v118, 4294901760
    %1380 = vmatpush.msra.mxu0 %v1379
    %v1381 = vand.u32 %v115, 4294901760
    %1382 = vmatpush.msra.mxu0 %v1381
    %v1383 = vand.u32 %v112, 4294901760
    %1384 = vmatpush.msra.mxu0 %v1383
    %v1385 = vand.u32 %v109, 4294901760
    %1386 = vmatpush.msra.mxu0 %v1385
    %v1387 = vand.u32 %v106, 4294901760
    %1388 = vmatpush.msra.mxu0 %v1387
    %v1389 = vand.u32 %v103, 4294901760
    %1390 = vmatpush.msra.mxu0 %v1389
    %v1391 = vand.u32 %v100, 4294901760
    %1392 = vmatpush.msra.mxu0 %v1391
    %v1393 = vand.u32 %v97, 4294901760
    %1394 = vmatpush.msra.mxu0 %v1393
    %v1395 = vand.u32 %v94, 4294901760
    %1396 = vmatpush.msra.mxu0 %v1395
    %v1397 = vand.u32 %v43, 4294901760
    %v1398 = vsub.f32 %v43, %v1397
    %v1399 = vand.u32 %v1398, 4294901760
    %v1400 = vsub.f32 %v1398, %v1399
    %v1401 = vand.u32 %v1400, 4294901760
    %1402 = vmatmul.f32.gmra.mxu0 %v1401
    %v1403 = vpop.f32.mrf.mxu0
    %v1404 = vadd.f32 %v1363, %v1403
    %1405 = vdwg.mxu0
    %v1406 = vand.u32 %v139, 4294901760
    %v1407 = vsub.f32 %v139, %v1406
    %v1408 = vand.u32 %v1407, 4294901760
    %v1409 = vsub.f32 %v1407, %v1408
    %v1410 = vand.u32 %v1409, 4294901760
    %1411 = vmatpush.msra.mxu0 %v1410
    %v1412 = vand.u32 %v136, 4294901760
    %v1413 = vsub.f32 %v136, %v1412
    %v1414 = vand.u32 %v1413, 4294901760
    %v1415 = vsub.f32 %v1413, %v1414
    %v1416 = vand.u32 %v1415, 4294901760
    %1417 = vmatpush.msra.mxu0 %v1416
    %v1418 = vand.u32 %v133, 4294901760
    %v1419 = vsub.f32 %v133, %v1418
    %v1420 = vand.u32 %v1419, 4294901760
    %v1421 = vsub.f32 %v1419, %v1420
    %v1422 = vand.u32 %v1421, 4294901760
    %1423 = vmatpush.msra.mxu0 %v1422
    %v1424 = vand.u32 %v130, 4294901760
    %v1425 = vsub.f32 %v130, %v1424
    %v1426 = vand.u32 %v1425, 4294901760
    %v1427 = vsub.f32 %v1425, %v1426
    %v1428 = vand.u32 %v1427, 4294901760
    %1429 = vmatpush.msra.mxu0 %v1428
    %v1430 = vand.u32 %v127, 4294901760
    %v1431 = vsub.f32 %v127, %v1430
    %v1432 = vand.u32 %v1431, 4294901760
    %v1433 = vsub.f32 %v1431, %v1432
    %v1434 = vand.u32 %v1433, 4294901760
    %1435 = vmatpush.msra.mxu0 %v1434
    %v1436 = vand.u32 %v124, 4294901760
    %v1437 = vsub.f32 %v124, %v1436
    %v1438 = vand.u32 %v1437, 4294901760
    %v1439 = vsub.f32 %v1437, %v1438
    %v1440 = vand.u32 %v1439, 4294901760
    %1441 = vmatpush.msra.mxu0 %v1440
    %v1442 = vand.u32 %v121, 4294901760
    %v1443 = vsub.f32 %v121, %v1442
    %v1444 = vand.u32 %v1443, 4294901760
    %v1445 = vsub.f32 %v1443, %v1444
    %v1446 = vand.u32 %v1445, 4294901760
    %1447 = vmatpush.msra.mxu0 %v1446
    %v1448 = vand.u32 %v118, 4294901760
    %v1449 = vsub.f32 %v118, %v1448
    %v1450 = vand.u32 %v1449, 4294901760
    %v1451 = vsub.f32 %v1449, %v1450
    %v1452 = vand.u32 %v1451, 4294901760
    %1453 = vmatpush.msra.mxu0 %v1452
    %v1454 = vand.u32 %v115, 4294901760
    %v1455 = vsub.f32 %v115, %v1454
    %v1456 = vand.u32 %v1455, 4294901760
    %v1457 = vsub.f32 %v1455, %v1456
    %v1458 = vand.u32 %v1457, 4294901760
    %1459 = vmatpush.msra.mxu0 %v1458
    %v1460 = vand.u32 %v112, 4294901760
    %v1461 = vsub.f32 %v112, %v1460
    %v1462 = vand.u32 %v1461, 4294901760
    %v1463 = vsub.f32 %v1461, %v1462
    %v1464 = vand.u32 %v1463, 4294901760
    %1465 = vmatpush.msra.mxu0 %v1464
    %v1466 = vand.u32 %v109, 4294901760
    %v1467 = vsub.f32 %v109, %v1466
    %v1468 = vand.u32 %v1467, 4294901760
    %v1469 = vsub.f32 %v1467, %v1468
    %v1470 = vand.u32 %v1469, 4294901760
    %1471 = vmatpush.msra.mxu0 %v1470
    %v1472 = vand.u32 %v106, 4294901760
    %v1473 = vsub.f32 %v106, %v1472
    %v1474 = vand.u32 %v1473, 4294901760
    %v1475 = vsub.f32 %v1473, %v1474
    %v1476 = vand.u32 %v1475, 4294901760
    %1477 = vmatpush.msra.mxu0 %v1476
    %v1478 = vand.u32 %v103, 4294901760
    %v1479 = vsub.f32 %v103, %v1478
    %v1480 = vand.u32 %v1479, 4294901760
    %v1481 = vsub.f32 %v1479, %v1480
    %v1482 = vand.u32 %v1481, 4294901760
    %1483 = vmatpush.msra.mxu0 %v1482
    %v1484 = vand.u32 %v100, 4294901760
    %v1485 = vsub.f32 %v100, %v1484
    %v1486 = vand.u32 %v1485, 4294901760
    %v1487 = vsub.f32 %v1485, %v1486
    %v1488 = vand.u32 %v1487, 4294901760
    %1489 = vmatpush.msra.mxu0 %v1488
    %v1490 = vand.u32 %v97, 4294901760
    %v1491 = vsub.f32 %v97, %v1490
    %v1492 = vand.u32 %v1491, 4294901760
    %v1493 = vsub.f32 %v1491, %v1492
    %v1494 = vand.u32 %v1493, 4294901760
    %1495 = vmatpush.msra.mxu0 %v1494
    %v1496 = vand.u32 %v94, 4294901760
    %v1497 = vsub.f32 %v94, %v1496
    %v1498 = vand.u32 %v1497, 4294901760
    %v1499 = vsub.f32 %v1497, %v1498
    %v1500 = vand.u32 %v1499, 4294901760
    %1501 = vmatpush.msra.mxu0 %v1500
    %v1502 = vand.u32 %v43, 4294901760
    %1503 = vmatmul.f32.gmra.mxu0 %v1502
    %v1504 = vpop.f32.mrf.mxu0
    %v1505 = vadd.f32 %v1404, %v1504
    %1506 = vdwg.mxu0
    %v1507 = vand.u32 %v139, 4294901760
    %v1508 = vsub.f32 %v139, %v1507
    %1509 = vmatpush.msra.mxu0 %v1508
    %v1510 = vand.u32 %v136, 4294901760
    %v1511 = vsub.f32 %v136, %v1510
    %1512 = vmatpush.msra.mxu0 %v1511
    %v1513 = vand.u32 %v133, 4294901760
    %v1514 = vsub.f32 %v133, %v1513
    %1515 = vmatpush.msra.mxu0 %v1514
    %v1516 = vand.u32 %v130, 4294901760
    %v1517 = vsub.f32 %v130, %v1516
    %1518 = vmatpush.msra.mxu0 %v1517
    %v1519 = vand.u32 %v127, 4294901760
    %v1520 = vsub.f32 %v127, %v1519
    %1521 = vmatpush.msra.mxu0 %v1520
    %v1522 = vand.u32 %v124, 4294901760
    %v1523 = vsub.f32 %v124, %v1522
    %1524 = vmatpush.msra.mxu0 %v1523
    %v1525 = vand.u32 %v121, 4294901760
    %v1526 = vsub.f32 %v121, %v1525
    %1527 = vmatpush.msra.mxu0 %v1526
    %v1528 = vand.u32 %v118, 4294901760
    %v1529 = vsub.f32 %v118, %v1528
    %1530 = vmatpush.msra.mxu0 %v1529
    %v1531 = vand.u32 %v115, 4294901760
    %v1532 = vsub.f32 %v115, %v1531
    %1533 = vmatpush.msra.mxu0 %v1532
    %v1534 = vand.u32 %v112, 4294901760
    %v1535 = vsub.f32 %v112, %v1534
    %1536 = vmatpush.msra.mxu0 %v1535
    %v1537 = vand.u32 %v109, 4294901760
    %v1538 = vsub.f32 %v109, %v1537
    %1539 = vmatpush.msra.mxu0 %v1538
    %v1540 = vand.u32 %v106, 4294901760
    %v1541 = vsub.f32 %v106, %v1540
    %1542 = vmatpush.msra.mxu0 %v1541
    %v1543 = vand.u32 %v103, 4294901760
    %v1544 = vsub.f32 %v103, %v1543
    %1545 = vmatpush.msra.mxu0 %v1544
    %v1546 = vand.u32 %v100, 4294901760
    %v1547 = vsub.f32 %v100, %v1546
    %1548 = vmatpush.msra.mxu0 %v1547
    %v1549 = vand.u32 %v97, 4294901760
    %v1550 = vsub.f32 %v97, %v1549
    %1551 = vmatpush.msra.mxu0 %v1550
    %v1552 = vand.u32 %v94, 4294901760
    %v1553 = vsub.f32 %v94, %v1552
    %1554 = vmatpush.msra.mxu0 %v1553
    %v1555 = vand.u32 %v43, 4294901760
    %v1556 = vsub.f32 %v43, %v1555
    %1557 = vmatmul.f32.gmra.mxu0 %v1556
    %v1558 = vpop.f32.mrf.mxu0
    %v1559 = vadd.f32 %v1505, %v1558
    %1560 = vdwg.mxu0
    %v1561 = vand.u32 %v139, 4294901760
    %1562 = vmatpush.msra.mxu0 %v1561
    %v1563 = vand.u32 %v136, 4294901760
    %1564 = vmatpush.msra.mxu0 %v1563
    %v1565 = vand.u32 %v133, 4294901760
    %1566 = vmatpush.msra.mxu0 %v1565
    %v1567 = vand.u32 %v130, 4294901760
    %1568 = vmatpush.msra.mxu0 %v1567
    %v1569 = vand.u32 %v127, 4294901760
    %1570 = vmatpush.msra.mxu0 %v1569
    %v1571 = vand.u32 %v124, 4294901760
    %1572 = vmatpush.msra.mxu0 %v1571
    %v1573 = vand.u32 %v121, 4294901760
    %1574 = vmatpush.msra.mxu0 %v1573
    %v1575 = vand.u32 %v118, 4294901760
    %1576 = vmatpush.msra.mxu0 %v1575
    %v1577 = vand.u32 %v115, 4294901760
    %1578 = vmatpush.msra.mxu0 %v1577
    %v1579 = vand.u32 %v112, 4294901760
    %1580 = vmatpush.msra.mxu0 %v1579
    %v1581 = vand.u32 %v109, 4294901760
    %1582 = vmatpush.msra.mxu0 %v1581
    %v1583 = vand.u32 %v106, 4294901760
    %1584 = vmatpush.msra.mxu0 %v1583
    %v1585 = vand.u32 %v103, 4294901760
    %1586 = vmatpush.msra.mxu0 %v1585
    %v1587 = vand.u32 %v100, 4294901760
    %1588 = vmatpush.msra.mxu0 %v1587
    %v1589 = vand.u32 %v97, 4294901760
    %1590 = vmatpush.msra.mxu0 %v1589
    %v1591 = vand.u32 %v94, 4294901760
    %1592 = vmatpush.msra.mxu0 %v1591
    %v1593 = vand.u32 %v43, 4294901760
    %v1594 = vsub.f32 %v43, %v1593
    %v1595 = vand.u32 %v1594, 4294901760
    %1596 = vmatmul.f32.gmra.mxu0 %v1595
    %v1597 = vpop.f32.mrf.mxu0
    %v1598 = vadd.f32 %v1559, %v1597
    %1599 = vdwg.mxu0
    %v1600 = vand.u32 %v139, 4294901760
    %v1601 = vsub.f32 %v139, %v1600
    %v1602 = vand.u32 %v1601, 4294901760
    %1603 = vmatpush.msra.mxu0 %v1602
    %v1604 = vand.u32 %v136, 4294901760
    %v1605 = vsub.f32 %v136, %v1604
    %v1606 = vand.u32 %v1605, 4294901760
    %1607 = vmatpush.msra.mxu0 %v1606
    %v1608 = vand.u32 %v133, 4294901760
    %v1609 = vsub.f32 %v133, %v1608
    %v1610 = vand.u32 %v1609, 4294901760
    %1611 = vmatpush.msra.mxu0 %v1610
    %v1612 = vand.u32 %v130, 4294901760
    %v1613 = vsub.f32 %v130, %v1612
    %v1614 = vand.u32 %v1613, 4294901760
    %1615 = vmatpush.msra.mxu0 %v1614
    %v1616 = vand.u32 %v127, 4294901760
    %v1617 = vsub.f32 %v127, %v1616
    %v1618 = vand.u32 %v1617, 4294901760
    %1619 = vmatpush.msra.mxu0 %v1618
    %v1620 = vand.u32 %v124, 4294901760
    %v1621 = vsub.f32 %v124, %v1620
    %v1622 = vand.u32 %v1621, 4294901760
    %1623 = vmatpush.msra.mxu0 %v1622
    %v1624 = vand.u32 %v121, 4294901760
    %v1625 = vsub.f32 %v121, %v1624
    %v1626 = vand.u32 %v1625, 4294901760
    %1627 = vmatpush.msra.mxu0 %v1626
    %v1628 = vand.u32 %v118, 4294901760
    %v1629 = vsub.f32 %v118, %v1628
    %v1630 = vand.u32 %v1629, 4294901760
    %1631 = vmatpush.msra.mxu0 %v1630
    %v1632 = vand.u32 %v115, 4294901760
    %v1633 = vsub.f32 %v115, %v1632
    %v1634 = vand.u32 %v1633, 4294901760
    %1635 = vmatpush.msra.mxu0 %v1634
    %v1636 = vand.u32 %v112, 4294901760
    %v1637 = vsub.f32 %v112, %v1636
    %v1638 = vand.u32 %v1637, 4294901760
    %1639 = vmatpush.msra.mxu0 %v1638
    %v1640 = vand.u32 %v109, 4294901760
    %v1641 = vsub.f32 %v109, %v1640
    %v1642 = vand.u32 %v1641, 4294901760
    %1643 = vmatpush.msra.mxu0 %v1642
    %v1644 = vand.u32 %v106, 4294901760
    %v1645 = vsub.f32 %v106, %v1644
    %v1646 = vand.u32 %v1645, 4294901760
    %1647 = vmatpush.msra.mxu0 %v1646
    %v1648 = vand.u32 %v103, 4294901760
    %v1649 = vsub.f32 %v103, %v1648
    %v1650 = vand.u32 %v1649, 4294901760
    %1651 = vmatpush.msra.mxu0 %v1650
    %v1652 = vand.u32 %v100, 4294901760
    %v1653 = vsub.f32 %v100, %v1652
    %v1654 = vand.u32 %v1653, 4294901760
    %1655 = vmatpush.msra.mxu0 %v1654
    %v1656 = vand.u32 %v97, 4294901760
    %v1657 = vsub.f32 %v97, %v1656
    %v1658 = vand.u32 %v1657, 4294901760
    %1659 = vmatpush.msra.mxu0 %v1658
    %v1660 = vand.u32 %v94, 4294901760
    %v1661 = vsub.f32 %v94, %v1660
    %v1662 = vand.u32 %v1661, 4294901760
    %1663 = vmatpush.msra.mxu0 %v1662
    %v1664 = vand.u32 %v43, 4294901760
    %1665 = vmatmul.f32.gmra.mxu0 %v1664
    %v1666 = vpop.f32.mrf.mxu0
    %v1667 = vadd.f32 %v1598, %v1666
    %1668 = vdwg.mxu0
    %v1669 = vand.u32 %v139, 4294901760
    %1670 = vmatpush.msra.mxu0 %v1669
    %v1671 = vand.u32 %v136, 4294901760
    %1672 = vmatpush.msra.mxu0 %v1671
    %v1673 = vand.u32 %v133, 4294901760
    %1674 = vmatpush.msra.mxu0 %v1673
    %v1675 = vand.u32 %v130, 4294901760
    %1676 = vmatpush.msra.mxu0 %v1675
    %v1677 = vand.u32 %v127, 4294901760
    %1678 = vmatpush.msra.mxu0 %v1677
    %v1679 = vand.u32 %v124, 4294901760
    %1680 = vmatpush.msra.mxu0 %v1679
    %v1681 = vand.u32 %v121, 4294901760
    %1682 = vmatpush.msra.mxu0 %v1681
    %v1683 = vand.u32 %v118, 4294901760
    %1684 = vmatpush.msra.mxu0 %v1683
    %v1685 = vand.u32 %v115, 4294901760
    %1686 = vmatpush.msra.mxu0 %v1685
    %v1687 = vand.u32 %v112, 4294901760
    %1688 = vmatpush.msra.mxu0 %v1687
    %v1689 = vand.u32 %v109, 4294901760
    %1690 = vmatpush.msra.mxu0 %v1689
    %v1691 = vand.u32 %v106, 4294901760
    %1692 = vmatpush.msra.mxu0 %v1691
    %v1693 = vand.u32 %v103, 4294901760
    %1694 = vmatpush.msra.mxu0 %v1693
    %v1695 = vand.u32 %v100, 4294901760
    %1696 = vmatpush.msra.mxu0 %v1695
    %v1697 = vand.u32 %v97, 4294901760
    %1698 = vmatpush.msra.mxu0 %v1697
    %v1699 = vand.u32 %v94, 4294901760
    %1700 = vmatpush.msra.mxu0 %v1699
    %v1701 = vand.u32 %v43, 4294901760
    %1702 = vmatmul.f32.gmra.mxu0 %v1701
    %v1703 = vpop.f32.mrf.mxu0
    %v1704 = vadd.f32 %v1667, %v1703
    %1705 = vdwg.mxu0
    %1706 = vmatpush.msra.mxu0 0.0
    %1707 = vmatpush.msra.mxu0 0.0
    %1708 = vmatpush.msra.mxu0 0.0
    %1709 = vmatpush.msra.mxu0 0.0
    %1710 = vmatpush.msra.mxu0 0.0
    %1711 = vmatpush.msra.mxu0 0.0
    %1712 = vmatpush.msra.mxu0 0.0
    %1713 = vmatpush.msra.mxu0 0.0
    %1714 = vmatpush.msra.mxu0 0.0
    %1715 = vmatpush.msra.mxu0 0.0
    %1716 = vmatpush.msra.mxu0 0.0
    %1717 = vmatpush.msra.mxu0 0.0
    %v1718 = vand.u32 %v151, 4294901760
    %1719 = vmatpush.msra.mxu0 %v1718
    %v1720 = vand.u32 %v148, 4294901760
    %1721 = vmatpush.msra.mxu0 %v1720
    %v1722 = vand.u32 %v145, 4294901760
    %1723 = vmatpush.msra.mxu0 %v1722
    %v1724 = vand.u32 %v142, 4294901760
    %1725 = vmatpush.msra.mxu0 %v1724
    %v1726 = vand.u32 %v155, 4294901760
    %v1727 = vsub.f32 %v155, %v1726
    %v1728 = vand.u32 %v1727, 4294901760
    %v1729 = vsub.f32 %v1727, %v1728
    %v1730 = vand.u32 %v1729, 4294901760
    %1731 = vmatmul.f32.gmra.mxu0 %v1730
    %v1732 = vpop.f32.mrf.mxu0
    %v1733 = vadd.f32 %v1704, %v1732
    %1734 = vdwg.mxu0
    %1735 = vmatpush.msra.mxu0 0.0
    %1736 = vmatpush.msra.mxu0 0.0
    %1737 = vmatpush.msra.mxu0 0.0
    %1738 = vmatpush.msra.mxu0 0.0
    %1739 = vmatpush.msra.mxu0 0.0
    %1740 = vmatpush.msra.mxu0 0.0
    %1741 = vmatpush.msra.mxu0 0.0
    %1742 = vmatpush.msra.mxu0 0.0
    %1743 = vmatpush.msra.mxu0 0.0
    %1744 = vmatpush.msra.mxu0 0.0
    %1745 = vmatpush.msra.mxu0 0.0
    %1746 = vmatpush.msra.mxu0 0.0
    %v1747 = vand.u32 %v151, 4294901760
    %v1748 = vsub.f32 %v151, %v1747
    %v1749 = vand.u32 %v1748, 4294901760
    %v1750 = vsub.f32 %v1748, %v1749
    %v1751 = vand.u32 %v1750, 4294901760
    %1752 = vmatpush.msra.mxu0 %v1751
    %v1753 = vand.u32 %v148, 4294901760
    %v1754 = vsub.f32 %v148, %v1753
    %v1755 = vand.u32 %v1754, 4294901760
    %v1756 = vsub.f32 %v1754, %v1755
    %v1757 = vand.u32 %v1756, 4294901760
    %1758 = vmatpush.msra.mxu0 %v1757
    %v1759 = vand.u32 %v145, 4294901760
    %v1760 = vsub.f32 %v145, %v1759
    %v1761 = vand.u32 %v1760, 4294901760
    %v1762 = vsub.f32 %v1760, %v1761
    %v1763 = vand.u32 %v1762, 4294901760
    %1764 = vmatpush.msra.mxu0 %v1763
    %v1765 = vand.u32 %v142, 4294901760
    %v1766 = vsub.f32 %v142, %v1765
    %v1767 = vand.u32 %v1766, 4294901760
    %v1768 = vsub.f32 %v1766, %v1767
    %v1769 = vand.u32 %v1768, 4294901760
    %1770 = vmatpush.msra.mxu0 %v1769
    %v1771 = vand.u32 %v155, 4294901760
    %1772 = vmatmul.f32.gmra.mxu0 %v1771
    %v1773 = vpop.f32.mrf.mxu0
    %v1774 = vadd.f32 %v1733, %v1773
    %1775 = vdwg.mxu0
    %1776 = vmatpush.msra.mxu0 0.0
    %1777 = vmatpush.msra.mxu0 0.0
    %1778 = vmatpush.msra.mxu0 0.0
    %1779 = vmatpush.msra.mxu0 0.0
    %1780 = vmatpush.msra.mxu0 0.0
    %1781 = vmatpush.msra.mxu0 0.0
    %1782 = vmatpush.msra.mxu0 0.0
    %1783 = vmatpush.msra.mxu0 0.0
    %1784 = vmatpush.msra.mxu0 0.0
    %1785 = vmatpush.msra.mxu0 0.0
    %1786 = vmatpush.msra.mxu0 0.0
    %1787 = vmatpush.msra.mxu0 0.0
    %v1788 = vand.u32 %v151, 4294901760
    %v1789 = vsub.f32 %v151, %v1788
    %1790 = vmatpush.msra.mxu0 %v1789
    %v1791 = vand.u32 %v148, 4294901760
    %v1792 = vsub.f32 %v148, %v1791
    %1793 = vmatpush.msra.mxu0 %v1792
    %v1794 = vand.u32 %v145, 4294901760
    %v1795 = vsub.f32 %v145, %v1794
    %1796 = vmatpush.msra.mxu0 %v1795
    %v1797 = vand.u32 %v142, 4294901760
    %v1798 = vsub.f32 %v142, %v1797
    %1799 = vmatpush.msra.mxu0 %v1798
    %v1800 = vand.u32 %v155, 4294901760
    %v1801 = vsub.f32 %v155, %v1800
    %1802 = vmatmul.f32.gmra.mxu0 %v1801
    %v1803 = vpop.f32.mrf.mxu0
    %v1804 = vadd.f32 %v1774, %v1803
    %1805 = vdwg.mxu0
    %1806 = vmatpush.msra.mxu0 0.0
    %1807 = vmatpush.msra.mxu0 0.0
    %1808 = vmatpush.msra.mxu0 0.0
    %1809 = vmatpush.msra.mxu0 0.0
    %1810 = vmatpush.msra.mxu0 0.0
    %1811 = vmatpush.msra.mxu0 0.0
    %1812 = vmatpush.msra.mxu0 0.0
    %1813 = vmatpush.msra.mxu0 0.0
    %1814 = vmatpush.msra.mxu0 0.0
    %1815 = vmatpush.msra.mxu0 0.0
    %1816 = vmatpush.msra.mxu0 0.0
    %1817 = vmatpush.msra.mxu0 0.0
    %v1818 = vand.u32 %v151, 4294901760
    %1819 = vmatpush.msra.mxu0 %v1818
    %v1820 = vand.u32 %v148, 4294901760
    %1821 = vmatpush.msra.mxu0 %v1820
    %v1822 = vand.u32 %v145, 4294901760
    %1823 = vmatpush.msra.mxu0 %v1822
    %v1824 = vand.u32 %v142, 4294901760
    %1825 = vmatpush.msra.mxu0 %v1824
    %v1826 = vand.u32 %v155, 4294901760
    %v1827 = vsub.f32 %v155, %v1826
    %v1828 = vand.u32 %v1827, 4294901760
    %1829 = vmatmul.f32.gmra.mxu0 %v1828
    %v1830 = vpop.f32.mrf.mxu0
    %v1831 = vadd.f32 %v1804, %v1830
    %1832 = vdwg.mxu0
    %1833 = vmatpush.msra.mxu0 0.0
    %1834 = vmatpush.msra.mxu0 0.0
    %1835 = vmatpush.msra.mxu0 0.0
    %1836 = vmatpush.msra.mxu0 0.0
    %1837 = vmatpush.msra.mxu0 0.0
    %1838 = vmatpush.msra.mxu0 0.0
    %1839 = vmatpush.msra.mxu0 0.0
    %1840 = vmatpush.msra.mxu0 0.0
    %1841 = vmatpush.msra.mxu0 0.0
    %1842 = vmatpush.msra.mxu0 0.0
    %1843 = vmatpush.msra.mxu0 0.0
    %1844 = vmatpush.msra.mxu0 0.0
    %v1845 = vand.u32 %v151, 4294901760
    %v1846 = vsub.f32 %v151, %v1845
    %v1847 = vand.u32 %v1846, 4294901760
    %1848 = vmatpush.msra.mxu0 %v1847
    %v1849 = vand.u32 %v148, 4294901760
    %v1850 = vsub.f32 %v148, %v1849
    %v1851 = vand.u32 %v1850, 4294901760
    %1852 = vmatpush.msra.mxu0 %v1851
    %v1853 = vand.u32 %v145, 4294901760
    %v1854 = vsub.f32 %v145, %v1853
    %v1855 = vand.u32 %v1854, 4294901760
    %1856 = vmatpush.msra.mxu0 %v1855
    %v1857 = vand.u32 %v142, 4294901760
    %v1858 = vsub.f32 %v142, %v1857
    %v1859 = vand.u32 %v1858, 4294901760
    %1860 = vmatpush.msra.mxu0 %v1859
    %v1861 = vand.u32 %v155, 4294901760
    %1862 = vmatmul.f32.gmra.mxu0 %v1861
    %v1863 = vpop.f32.mrf.mxu0
    %v1864 = vadd.f32 %v1831, %v1863
    %1865 = vdwg.mxu0
    %1866 = vmatpush.msra.mxu0 0.0
    %1867 = vmatpush.msra.mxu0 0.0
    %1868 = vmatpush.msra.mxu0 0.0
    %1869 = vmatpush.msra.mxu0 0.0
    %1870 = vmatpush.msra.mxu0 0.0
    %1871 = vmatpush.msra.mxu0 0.0
    %1872 = vmatpush.msra.mxu0 0.0
    %1873 = vmatpush.msra.mxu0 0.0
    %1874 = vmatpush.msra.mxu0 0.0
    %1875 = vmatpush.msra.mxu0 0.0
    %1876 = vmatpush.msra.mxu0 0.0
    %1877 = vmatpush.msra.mxu0 0.0
    %v1878 = vand.u32 %v151, 4294901760
    %1879 = vmatpush.msra.mxu0 %v1878
    %v1880 = vand.u32 %v148, 4294901760
    %1881 = vmatpush.msra.mxu0 %v1880
    %v1882 = vand.u32 %v145, 4294901760
    %1883 = vmatpush.msra.mxu0 %v1882
    %v1884 = vand.u32 %v142, 4294901760
    %1885 = vmatpush.msra.mxu0 %v1884
    %v1886 = vand.u32 %v155, 4294901760
    %1887 = vmatmul.f32.gmra.mxu0 %v1886
    %v1888 = vpop.f32.mrf.mxu0
    %v1889 = vadd.f32 %v1864, %v1888
    %1890 = vdwg.mxu0
    %v1891 = vand.u32 %v92, 4294901760
    %1892 = vmatpush.msra.mxu0 %v1891
    %v1893 = vand.u32 %v89, 4294901760
    %1894 = vmatpush.msra.mxu0 %v1893
    %v1895 = vand.u32 %v86, 4294901760
    %1896 = vmatpush.msra.mxu0 %v1895
    %v1897 = vand.u32 %v83, 4294901760
    %1898 = vmatpush.msra.mxu0 %v1897
    %v1899 = vand.u32 %v80, 4294901760
    %1900 = vmatpush.msra.mxu0 %v1899
    %v1901 = vand.u32 %v77, 4294901760
    %1902 = vmatpush.msra.mxu0 %v1901
    %v1903 = vand.u32 %v74, 4294901760
    %1904 = vmatpush.msra.mxu0 %v1903
    %v1905 = vand.u32 %v71, 4294901760
    %1906 = vmatpush.msra.mxu0 %v1905
    %v1907 = vand.u32 %v68, 4294901760
    %1908 = vmatpush.msra.mxu0 %v1907
    %v1909 = vand.u32 %v65, 4294901760
    %1910 = vmatpush.msra.mxu0 %v1909
    %v1911 = vand.u32 %v62, 4294901760
    %1912 = vmatpush.msra.mxu0 %v1911
    %v1913 = vand.u32 %v59, 4294901760
    %1914 = vmatpush.msra.mxu0 %v1913
    %v1915 = vand.u32 %v56, 4294901760
    %1916 = vmatpush.msra.mxu0 %v1915
    %v1917 = vand.u32 %v53, 4294901760
    %1918 = vmatpush.msra.mxu0 %v1917
    %v1919 = vand.u32 %v50, 4294901760
    %1920 = vmatpush.msra.mxu0 %v1919
    %v1921 = vand.u32 %v47, 4294901760
    %1922 = vmatpush.msra.mxu0 %v1921
    %v1923 = vand.u32 %v42, 4294901760
    %v1924 = vsub.f32 %v42, %v1923
    %v1925 = vand.u32 %v1924, 4294901760
    %v1926 = vsub.f32 %v1924, %v1925
    %v1927 = vand.u32 %v1926, 4294901760
    %1928 = vmatmul.f32.gmra.mxu0 %v1927
    %v1929 = vpop.f32.mrf.mxu0
    %v1930 = vadd.f32 0.0, %v1929
    %1931 = vdwg.mxu0
    %v1932 = vand.u32 %v92, 4294901760
    %v1933 = vsub.f32 %v92, %v1932
    %v1934 = vand.u32 %v1933, 4294901760
    %v1935 = vsub.f32 %v1933, %v1934
    %v1936 = vand.u32 %v1935, 4294901760
    %1937 = vmatpush.msra.mxu0 %v1936
    %v1938 = vand.u32 %v89, 4294901760
    %v1939 = vsub.f32 %v89, %v1938
    %v1940 = vand.u32 %v1939, 4294901760
    %v1941 = vsub.f32 %v1939, %v1940
    %v1942 = vand.u32 %v1941, 4294901760
    %1943 = vmatpush.msra.mxu0 %v1942
    %v1944 = vand.u32 %v86, 4294901760
    %v1945 = vsub.f32 %v86, %v1944
    %v1946 = vand.u32 %v1945, 4294901760
    %v1947 = vsub.f32 %v1945, %v1946
    %v1948 = vand.u32 %v1947, 4294901760
    %1949 = vmatpush.msra.mxu0 %v1948
    %v1950 = vand.u32 %v83, 4294901760
    %v1951 = vsub.f32 %v83, %v1950
    %v1952 = vand.u32 %v1951, 4294901760
    %v1953 = vsub.f32 %v1951, %v1952
    %v1954 = vand.u32 %v1953, 4294901760
    %1955 = vmatpush.msra.mxu0 %v1954
    %v1956 = vand.u32 %v80, 4294901760
    %v1957 = vsub.f32 %v80, %v1956
    %v1958 = vand.u32 %v1957, 4294901760
    %v1959 = vsub.f32 %v1957, %v1958
    %v1960 = vand.u32 %v1959, 4294901760
    %1961 = vmatpush.msra.mxu0 %v1960
    %v1962 = vand.u32 %v77, 4294901760
    %v1963 = vsub.f32 %v77, %v1962
    %v1964 = vand.u32 %v1963, 4294901760
    %v1965 = vsub.f32 %v1963, %v1964
    %v1966 = vand.u32 %v1965, 4294901760
    %1967 = vmatpush.msra.mxu0 %v1966
    %v1968 = vand.u32 %v74, 4294901760
    %v1969 = vsub.f32 %v74, %v1968
    %v1970 = vand.u32 %v1969, 4294901760
    %v1971 = vsub.f32 %v1969, %v1970
    %v1972 = vand.u32 %v1971, 4294901760
    %1973 = vmatpush.msra.mxu0 %v1972
    %v1974 = vand.u32 %v71, 4294901760
    %v1975 = vsub.f32 %v71, %v1974
    %v1976 = vand.u32 %v1975, 4294901760
    %v1977 = vsub.f32 %v1975, %v1976
    %v1978 = vand.u32 %v1977, 4294901760
    %1979 = vmatpush.msra.mxu0 %v1978
    %v1980 = vand.u32 %v68, 4294901760
    %v1981 = vsub.f32 %v68, %v1980
    %v1982 = vand.u32 %v1981, 4294901760
    %v1983 = vsub.f32 %v1981, %v1982
    %v1984 = vand.u32 %v1983, 4294901760
    %1985 = vmatpush.msra.mxu0 %v1984
    %v1986 = vand.u32 %v65, 4294901760
    %v1987 = vsub.f32 %v65, %v1986
    %v1988 = vand.u32 %v1987, 4294901760
    %v1989 = vsub.f32 %v1987, %v1988
    %v1990 = vand.u32 %v1989, 4294901760
    %1991 = vmatpush.msra.mxu0 %v1990
    %v1992 = vand.u32 %v62, 4294901760
    %v1993 = vsub.f32 %v62, %v1992
    %v1994 = vand.u32 %v1993, 4294901760
    %v1995 = vsub.f32 %v1993, %v1994
    %v1996 = vand.u32 %v1995, 4294901760
    %1997 = vmatpush.msra.mxu0 %v1996
    %v1998 = vand.u32 %v59, 4294901760
    %v1999 = vsub.f32 %v59, %v1998
    %v2000 = vand.u32 %v1999, 4294901760
    %v2001 = vsub.f32 %v1999, %v2000
    %v2002 = vand.u32 %v2001, 4294901760
    %2003 = vmatpush.msra.mxu0 %v2002
    %v2004 = vand.u32 %v56, 4294901760
    %v2005 = vsub.f32 %v56, %v2004
    %v2006 = vand.u32 %v2005, 4294901760
    %v2007 = vsub.f32 %v2005, %v2006
    %v2008 = vand.u32 %v2007, 4294901760
    %2009 = vmatpush.msra.mxu0 %v2008
    %v2010 = vand.u32 %v53, 4294901760
    %v2011 = vsub.f32 %v53, %v2010
    %v2012 = vand.u32 %v2011, 4294901760
    %v2013 = vsub.f32 %v2011, %v2012
    %v2014 = vand.u32 %v2013, 4294901760
    %2015 = vmatpush.msra.mxu0 %v2014
    %v2016 = vand.u32 %v50, 4294901760
    %v2017 = vsub.f32 %v50, %v2016
    %v2018 = vand.u32 %v2017, 4294901760
    %v2019 = vsub.f32 %v2017, %v2018
    %v2020 = vand.u32 %v2019, 4294901760
    %2021 = vmatpush.msra.mxu0 %v2020
    %v2022 = vand.u32 %v47, 4294901760
    %v2023 = vsub.f32 %v47, %v2022
    %v2024 = vand.u32 %v2023, 4294901760
    %v2025 = vsub.f32 %v2023, %v2024
    %v2026 = vand.u32 %v2025, 4294901760
    %2027 = vmatpush.msra.mxu0 %v2026
    %v2028 = vand.u32 %v42, 4294901760
    %2029 = vmatmul.f32.gmra.mxu0 %v2028
    %v2030 = vpop.f32.mrf.mxu0
    %v2031 = vadd.f32 %v1930, %v2030
    %2032 = vdwg.mxu0
    %v2033 = vand.u32 %v92, 4294901760
    %v2034 = vsub.f32 %v92, %v2033
    %2035 = vmatpush.msra.mxu0 %v2034
    %v2036 = vand.u32 %v89, 4294901760
    %v2037 = vsub.f32 %v89, %v2036
    %2038 = vmatpush.msra.mxu0 %v2037
    %v2039 = vand.u32 %v86, 4294901760
    %v2040 = vsub.f32 %v86, %v2039
    %2041 = vmatpush.msra.mxu0 %v2040
    %v2042 = vand.u32 %v83, 4294901760
    %v2043 = vsub.f32 %v83, %v2042
    %2044 = vmatpush.msra.mxu0 %v2043
    %v2045 = vand.u32 %v80, 4294901760
    %v2046 = vsub.f32 %v80, %v2045
    %2047 = vmatpush.msra.mxu0 %v2046
    %v2048 = vand.u32 %v77, 4294901760
    %v2049 = vsub.f32 %v77, %v2048
    %2050 = vmatpush.msra.mxu0 %v2049
    %v2051 = vand.u32 %v74, 4294901760
    %v2052 = vsub.f32 %v74, %v2051
    %2053 = vmatpush.msra.mxu0 %v2052
    %v2054 = vand.u32 %v71, 4294901760
    %v2055 = vsub.f32 %v71, %v2054
    %2056 = vmatpush.msra.mxu0 %v2055
    %v2057 = vand.u32 %v68, 4294901760
    %v2058 = vsub.f32 %v68, %v2057
    %2059 = vmatpush.msra.mxu0 %v2058
    %v2060 = vand.u32 %v65, 4294901760
    %v2061 = vsub.f32 %v65, %v2060
    %2062 = vmatpush.msra.mxu0 %v2061
    %v2063 = vand.u32 %v62, 4294901760
    %v2064 = vsub.f32 %v62, %v2063
    %2065 = vmatpush.msra.mxu0 %v2064
    %v2066 = vand.u32 %v59, 4294901760
    %v2067 = vsub.f32 %v59, %v2066
    %2068 = vmatpush.msra.mxu0 %v2067
    %v2069 = vand.u32 %v56, 4294901760
    %v2070 = vsub.f32 %v56, %v2069
    %2071 = vmatpush.msra.mxu0 %v2070
    %v2072 = vand.u32 %v53, 4294901760
    %v2073 = vsub.f32 %v53, %v2072
    %2074 = vmatpush.msra.mxu0 %v2073
    %v2075 = vand.u32 %v50, 4294901760
    %v2076 = vsub.f32 %v50, %v2075
    %2077 = vmatpush.msra.mxu0 %v2076
    %v2078 = vand.u32 %v47, 4294901760
    %v2079 = vsub.f32 %v47, %v2078
    %2080 = vmatpush.msra.mxu0 %v2079
    %v2081 = vand.u32 %v42, 4294901760
    %v2082 = vsub.f32 %v42, %v2081
    %2083 = vmatmul.f32.gmra.mxu0 %v2082
    %v2084 = vpop.f32.mrf.mxu0
    %v2085 = vadd.f32 %v2031, %v2084
    %2086 = vdwg.mxu0
    %v2087 = vand.u32 %v92, 4294901760
    %2088 = vmatpush.msra.mxu0 %v2087
    %v2089 = vand.u32 %v89, 4294901760
    %2090 = vmatpush.msra.mxu0 %v2089
    %v2091 = vand.u32 %v86, 4294901760
    %2092 = vmatpush.msra.mxu0 %v2091
    %v2093 = vand.u32 %v83, 4294901760
    %2094 = vmatpush.msra.mxu0 %v2093
    %v2095 = vand.u32 %v80, 4294901760
    %2096 = vmatpush.msra.mxu0 %v2095
    %v2097 = vand.u32 %v77, 4294901760
    %2098 = vmatpush.msra.mxu0 %v2097
    %v2099 = vand.u32 %v74, 4294901760
    %2100 = vmatpush.msra.mxu0 %v2099
    %v2101 = vand.u32 %v71, 4294901760
    %2102 = vmatpush.msra.mxu0 %v2101
    %v2103 = vand.u32 %v68, 4294901760
    %2104 = vmatpush.msra.mxu0 %v2103
    %v2105 = vand.u32 %v65, 4294901760
    %2106 = vmatpush.msra.mxu0 %v2105
    %v2107 = vand.u32 %v62, 4294901760
    %2108 = vmatpush.msra.mxu0 %v2107
    %v2109 = vand.u32 %v59, 4294901760
    %2110 = vmatpush.msra.mxu0 %v2109
    %v2111 = vand.u32 %v56, 4294901760
    %2112 = vmatpush.msra.mxu0 %v2111
    %v2113 = vand.u32 %v53, 4294901760
    %2114 = vmatpush.msra.mxu0 %v2113
    %v2115 = vand.u32 %v50, 4294901760
    %2116 = vmatpush.msra.mxu0 %v2115
    %v2117 = vand.u32 %v47, 4294901760
    %2118 = vmatpush.msra.mxu0 %v2117
    %v2119 = vand.u32 %v42, 4294901760
    %v2120 = vsub.f32 %v42, %v2119
    %v2121 = vand.u32 %v2120, 4294901760
    %2122 = vmatmul.f32.gmra.mxu0 %v2121
    %v2123 = vpop.f32.mrf.mxu0
    %v2124 = vadd.f32 %v2085, %v2123
    %2125 = vdwg.mxu0
    %v2126 = vand.u32 %v92, 4294901760
    %v2127 = vsub.f32 %v92, %v2126
    %v2128 = vand.u32 %v2127, 4294901760
    %2129 = vmatpush.msra.mxu0 %v2128
    %v2130 = vand.u32 %v89, 4294901760
    %v2131 = vsub.f32 %v89, %v2130
    %v2132 = vand.u32 %v2131, 4294901760
    %2133 = vmatpush.msra.mxu0 %v2132
    %v2134 = vand.u32 %v86, 4294901760
    %v2135 = vsub.f32 %v86, %v2134
    %v2136 = vand.u32 %v2135, 4294901760
    %2137 = vmatpush.msra.mxu0 %v2136
    %v2138 = vand.u32 %v83, 4294901760
    %v2139 = vsub.f32 %v83, %v2138
    %v2140 = vand.u32 %v2139, 4294901760
    %2141 = vmatpush.msra.mxu0 %v2140
    %v2142 = vand.u32 %v80, 4294901760
    %v2143 = vsub.f32 %v80, %v2142
    %v2144 = vand.u32 %v2143, 4294901760
    %2145 = vmatpush.msra.mxu0 %v2144
    %v2146 = vand.u32 %v77, 4294901760
    %v2147 = vsub.f32 %v77, %v2146
    %v2148 = vand.u32 %v2147, 4294901760
    %2149 = vmatpush.msra.mxu0 %v2148
    %v2150 = vand.u32 %v74, 4294901760
    %v2151 = vsub.f32 %v74, %v2150
    %v2152 = vand.u32 %v2151, 4294901760
    %2153 = vmatpush.msra.mxu0 %v2152
    %v2154 = vand.u32 %v71, 4294901760
    %v2155 = vsub.f32 %v71, %v2154
    %v2156 = vand.u32 %v2155, 4294901760
    %2157 = vmatpush.msra.mxu0 %v2156
    %v2158 = vand.u32 %v68, 4294901760
    %v2159 = vsub.f32 %v68, %v2158
    %v2160 = vand.u32 %v2159, 4294901760
    %2161 = vmatpush.msra.mxu0 %v2160
    %v2162 = vand.u32 %v65, 4294901760
    %v2163 = vsub.f32 %v65, %v2162
    %v2164 = vand.u32 %v2163, 4294901760
    %2165 = vmatpush.msra.mxu0 %v2164
    %v2166 = vand.u32 %v62, 4294901760
    %v2167 = vsub.f32 %v62, %v2166
    %v2168 = vand.u32 %v2167, 4294901760
    %2169 = vmatpush.msra.mxu0 %v2168
    %v2170 = vand.u32 %v59, 4294901760
    %v2171 = vsub.f32 %v59, %v2170
    %v2172 = vand.u32 %v2171, 4294901760
    %2173 = vmatpush.msra.mxu0 %v2172
    %v2174 = vand.u32 %v56, 4294901760
    %v2175 = vsub.f32 %v56, %v2174
    %v2176 = vand.u32 %v2175, 4294901760
    %2177 = vmatpush.msra.mxu0 %v2176
    %v2178 = vand.u32 %v53, 4294901760
    %v2179 = vsub.f32 %v53, %v2178
    %v2180 = vand.u32 %v2179, 4294901760
    %2181 = vmatpush.msra.mxu0 %v2180
    %v2182 = vand.u32 %v50, 4294901760
    %v2183 = vsub.f32 %v50, %v2182
    %v2184 = vand.u32 %v2183, 4294901760
    %2185 = vmatpush.msra.mxu0 %v2184
    %v2186 = vand.u32 %v47, 4294901760
    %v2187 = vsub.f32 %v47, %v2186
    %v2188 = vand.u32 %v2187, 4294901760
    %2189 = vmatpush.msra.mxu0 %v2188
    %v2190 = vand.u32 %v42, 4294901760
    %2191 = vmatmul.f32.gmra.mxu0 %v2190
    %v2192 = vpop.f32.mrf.mxu0
    %v2193 = vadd.f32 %v2124, %v2192
    %2194 = vdwg.mxu0
    %v2195 = vand.u32 %v92, 4294901760
    %2196 = vmatpush.msra.mxu0 %v2195
    %v2197 = vand.u32 %v89, 4294901760
    %2198 = vmatpush.msra.mxu0 %v2197
    %v2199 = vand.u32 %v86, 4294901760
    %2200 = vmatpush.msra.mxu0 %v2199
    %v2201 = vand.u32 %v83, 4294901760
    %2202 = vmatpush.msra.mxu0 %v2201
    %v2203 = vand.u32 %v80, 4294901760
    %2204 = vmatpush.msra.mxu0 %v2203
    %v2205 = vand.u32 %v77, 4294901760
    %2206 = vmatpush.msra.mxu0 %v2205
    %v2207 = vand.u32 %v74, 4294901760
    %2208 = vmatpush.msra.mxu0 %v2207
    %v2209 = vand.u32 %v71, 4294901760
    %2210 = vmatpush.msra.mxu0 %v2209
    %v2211 = vand.u32 %v68, 4294901760
    %2212 = vmatpush.msra.mxu0 %v2211
    %v2213 = vand.u32 %v65, 4294901760
    %2214 = vmatpush.msra.mxu0 %v2213
    %v2215 = vand.u32 %v62, 4294901760
    %2216 = vmatpush.msra.mxu0 %v2215
    %v2217 = vand.u32 %v59, 4294901760
    %2218 = vmatpush.msra.mxu0 %v2217
    %v2219 = vand.u32 %v56, 4294901760
    %2220 = vmatpush.msra.mxu0 %v2219
    %v2221 = vand.u32 %v53, 4294901760
    %2222 = vmatpush.msra.mxu0 %v2221
    %v2223 = vand.u32 %v50, 4294901760
    %2224 = vmatpush.msra.mxu0 %v2223
    %v2225 = vand.u32 %v47, 4294901760
    %2226 = vmatpush.msra.mxu0 %v2225
    %v2227 = vand.u32 %v42, 4294901760
    %2228 = vmatmul.f32.gmra.mxu0 %v2227
    %v2229 = vpop.f32.mrf.mxu0
    %v2230 = vadd.f32 %v2193, %v2229
    %2231 = vdwg.mxu0
    %v2232 = vand.u32 %v140, 4294901760
    %2233 = vmatpush.msra.mxu0 %v2232
    %v2234 = vand.u32 %v137, 4294901760
    %2235 = vmatpush.msra.mxu0 %v2234
    %v2236 = vand.u32 %v134, 4294901760
    %2237 = vmatpush.msra.mxu0 %v2236
    %v2238 = vand.u32 %v131, 4294901760
    %2239 = vmatpush.msra.mxu0 %v2238
    %v2240 = vand.u32 %v128, 4294901760
    %2241 = vmatpush.msra.mxu0 %v2240
    %v2242 = vand.u32 %v125, 4294901760
    %2243 = vmatpush.msra.mxu0 %v2242
    %v2244 = vand.u32 %v122, 4294901760
    %2245 = vmatpush.msra.mxu0 %v2244
    %v2246 = vand.u32 %v119, 4294901760
    %2247 = vmatpush.msra.mxu0 %v2246
    %v2248 = vand.u32 %v116, 4294901760
    %2249 = vmatpush.msra.mxu0 %v2248
    %v2250 = vand.u32 %v113, 4294901760
    %2251 = vmatpush.msra.mxu0 %v2250
    %v2252 = vand.u32 %v110, 4294901760
    %2253 = vmatpush.msra.mxu0 %v2252
    %v2254 = vand.u32 %v107, 4294901760
    %2255 = vmatpush.msra.mxu0 %v2254
    %v2256 = vand.u32 %v104, 4294901760
    %2257 = vmatpush.msra.mxu0 %v2256
    %v2258 = vand.u32 %v101, 4294901760
    %2259 = vmatpush.msra.mxu0 %v2258
    %v2260 = vand.u32 %v98, 4294901760
    %2261 = vmatpush.msra.mxu0 %v2260
    %v2262 = vand.u32 %v95, 4294901760
    %2263 = vmatpush.msra.mxu0 %v2262
    %v2264 = vand.u32 %v43, 4294901760
    %v2265 = vsub.f32 %v43, %v2264
    %v2266 = vand.u32 %v2265, 4294901760
    %v2267 = vsub.f32 %v2265, %v2266
    %v2268 = vand.u32 %v2267, 4294901760
    %2269 = vmatmul.f32.gmra.mxu0 %v2268
    %v2270 = vpop.f32.mrf.mxu0
    %v2271 = vadd.f32 %v2230, %v2270
    %2272 = vdwg.mxu0
    %v2273 = vand.u32 %v140, 4294901760
    %v2274 = vsub.f32 %v140, %v2273
    %v2275 = vand.u32 %v2274, 4294901760
    %v2276 = vsub.f32 %v2274, %v2275
    %v2277 = vand.u32 %v2276, 4294901760
    %2278 = vmatpush.msra.mxu0 %v2277
    %v2279 = vand.u32 %v137, 4294901760
    %v2280 = vsub.f32 %v137, %v2279
    %v2281 = vand.u32 %v2280, 4294901760
    %v2282 = vsub.f32 %v2280, %v2281
    %v2283 = vand.u32 %v2282, 4294901760
    %2284 = vmatpush.msra.mxu0 %v2283
    %v2285 = vand.u32 %v134, 4294901760
    %v2286 = vsub.f32 %v134, %v2285
    %v2287 = vand.u32 %v2286, 4294901760
    %v2288 = vsub.f32 %v2286, %v2287
    %v2289 = vand.u32 %v2288, 4294901760
    %2290 = vmatpush.msra.mxu0 %v2289
    %v2291 = vand.u32 %v131, 4294901760
    %v2292 = vsub.f32 %v131, %v2291
    %v2293 = vand.u32 %v2292, 4294901760
    %v2294 = vsub.f32 %v2292, %v2293
    %v2295 = vand.u32 %v2294, 4294901760
    %2296 = vmatpush.msra.mxu0 %v2295
    %v2297 = vand.u32 %v128, 4294901760
    %v2298 = vsub.f32 %v128, %v2297
    %v2299 = vand.u32 %v2298, 4294901760
    %v2300 = vsub.f32 %v2298, %v2299
    %v2301 = vand.u32 %v2300, 4294901760
    %2302 = vmatpush.msra.mxu0 %v2301
    %v2303 = vand.u32 %v125, 4294901760
    %v2304 = vsub.f32 %v125, %v2303
    %v2305 = vand.u32 %v2304, 4294901760
    %v2306 = vsub.f32 %v2304, %v2305
    %v2307 = vand.u32 %v2306, 4294901760
    %2308 = vmatpush.msra.mxu0 %v2307
    %v2309 = vand.u32 %v122, 4294901760
    %v2310 = vsub.f32 %v122, %v2309
    %v2311 = vand.u32 %v2310, 4294901760
    %v2312 = vsub.f32 %v2310, %v2311
    %v2313 = vand.u32 %v2312, 4294901760
    %2314 = vmatpush.msra.mxu0 %v2313
    %v2315 = vand.u32 %v119, 4294901760
    %v2316 = vsub.f32 %v119, %v2315
    %v2317 = vand.u32 %v2316, 4294901760
    %v2318 = vsub.f32 %v2316, %v2317
    %v2319 = vand.u32 %v2318, 4294901760
    %2320 = vmatpush.msra.mxu0 %v2319
    %v2321 = vand.u32 %v116, 4294901760
    %v2322 = vsub.f32 %v116, %v2321
    %v2323 = vand.u32 %v2322, 4294901760
    %v2324 = vsub.f32 %v2322, %v2323
    %v2325 = vand.u32 %v2324, 4294901760
    %2326 = vmatpush.msra.mxu0 %v2325
    %v2327 = vand.u32 %v113, 4294901760
    %v2328 = vsub.f32 %v113, %v2327
    %v2329 = vand.u32 %v2328, 4294901760
    %v2330 = vsub.f32 %v2328, %v2329
    %v2331 = vand.u32 %v2330, 4294901760
    %2332 = vmatpush.msra.mxu0 %v2331
    %v2333 = vand.u32 %v110, 4294901760
    %v2334 = vsub.f32 %v110, %v2333
    %v2335 = vand.u32 %v2334, 4294901760
    %v2336 = vsub.f32 %v2334, %v2335
    %v2337 = vand.u32 %v2336, 4294901760
    %2338 = vmatpush.msra.mxu0 %v2337
    %v2339 = vand.u32 %v107, 4294901760
    %v2340 = vsub.f32 %v107, %v2339
    %v2341 = vand.u32 %v2340, 4294901760
    %v2342 = vsub.f32 %v2340, %v2341
    %v2343 = vand.u32 %v2342, 4294901760
    %2344 = vmatpush.msra.mxu0 %v2343
    %v2345 = vand.u32 %v104, 4294901760
    %v2346 = vsub.f32 %v104, %v2345
    %v2347 = vand.u32 %v2346, 4294901760
    %v2348 = vsub.f32 %v2346, %v2347
    %v2349 = vand.u32 %v2348, 4294901760
    %2350 = vmatpush.msra.mxu0 %v2349
    %v2351 = vand.u32 %v101, 4294901760
    %v2352 = vsub.f32 %v101, %v2351
    %v2353 = vand.u32 %v2352, 4294901760
    %v2354 = vsub.f32 %v2352, %v2353
    %v2355 = vand.u32 %v2354, 4294901760
    %2356 = vmatpush.msra.mxu0 %v2355
    %v2357 = vand.u32 %v98, 4294901760
    %v2358 = vsub.f32 %v98, %v2357
    %v2359 = vand.u32 %v2358, 4294901760
    %v2360 = vsub.f32 %v2358, %v2359
    %v2361 = vand.u32 %v2360, 4294901760
    %2362 = vmatpush.msra.mxu0 %v2361
    %v2363 = vand.u32 %v95, 4294901760
    %v2364 = vsub.f32 %v95, %v2363
    %v2365 = vand.u32 %v2364, 4294901760
    %v2366 = vsub.f32 %v2364, %v2365
    %v2367 = vand.u32 %v2366, 4294901760
    %2368 = vmatpush.msra.mxu0 %v2367
    %v2369 = vand.u32 %v43, 4294901760
    %2370 = vmatmul.f32.gmra.mxu0 %v2369
    %v2371 = vpop.f32.mrf.mxu0
    %v2372 = vadd.f32 %v2271, %v2371
    %2373 = vdwg.mxu0
    %v2374 = vand.u32 %v140, 4294901760
    %v2375 = vsub.f32 %v140, %v2374
    %2376 = vmatpush.msra.mxu0 %v2375
    %v2377 = vand.u32 %v137, 4294901760
    %v2378 = vsub.f32 %v137, %v2377
    %2379 = vmatpush.msra.mxu0 %v2378
    %v2380 = vand.u32 %v134, 4294901760
    %v2381 = vsub.f32 %v134, %v2380
    %2382 = vmatpush.msra.mxu0 %v2381
    %v2383 = vand.u32 %v131, 4294901760
    %v2384 = vsub.f32 %v131, %v2383
    %2385 = vmatpush.msra.mxu0 %v2384
    %v2386 = vand.u32 %v128, 4294901760
    %v2387 = vsub.f32 %v128, %v2386
    %2388 = vmatpush.msra.mxu0 %v2387
    %v2389 = vand.u32 %v125, 4294901760
    %v2390 = vsub.f32 %v125, %v2389
    %2391 = vmatpush.msra.mxu0 %v2390
    %v2392 = vand.u32 %v122, 4294901760
    %v2393 = vsub.f32 %v122, %v2392
    %2394 = vmatpush.msra.mxu0 %v2393
    %v2395 = vand.u32 %v119, 4294901760
    %v2396 = vsub.f32 %v119, %v2395
    %2397 = vmatpush.msra.mxu0 %v2396
    %v2398 = vand.u32 %v116, 4294901760
    %v2399 = vsub.f32 %v116, %v2398
    %2400 = vmatpush.msra.mxu0 %v2399
    %v2401 = vand.u32 %v113, 4294901760
    %v2402 = vsub.f32 %v113, %v2401
    %2403 = vmatpush.msra.mxu0 %v2402
    %v2404 = vand.u32 %v110, 4294901760
    %v2405 = vsub.f32 %v110, %v2404
    %2406 = vmatpush.msra.mxu0 %v2405
    %v2407 = vand.u32 %v107, 4294901760
    %v2408 = vsub.f32 %v107, %v2407
    %2409 = vmatpush.msra.mxu0 %v2408
    %v2410 = vand.u32 %v104, 4294901760
    %v2411 = vsub.f32 %v104, %v2410
    %2412 = vmatpush.msra.mxu0 %v2411
    %v2413 = vand.u32 %v101, 4294901760
    %v2414 = vsub.f32 %v101, %v2413
    %2415 = vmatpush.msra.mxu0 %v2414
    %v2416 = vand.u32 %v98, 4294901760
    %v2417 = vsub.f32 %v98, %v2416
    %2418 = vmatpush.msra.mxu0 %v2417
    %v2419 = vand.u32 %v95, 4294901760
    %v2420 = vsub.f32 %v95, %v2419
    %2421 = vmatpush.msra.mxu0 %v2420
    %v2422 = vand.u32 %v43, 4294901760
    %v2423 = vsub.f32 %v43, %v2422
    %2424 = vmatmul.f32.gmra.mxu0 %v2423
    %v2425 = vpop.f32.mrf.mxu0
    %v2426 = vadd.f32 %v2372, %v2425
    %2427 = vdwg.mxu0
    %v2428 = vand.u32 %v140, 4294901760
    %2429 = vmatpush.msra.mxu0 %v2428
    %v2430 = vand.u32 %v137, 4294901760
    %2431 = vmatpush.msra.mxu0 %v2430
    %v2432 = vand.u32 %v134, 4294901760
    %2433 = vmatpush.msra.mxu0 %v2432
    %v2434 = vand.u32 %v131, 4294901760
    %2435 = vmatpush.msra.mxu0 %v2434
    %v2436 = vand.u32 %v128, 4294901760
    %2437 = vmatpush.msra.mxu0 %v2436
    %v2438 = vand.u32 %v125, 4294901760
    %2439 = vmatpush.msra.mxu0 %v2438
    %v2440 = vand.u32 %v122, 4294901760
    %2441 = vmatpush.msra.mxu0 %v2440
    %v2442 = vand.u32 %v119, 4294901760
    %2443 = vmatpush.msra.mxu0 %v2442
    %v2444 = vand.u32 %v116, 4294901760
    %2445 = vmatpush.msra.mxu0 %v2444
    %v2446 = vand.u32 %v113, 4294901760
    %2447 = vmatpush.msra.mxu0 %v2446
    %v2448 = vand.u32 %v110, 4294901760
    %2449 = vmatpush.msra.mxu0 %v2448
    %v2450 = vand.u32 %v107, 4294901760
    %2451 = vmatpush.msra.mxu0 %v2450
    %v2452 = vand.u32 %v104, 4294901760
    %2453 = vmatpush.msra.mxu0 %v2452
    %v2454 = vand.u32 %v101, 4294901760
    %2455 = vmatpush.msra.mxu0 %v2454
    %v2456 = vand.u32 %v98, 4294901760
    %2457 = vmatpush.msra.mxu0 %v2456
    %v2458 = vand.u32 %v95, 4294901760
    %2459 = vmatpush.msra.mxu0 %v2458
    %v2460 = vand.u32 %v43, 4294901760
    %v2461 = vsub.f32 %v43, %v2460
    %v2462 = vand.u32 %v2461, 4294901760
    %2463 = vmatmul.f32.gmra.mxu0 %v2462
    %v2464 = vpop.f32.mrf.mxu0
    %v2465 = vadd.f32 %v2426, %v2464
    %2466 = vdwg.mxu0
    %v2467 = vand.u32 %v140, 4294901760
    %v2468 = vsub.f32 %v140, %v2467
    %v2469 = vand.u32 %v2468, 4294901760
    %2470 = vmatpush.msra.mxu0 %v2469
    %v2471 = vand.u32 %v137, 4294901760
    %v2472 = vsub.f32 %v137, %v2471
    %v2473 = vand.u32 %v2472, 4294901760
    %2474 = vmatpush.msra.mxu0 %v2473
    %v2475 = vand.u32 %v134, 4294901760
    %v2476 = vsub.f32 %v134, %v2475
    %v2477 = vand.u32 %v2476, 4294901760
    %2478 = vmatpush.msra.mxu0 %v2477
    %v2479 = vand.u32 %v131, 4294901760
    %v2480 = vsub.f32 %v131, %v2479
    %v2481 = vand.u32 %v2480, 4294901760
    %2482 = vmatpush.msra.mxu0 %v2481
    %v2483 = vand.u32 %v128, 4294901760
    %v2484 = vsub.f32 %v128, %v2483
    %v2485 = vand.u32 %v2484, 4294901760
    %2486 = vmatpush.msra.mxu0 %v2485
    %v2487 = vand.u32 %v125, 4294901760
    %v2488 = vsub.f32 %v125, %v2487
    %v2489 = vand.u32 %v2488, 4294901760
    %2490 = vmatpush.msra.mxu0 %v2489
    %v2491 = vand.u32 %v122, 4294901760
    %v2492 = vsub.f32 %v122, %v2491
    %v2493 = vand.u32 %v2492, 4294901760
    %2494 = vmatpush.msra.mxu0 %v2493
    %v2495 = vand.u32 %v119, 4294901760
    %v2496 = vsub.f32 %v119, %v2495
    %v2497 = vand.u32 %v2496, 4294901760
    %2498 = vmatpush.msra.mxu0 %v2497
    %v2499 = vand.u32 %v116, 4294901760
    %v2500 = vsub.f32 %v116, %v2499
    %v2501 = vand.u32 %v2500, 4294901760
    %2502 = vmatpush.msra.mxu0 %v2501
    %v2503 = vand.u32 %v113, 4294901760
    %v2504 = vsub.f32 %v113, %v2503
    %v2505 = vand.u32 %v2504, 4294901760
    %2506 = vmatpush.msra.mxu0 %v2505
    %v2507 = vand.u32 %v110, 4294901760
    %v2508 = vsub.f32 %v110, %v2507
    %v2509 = vand.u32 %v2508, 4294901760
    %2510 = vmatpush.msra.mxu0 %v2509
    %v2511 = vand.u32 %v107, 4294901760
    %v2512 = vsub.f32 %v107, %v2511
    %v2513 = vand.u32 %v2512, 4294901760
    %2514 = vmatpush.msra.mxu0 %v2513
    %v2515 = vand.u32 %v104, 4294901760
    %v2516 = vsub.f32 %v104, %v2515
    %v2517 = vand.u32 %v2516, 4294901760
    %2518 = vmatpush.msra.mxu0 %v2517
    %v2519 = vand.u32 %v101, 4294901760
    %v2520 = vsub.f32 %v101, %v2519
    %v2521 = vand.u32 %v2520, 4294901760
    %2522 = vmatpush.msra.mxu0 %v2521
    %v2523 = vand.u32 %v98, 4294901760
    %v2524 = vsub.f32 %v98, %v2523
    %v2525 = vand.u32 %v2524, 4294901760
    %2526 = vmatpush.msra.mxu0 %v2525
    %v2527 = vand.u32 %v95, 4294901760
    %v2528 = vsub.f32 %v95, %v2527
    %v2529 = vand.u32 %v2528, 4294901760
    %2530 = vmatpush.msra.mxu0 %v2529
    %v2531 = vand.u32 %v43, 4294901760
    %2532 = vmatmul.f32.gmra.mxu0 %v2531
    %v2533 = vpop.f32.mrf.mxu0
    %v2534 = vadd.f32 %v2465, %v2533
    %2535 = vdwg.mxu0
    %v2536 = vand.u32 %v140, 4294901760
    %2537 = vmatpush.msra.mxu0 %v2536
    %v2538 = vand.u32 %v137, 4294901760
    %2539 = vmatpush.msra.mxu0 %v2538
    %v2540 = vand.u32 %v134, 4294901760
    %2541 = vmatpush.msra.mxu0 %v2540
    %v2542 = vand.u32 %v131, 4294901760
    %2543 = vmatpush.msra.mxu0 %v2542
    %v2544 = vand.u32 %v128, 4294901760
    %2545 = vmatpush.msra.mxu0 %v2544
    %v2546 = vand.u32 %v125, 4294901760
    %2547 = vmatpush.msra.mxu0 %v2546
    %v2548 = vand.u32 %v122, 4294901760
    %2549 = vmatpush.msra.mxu0 %v2548
    %v2550 = vand.u32 %v119, 4294901760
    %2551 = vmatpush.msra.mxu0 %v2550
    %v2552 = vand.u32 %v116, 4294901760
    %2553 = vmatpush.msra.mxu0 %v2552
    %v2554 = vand.u32 %v113, 4294901760
    %2555 = vmatpush.msra.mxu0 %v2554
    %v2556 = vand.u32 %v110, 4294901760
    %2557 = vmatpush.msra.mxu0 %v2556
    %v2558 = vand.u32 %v107, 4294901760
    %2559 = vmatpush.msra.mxu0 %v2558
    %v2560 = vand.u32 %v104, 4294901760
    %2561 = vmatpush.msra.mxu0 %v2560
    %v2562 = vand.u32 %v101, 4294901760
    %2563 = vmatpush.msra.mxu0 %v2562
    %v2564 = vand.u32 %v98, 4294901760
    %2565 = vmatpush.msra.mxu0 %v2564
    %v2566 = vand.u32 %v95, 4294901760
    %2567 = vmatpush.msra.mxu0 %v2566
    %v2568 = vand.u32 %v43, 4294901760
    %2569 = vmatmul.f32.gmra.mxu0 %v2568
    %v2570 = vpop.f32.mrf.mxu0
    %v2571 = vadd.f32 %v2534, %v2570
    %2572 = vdwg.mxu0
    %2573 = vmatpush.msra.mxu0 0.0
    %2574 = vmatpush.msra.mxu0 0.0
    %2575 = vmatpush.msra.mxu0 0.0
    %2576 = vmatpush.msra.mxu0 0.0
    %2577 = vmatpush.msra.mxu0 0.0
    %2578 = vmatpush.msra.mxu0 0.0
    %2579 = vmatpush.msra.mxu0 0.0
    %2580 = vmatpush.msra.mxu0 0.0
    %2581 = vmatpush.msra.mxu0 0.0
    %2582 = vmatpush.msra.mxu0 0.0
    %2583 = vmatpush.msra.mxu0 0.0
    %2584 = vmatpush.msra.mxu0 0.0
    %v2585 = vand.u32 %v152, 4294901760
    %2586 = vmatpush.msra.mxu0 %v2585
    %v2587 = vand.u32 %v149, 4294901760
    %2588 = vmatpush.msra.mxu0 %v2587
    %v2589 = vand.u32 %v146, 4294901760
    %2590 = vmatpush.msra.mxu0 %v2589
    %v2591 = vand.u32 %v143, 4294901760
    %2592 = vmatpush.msra.mxu0 %v2591
    %v2593 = vand.u32 %v155, 4294901760
    %v2594 = vsub.f32 %v155, %v2593
    %v2595 = vand.u32 %v2594, 4294901760
    %v2596 = vsub.f32 %v2594, %v2595
    %v2597 = vand.u32 %v2596, 4294901760
    %2598 = vmatmul.f32.gmra.mxu0 %v2597
    %v2599 = vpop.f32.mrf.mxu0
    %v2600 = vadd.f32 %v2571, %v2599
    %2601 = vdwg.mxu0
    %2602 = vmatpush.msra.mxu0 0.0
    %2603 = vmatpush.msra.mxu0 0.0
    %2604 = vmatpush.msra.mxu0 0.0
    %2605 = vmatpush.msra.mxu0 0.0
    %2606 = vmatpush.msra.mxu0 0.0
    %2607 = vmatpush.msra.mxu0 0.0
    %2608 = vmatpush.msra.mxu0 0.0
    %2609 = vmatpush.msra.mxu0 0.0
    %2610 = vmatpush.msra.mxu0 0.0
    %2611 = vmatpush.msra.mxu0 0.0
    %2612 = vmatpush.msra.mxu0 0.0
    %2613 = vmatpush.msra.mxu0 0.0
    %v2614 = vand.u32 %v152, 4294901760
    %v2615 = vsub.f32 %v152, %v2614
    %v2616 = vand.u32 %v2615, 4294901760
    %v2617 = vsub.f32 %v2615, %v2616
    %v2618 = vand.u32 %v2617, 4294901760
    %2619 = vmatpush.msra.mxu0 %v2618
    %v2620 = vand.u32 %v149, 4294901760
    %v2621 = vsub.f32 %v149, %v2620
    %v2622 = vand.u32 %v2621, 4294901760
    %v2623 = vsub.f32 %v2621, %v2622
    %v2624 = vand.u32 %v2623, 4294901760
    %2625 = vmatpush.msra.mxu0 %v2624
    %v2626 = vand.u32 %v146, 4294901760
    %v2627 = vsub.f32 %v146, %v2626
    %v2628 = vand.u32 %v2627, 4294901760
    %v2629 = vsub.f32 %v2627, %v2628
    %v2630 = vand.u32 %v2629, 4294901760
    %2631 = vmatpush.msra.mxu0 %v2630
    %v2632 = vand.u32 %v143, 4294901760
    %v2633 = vsub.f32 %v143, %v2632
    %v2634 = vand.u32 %v2633, 4294901760
    %v2635 = vsub.f32 %v2633, %v2634
    %v2636 = vand.u32 %v2635, 4294901760
    %2637 = vmatpush.msra.mxu0 %v2636
    %v2638 = vand.u32 %v155, 4294901760
    %2639 = vmatmul.f32.gmra.mxu0 %v2638
    %v2640 = vpop.f32.mrf.mxu0
    %v2641 = vadd.f32 %v2600, %v2640
    %2642 = vdwg.mxu0
    %2643 = vmatpush.msra.mxu0 0.0
    %2644 = vmatpush.msra.mxu0 0.0
    %2645 = vmatpush.msra.mxu0 0.0
    %2646 = vmatpush.msra.mxu0 0.0
    %2647 = vmatpush.msra.mxu0 0.0
    %2648 = vmatpush.msra.mxu0 0.0
    %2649 = vmatpush.msra.mxu0 0.0
    %2650 = vmatpush.msra.mxu0 0.0
    %2651 = vmatpush.msra.mxu0 0.0
    %2652 = vmatpush.msra.mxu0 0.0
    %2653 = vmatpush.msra.mxu0 0.0
    %2654 = vmatpush.msra.mxu0 0.0
    %v2655 = vand.u32 %v152, 4294901760
    %v2656 = vsub.f32 %v152, %v2655
    %2657 = vmatpush.msra.mxu0 %v2656
    %v2658 = vand.u32 %v149, 4294901760
    %v2659 = vsub.f32 %v149, %v2658
    %2660 = vmatpush.msra.mxu0 %v2659
    %v2661 = vand.u32 %v146, 4294901760
    %v2662 = vsub.f32 %v146, %v2661
    %2663 = vmatpush.msra.mxu0 %v2662
    %v2664 = vand.u32 %v143, 4294901760
    %v2665 = vsub.f32 %v143, %v2664
    %2666 = vmatpush.msra.mxu0 %v2665
    %v2667 = vand.u32 %v155, 4294901760
    %v2668 = vsub.f32 %v155, %v2667
    %2669 = vmatmul.f32.gmra.mxu0 %v2668
    %v2670 = vpop.f32.mrf.mxu0
    %v2671 = vadd.f32 %v2641, %v2670
    %2672 = vdwg.mxu0
    %2673 = vmatpush.msra.mxu0 0.0
    %2674 = vmatpush.msra.mxu0 0.0
    %2675 = vmatpush.msra.mxu0 0.0
    %2676 = vmatpush.msra.mxu0 0.0
    %2677 = vmatpush.msra.mxu0 0.0
    %2678 = vmatpush.msra.mxu0 0.0
    %2679 = vmatpush.msra.mxu0 0.0
    %2680 = vmatpush.msra.mxu0 0.0
    %2681 = vmatpush.msra.mxu0 0.0
    %2682 = vmatpush.msra.mxu0 0.0
    %2683 = vmatpush.msra.mxu0 0.0
    %2684 = vmatpush.msra.mxu0 0.0
    %v2685 = vand.u32 %v152, 4294901760
    %2686 = vmatpush.msra.mxu0 %v2685
    %v2687 = vand.u32 %v149, 4294901760
    %2688 = vmatpush.msra.mxu0 %v2687
    %v2689 = vand.u32 %v146, 4294901760
    %2690 = vmatpush.msra.mxu0 %v2689
    %v2691 = vand.u32 %v143, 4294901760
    %2692 = vmatpush.msra.mxu0 %v2691
    %v2693 = vand.u32 %v155, 4294901760
    %v2694 = vsub.f32 %v155, %v2693
    %v2695 = vand.u32 %v2694, 4294901760
    %2696 = vmatmul.f32.gmra.mxu0 %v2695
    %v2697 = vpop.f32.mrf.mxu0
    %v2698 = vadd.f32 %v2671, %v2697
    %2699 = vdwg.mxu0
    %2700 = vmatpush.msra.mxu0 0.0
    %2701 = vmatpush.msra.mxu0 0.0
    %2702 = vmatpush.msra.mxu0 0.0
    %2703 = vmatpush.msra.mxu0 0.0
    %2704 = vmatpush.msra.mxu0 0.0
    %2705 = vmatpush.msra.mxu0 0.0
    %2706 = vmatpush.msra.mxu0 0.0
    %2707 = vmatpush.msra.mxu0 0.0
    %2708 = vmatpush.msra.mxu0 0.0
    %2709 = vmatpush.msra.mxu0 0.0
    %2710 = vmatpush.msra.mxu0 0.0
    %2711 = vmatpush.msra.mxu0 0.0
    %v2712 = vand.u32 %v152, 4294901760
    %v2713 = vsub.f32 %v152, %v2712
    %v2714 = vand.u32 %v2713, 4294901760
    %2715 = vmatpush.msra.mxu0 %v2714
    %v2716 = vand.u32 %v149, 4294901760
    %v2717 = vsub.f32 %v149, %v2716
    %v2718 = vand.u32 %v2717, 4294901760
    %2719 = vmatpush.msra.mxu0 %v2718
    %v2720 = vand.u32 %v146, 4294901760
    %v2721 = vsub.f32 %v146, %v2720
    %v2722 = vand.u32 %v2721, 4294901760
    %2723 = vmatpush.msra.mxu0 %v2722
    %v2724 = vand.u32 %v143, 4294901760
    %v2725 = vsub.f32 %v143, %v2724
    %v2726 = vand.u32 %v2725, 4294901760
    %2727 = vmatpush.msra.mxu0 %v2726
    %v2728 = vand.u32 %v155, 4294901760
    %2729 = vmatmul.f32.gmra.mxu0 %v2728
    %v2730 = vpop.f32.mrf.mxu0
    %v2731 = vadd.f32 %v2698, %v2730
    %2732 = vdwg.mxu0
    %2733 = vmatpush.msra.mxu0 0.0
    %2734 = vmatpush.msra.mxu0 0.0
    %2735 = vmatpush.msra.mxu0 0.0
    %2736 = vmatpush.msra.mxu0 0.0
    %2737 = vmatpush.msra.mxu0 0.0
    %2738 = vmatpush.msra.mxu0 0.0
    %2739 = vmatpush.msra.mxu0 0.0
    %2740 = vmatpush.msra.mxu0 0.0
    %2741 = vmatpush.msra.mxu0 0.0
    %2742 = vmatpush.msra.mxu0 0.0
    %2743 = vmatpush.msra.mxu0 0.0
    %2744 = vmatpush.msra.mxu0 0.0
    %v2745 = vand.u32 %v152, 4294901760
    %2746 = vmatpush.msra.mxu0 %v2745
    %v2747 = vand.u32 %v149, 4294901760
    %2748 = vmatpush.msra.mxu0 %v2747
    %v2749 = vand.u32 %v146, 4294901760
    %2750 = vmatpush.msra.mxu0 %v2749
    %v2751 = vand.u32 %v143, 4294901760
    %2752 = vmatpush.msra.mxu0 %v2751
    %v2753 = vand.u32 %v155, 4294901760
    %2754 = vmatmul.f32.gmra.mxu0 %v2753
    %v2755 = vpop.f32.mrf.mxu0
    %v2756 = vadd.f32 %v2731, %v2755
    %2757 = vdwg.mxu0
    %v2758 = vmul.f32 %v42, %v1022
    %v2759 = vmul.f32 %v43, %v1889
    %v2760 = vmul.f32 %v44, %v2756
    %vm2761 = vcmp.gt.f32.partialorder %v2758, 0.0
    %vm2762 = vcmp.gt.f32.partialorder %v2759, 0.0
    %vm2763 = vcmp.gt.f32.partialorder %v2760, 0.0
    %v2764 = vmul.f32 %v2758, 0.01
    %v2765 = vmul.f32 %v2759, 0.01
    %v2766 = vmul.f32 %v2760, 0.01
    %v2767 = vsel %vm2761, %v2758, %v2764
    %v2768 = vsel %vm2762, %v2759, %v2765
    %v2769 = vsel %vm2763, %v2760, %v2766
    %v2771 = vsel %vm153, %v2769, 0
    %v2773 = vand.u32 %v90, 4294901760
    %2774 = vmatpush.msra.mxu0 %v2773
    %v2775 = vand.u32 %v87, 4294901760
    %2776 = vmatpush.msra.mxu0 %v2775
    %v2777 = vand.u32 %v84, 4294901760
    %2778 = vmatpush.msra.mxu0 %v2777
    %v2779 = vand.u32 %v81, 4294901760
    %2780 = vmatpush.msra.mxu0 %v2779
    %v2781 = vand.u32 %v78, 4294901760
    %2782 = vmatpush.msra.mxu0 %v2781
    %v2783 = vand.u32 %v75, 4294901760
    %2784 = vmatpush.msra.mxu0 %v2783
    %v2785 = vand.u32 %v72, 4294901760
    %2786 = vmatpush.msra.mxu0 %v2785
    %v2787 = vand.u32 %v69, 4294901760
    %2788 = vmatpush.msra.mxu0 %v2787
    %v2789 = vand.u32 %v66, 4294901760
    %2790 = vmatpush.msra.mxu0 %v2789
    %v2791 = vand.u32 %v63, 4294901760
    %2792 = vmatpush.msra.mxu0 %v2791
    %v2793 = vand.u32 %v60, 4294901760
    %2794 = vmatpush.msra.mxu0 %v2793
    %v2795 = vand.u32 %v57, 4294901760
    %2796 = vmatpush.msra.mxu0 %v2795
    %v2797 = vand.u32 %v54, 4294901760
    %2798 = vmatpush.msra.mxu0 %v2797
    %v2799 = vand.u32 %v51, 4294901760
    %2800 = vmatpush.msra.mxu0 %v2799
    %v2801 = vand.u32 %v48, 4294901760
    %2802 = vmatpush.msra.mxu0 %v2801
    %v2803 = vand.u32 %v45, 4294901760
    %2804 = vmatpush.msra.mxu0 %v2803
    %v2805 = vand.u32 %v2767, 4294901760
    %v2806 = vsub.f32 %v2767, %v2805
    %v2807 = vand.u32 %v2806, 4294901760
    %v2808 = vsub.f32 %v2806, %v2807
    %v2809 = vand.u32 %v2808, 4294901760
    %2810 = vmatmul.f32.gmra.mxu0 %v2809
    %v2811 = vpop.f32.mrf.mxu0
    %v2812 = vadd.f32 0.0, %v2811
    %2813 = vdwg.mxu0
    %v2814 = vand.u32 %v90, 4294901760
    %v2815 = vsub.f32 %v90, %v2814
    %v2816 = vand.u32 %v2815, 4294901760
    %v2817 = vsub.f32 %v2815, %v2816
    %v2818 = vand.u32 %v2817, 4294901760
    %2819 = vmatpush.msra.mxu0 %v2818
    %v2820 = vand.u32 %v87, 4294901760
    %v2821 = vsub.f32 %v87, %v2820
    %v2822 = vand.u32 %v2821, 4294901760
    %v2823 = vsub.f32 %v2821, %v2822
    %v2824 = vand.u32 %v2823, 4294901760
    %2825 = vmatpush.msra.mxu0 %v2824
    %v2826 = vand.u32 %v84, 4294901760
    %v2827 = vsub.f32 %v84, %v2826
    %v2828 = vand.u32 %v2827, 4294901760
    %v2829 = vsub.f32 %v2827, %v2828
    %v2830 = vand.u32 %v2829, 4294901760
    %2831 = vmatpush.msra.mxu0 %v2830
    %v2832 = vand.u32 %v81, 4294901760
    %v2833 = vsub.f32 %v81, %v2832
    %v2834 = vand.u32 %v2833, 4294901760
    %v2835 = vsub.f32 %v2833, %v2834
    %v2836 = vand.u32 %v2835, 4294901760
    %2837 = vmatpush.msra.mxu0 %v2836
    %v2838 = vand.u32 %v78, 4294901760
    %v2839 = vsub.f32 %v78, %v2838
    %v2840 = vand.u32 %v2839, 4294901760
    %v2841 = vsub.f32 %v2839, %v2840
    %v2842 = vand.u32 %v2841, 4294901760
    %2843 = vmatpush.msra.mxu0 %v2842
    %v2844 = vand.u32 %v75, 4294901760
    %v2845 = vsub.f32 %v75, %v2844
    %v2846 = vand.u32 %v2845, 4294901760
    %v2847 = vsub.f32 %v2845, %v2846
    %v2848 = vand.u32 %v2847, 4294901760
    %2849 = vmatpush.msra.mxu0 %v2848
    %v2850 = vand.u32 %v72, 4294901760
    %v2851 = vsub.f32 %v72, %v2850
    %v2852 = vand.u32 %v2851, 4294901760
    %v2853 = vsub.f32 %v2851, %v2852
    %v2854 = vand.u32 %v2853, 4294901760
    %2855 = vmatpush.msra.mxu0 %v2854
    %v2856 = vand.u32 %v69, 4294901760
    %v2857 = vsub.f32 %v69, %v2856
    %v2858 = vand.u32 %v2857, 4294901760
    %v2859 = vsub.f32 %v2857, %v2858
    %v2860 = vand.u32 %v2859, 4294901760
    %2861 = vmatpush.msra.mxu0 %v2860
    %v2862 = vand.u32 %v66, 4294901760
    %v2863 = vsub.f32 %v66, %v2862
    %v2864 = vand.u32 %v2863, 4294901760
    %v2865 = vsub.f32 %v2863, %v2864
    %v2866 = vand.u32 %v2865, 4294901760
    %2867 = vmatpush.msra.mxu0 %v2866
    %v2868 = vand.u32 %v63, 4294901760
    %v2869 = vsub.f32 %v63, %v2868
    %v2870 = vand.u32 %v2869, 4294901760
    %v2871 = vsub.f32 %v2869, %v2870
    %v2872 = vand.u32 %v2871, 4294901760
    %2873 = vmatpush.msra.mxu0 %v2872
    %v2874 = vand.u32 %v60, 4294901760
    %v2875 = vsub.f32 %v60, %v2874
    %v2876 = vand.u32 %v2875, 4294901760
    %v2877 = vsub.f32 %v2875, %v2876
    %v2878 = vand.u32 %v2877, 4294901760
    %2879 = vmatpush.msra.mxu0 %v2878
    %v2880 = vand.u32 %v57, 4294901760
    %v2881 = vsub.f32 %v57, %v2880
    %v2882 = vand.u32 %v2881, 4294901760
    %v2883 = vsub.f32 %v2881, %v2882
    %v2884 = vand.u32 %v2883, 4294901760
    %2885 = vmatpush.msra.mxu0 %v2884
    %v2886 = vand.u32 %v54, 4294901760
    %v2887 = vsub.f32 %v54, %v2886
    %v2888 = vand.u32 %v2887, 4294901760
    %v2889 = vsub.f32 %v2887, %v2888
    %v2890 = vand.u32 %v2889, 4294901760
    %2891 = vmatpush.msra.mxu0 %v2890
    %v2892 = vand.u32 %v51, 4294901760
    %v2893 = vsub.f32 %v51, %v2892
    %v2894 = vand.u32 %v2893, 4294901760
    %v2895 = vsub.f32 %v2893, %v2894
    %v2896 = vand.u32 %v2895, 4294901760
    %2897 = vmatpush.msra.mxu0 %v2896
    %v2898 = vand.u32 %v48, 4294901760
    %v2899 = vsub.f32 %v48, %v2898
    %v2900 = vand.u32 %v2899, 4294901760
    %v2901 = vsub.f32 %v2899, %v2900
    %v2902 = vand.u32 %v2901, 4294901760
    %2903 = vmatpush.msra.mxu0 %v2902
    %v2904 = vand.u32 %v45, 4294901760
    %v2905 = vsub.f32 %v45, %v2904
    %v2906 = vand.u32 %v2905, 4294901760
    %v2907 = vsub.f32 %v2905, %v2906
    %v2908 = vand.u32 %v2907, 4294901760
    %2909 = vmatpush.msra.mxu0 %v2908
    %v2910 = vand.u32 %v2767, 4294901760
    %2911 = vmatmul.f32.gmra.mxu0 %v2910
    %v2912 = vpop.f32.mrf.mxu0
    %v2913 = vadd.f32 %v2812, %v2912
    %2914 = vdwg.mxu0
    %v2915 = vand.u32 %v90, 4294901760
    %v2916 = vsub.f32 %v90, %v2915
    %2917 = vmatpush.msra.mxu0 %v2916
    %v2918 = vand.u32 %v87, 4294901760
    %v2919 = vsub.f32 %v87, %v2918
    %2920 = vmatpush.msra.mxu0 %v2919
    %v2921 = vand.u32 %v84, 4294901760
    %v2922 = vsub.f32 %v84, %v2921
    %2923 = vmatpush.msra.mxu0 %v2922
    %v2924 = vand.u32 %v81, 4294901760
    %v2925 = vsub.f32 %v81, %v2924
    %2926 = vmatpush.msra.mxu0 %v2925
    %v2927 = vand.u32 %v78, 4294901760
    %v2928 = vsub.f32 %v78, %v2927
    %2929 = vmatpush.msra.mxu0 %v2928
    %v2930 = vand.u32 %v75, 4294901760
    %v2931 = vsub.f32 %v75, %v2930
    %2932 = vmatpush.msra.mxu0 %v2931
    %v2933 = vand.u32 %v72, 4294901760
    %v2934 = vsub.f32 %v72, %v2933
    %2935 = vmatpush.msra.mxu0 %v2934
    %v2936 = vand.u32 %v69, 4294901760
    %v2937 = vsub.f32 %v69, %v2936
    %2938 = vmatpush.msra.mxu0 %v2937
    %v2939 = vand.u32 %v66, 4294901760
    %v2940 = vsub.f32 %v66, %v2939
    %2941 = vmatpush.msra.mxu0 %v2940
    %v2942 = vand.u32 %v63, 4294901760
    %v2943 = vsub.f32 %v63, %v2942
    %2944 = vmatpush.msra.mxu0 %v2943
    %v2945 = vand.u32 %v60, 4294901760
    %v2946 = vsub.f32 %v60, %v2945
    %2947 = vmatpush.msra.mxu0 %v2946
    %v2948 = vand.u32 %v57, 4294901760
    %v2949 = vsub.f32 %v57, %v2948
    %2950 = vmatpush.msra.mxu0 %v2949
    %v2951 = vand.u32 %v54, 4294901760
    %v2952 = vsub.f32 %v54, %v2951
    %2953 = vmatpush.msra.mxu0 %v2952
    %v2954 = vand.u32 %v51, 4294901760
    %v2955 = vsub.f32 %v51, %v2954
    %2956 = vmatpush.msra.mxu0 %v2955
    %v2957 = vand.u32 %v48, 4294901760
    %v2958 = vsub.f32 %v48, %v2957
    %2959 = vmatpush.msra.mxu0 %v2958
    %v2960 = vand.u32 %v45, 4294901760
    %v2961 = vsub.f32 %v45, %v2960
    %2962 = vmatpush.msra.mxu0 %v2961
    %v2963 = vand.u32 %v2767, 4294901760
    %v2964 = vsub.f32 %v2767, %v2963
    %2965 = vmatmul.f32.gmra.mxu0 %v2964
    %v2966 = vpop.f32.mrf.mxu0
    %v2967 = vadd.f32 %v2913, %v2966
    %2968 = vdwg.mxu0
    %v2969 = vand.u32 %v90, 4294901760
    %2970 = vmatpush.msra.mxu0 %v2969
    %v2971 = vand.u32 %v87, 4294901760
    %2972 = vmatpush.msra.mxu0 %v2971
    %v2973 = vand.u32 %v84, 4294901760
    %2974 = vmatpush.msra.mxu0 %v2973
    %v2975 = vand.u32 %v81, 4294901760
    %2976 = vmatpush.msra.mxu0 %v2975
    %v2977 = vand.u32 %v78, 4294901760
    %2978 = vmatpush.msra.mxu0 %v2977
    %v2979 = vand.u32 %v75, 4294901760
    %2980 = vmatpush.msra.mxu0 %v2979
    %v2981 = vand.u32 %v72, 4294901760
    %2982 = vmatpush.msra.mxu0 %v2981
    %v2983 = vand.u32 %v69, 4294901760
    %2984 = vmatpush.msra.mxu0 %v2983
    %v2985 = vand.u32 %v66, 4294901760
    %2986 = vmatpush.msra.mxu0 %v2985
    %v2987 = vand.u32 %v63, 4294901760
    %2988 = vmatpush.msra.mxu0 %v2987
    %v2989 = vand.u32 %v60, 4294901760
    %2990 = vmatpush.msra.mxu0 %v2989
    %v2991 = vand.u32 %v57, 4294901760
    %2992 = vmatpush.msra.mxu0 %v2991
    %v2993 = vand.u32 %v54, 4294901760
    %2994 = vmatpush.msra.mxu0 %v2993
    %v2995 = vand.u32 %v51, 4294901760
    %2996 = vmatpush.msra.mxu0 %v2995
    %v2997 = vand.u32 %v48, 4294901760
    %2998 = vmatpush.msra.mxu0 %v2997
    %v2999 = vand.u32 %v45, 4294901760
    %3000 = vmatpush.msra.mxu0 %v2999
    %v3001 = vand.u32 %v2767, 4294901760
    %v3002 = vsub.f32 %v2767, %v3001
    %v3003 = vand.u32 %v3002, 4294901760
    %3004 = vmatmul.f32.gmra.mxu0 %v3003
    %v3005 = vpop.f32.mrf.mxu0
    %v3006 = vadd.f32 %v2967, %v3005
    %3007 = vdwg.mxu0
    %v3008 = vand.u32 %v90, 4294901760
    %v3009 = vsub.f32 %v90, %v3008
    %v3010 = vand.u32 %v3009, 4294901760
    %3011 = vmatpush.msra.mxu0 %v3010
    %v3012 = vand.u32 %v87, 4294901760
    %v3013 = vsub.f32 %v87, %v3012
    %v3014 = vand.u32 %v3013, 4294901760
    %3015 = vmatpush.msra.mxu0 %v3014
    %v3016 = vand.u32 %v84, 4294901760
    %v3017 = vsub.f32 %v84, %v3016
    %v3018 = vand.u32 %v3017, 4294901760
    %3019 = vmatpush.msra.mxu0 %v3018
    %v3020 = vand.u32 %v81, 4294901760
    %v3021 = vsub.f32 %v81, %v3020
    %v3022 = vand.u32 %v3021, 4294901760
    %3023 = vmatpush.msra.mxu0 %v3022
    %v3024 = vand.u32 %v78, 4294901760
    %v3025 = vsub.f32 %v78, %v3024
    %v3026 = vand.u32 %v3025, 4294901760
    %3027 = vmatpush.msra.mxu0 %v3026
    %v3028 = vand.u32 %v75, 4294901760
    %v3029 = vsub.f32 %v75, %v3028
    %v3030 = vand.u32 %v3029, 4294901760
    %3031 = vmatpush.msra.mxu0 %v3030
    %v3032 = vand.u32 %v72, 4294901760
    %v3033 = vsub.f32 %v72, %v3032
    %v3034 = vand.u32 %v3033, 4294901760
    %3035 = vmatpush.msra.mxu0 %v3034
    %v3036 = vand.u32 %v69, 4294901760
    %v3037 = vsub.f32 %v69, %v3036
    %v3038 = vand.u32 %v3037, 4294901760
    %3039 = vmatpush.msra.mxu0 %v3038
    %v3040 = vand.u32 %v66, 4294901760
    %v3041 = vsub.f32 %v66, %v3040
    %v3042 = vand.u32 %v3041, 4294901760
    %3043 = vmatpush.msra.mxu0 %v3042
    %v3044 = vand.u32 %v63, 4294901760
    %v3045 = vsub.f32 %v63, %v3044
    %v3046 = vand.u32 %v3045, 4294901760
    %3047 = vmatpush.msra.mxu0 %v3046
    %v3048 = vand.u32 %v60, 4294901760
    %v3049 = vsub.f32 %v60, %v3048
    %v3050 = vand.u32 %v3049, 4294901760
    %3051 = vmatpush.msra.mxu0 %v3050
    %v3052 = vand.u32 %v57, 4294901760
    %v3053 = vsub.f32 %v57, %v3052
    %v3054 = vand.u32 %v3053, 4294901760
    %3055 = vmatpush.msra.mxu0 %v3054
    %v3056 = vand.u32 %v54, 4294901760
    %v3057 = vsub.f32 %v54, %v3056
    %v3058 = vand.u32 %v3057, 4294901760
    %3059 = vmatpush.msra.mxu0 %v3058
    %v3060 = vand.u32 %v51, 4294901760
    %v3061 = vsub.f32 %v51, %v3060
    %v3062 = vand.u32 %v3061, 4294901760
    %3063 = vmatpush.msra.mxu0 %v3062
    %v3064 = vand.u32 %v48, 4294901760
    %v3065 = vsub.f32 %v48, %v3064
    %v3066 = vand.u32 %v3065, 4294901760
    %3067 = vmatpush.msra.mxu0 %v3066
    %v3068 = vand.u32 %v45, 4294901760
    %v3069 = vsub.f32 %v45, %v3068
    %v3070 = vand.u32 %v3069, 4294901760
    %3071 = vmatpush.msra.mxu0 %v3070
    %v3072 = vand.u32 %v2767, 4294901760
    %3073 = vmatmul.f32.gmra.mxu0 %v3072
    %v3074 = vpop.f32.mrf.mxu0
    %v3075 = vadd.f32 %v3006, %v3074
    %3076 = vdwg.mxu0
    %v3077 = vand.u32 %v90, 4294901760
    %3078 = vmatpush.msra.mxu0 %v3077
    %v3079 = vand.u32 %v87, 4294901760
    %3080 = vmatpush.msra.mxu0 %v3079
    %v3081 = vand.u32 %v84, 4294901760
    %3082 = vmatpush.msra.mxu0 %v3081
    %v3083 = vand.u32 %v81, 4294901760
    %3084 = vmatpush.msra.mxu0 %v3083
    %v3085 = vand.u32 %v78, 4294901760
    %3086 = vmatpush.msra.mxu0 %v3085
    %v3087 = vand.u32 %v75, 4294901760
    %3088 = vmatpush.msra.mxu0 %v3087
    %v3089 = vand.u32 %v72, 4294901760
    %3090 = vmatpush.msra.mxu0 %v3089
    %v3091 = vand.u32 %v69, 4294901760
    %3092 = vmatpush.msra.mxu0 %v3091
    %v3093 = vand.u32 %v66, 4294901760
    %3094 = vmatpush.msra.mxu0 %v3093
    %v3095 = vand.u32 %v63, 4294901760
    %3096 = vmatpush.msra.mxu0 %v3095
    %v3097 = vand.u32 %v60, 4294901760
    %3098 = vmatpush.msra.mxu0 %v3097
    %v3099 = vand.u32 %v57, 4294901760
    %3100 = vmatpush.msra.mxu0 %v3099
    %v3101 = vand.u32 %v54, 4294901760
    %3102 = vmatpush.msra.mxu0 %v3101
    %v3103 = vand.u32 %v51, 4294901760
    %3104 = vmatpush.msra.mxu0 %v3103
    %v3105 = vand.u32 %v48, 4294901760
    %3106 = vmatpush.msra.mxu0 %v3105
    %v3107 = vand.u32 %v45, 4294901760
    %3108 = vmatpush.msra.mxu0 %v3107
    %v3109 = vand.u32 %v2767, 4294901760
    %3110 = vmatmul.f32.gmra.mxu0 %v3109
    %v3111 = vpop.f32.mrf.mxu0
    %v3112 = vadd.f32 %v3075, %v3111
    %3113 = vdwg.mxu0
    %v3114 = vand.u32 %v138, 4294901760
    %3115 = vmatpush.msra.mxu0 %v3114
    %v3116 = vand.u32 %v135, 4294901760
    %3117 = vmatpush.msra.mxu0 %v3116
    %v3118 = vand.u32 %v132, 4294901760
    %3119 = vmatpush.msra.mxu0 %v3118
    %v3120 = vand.u32 %v129, 4294901760
    %3121 = vmatpush.msra.mxu0 %v3120
    %v3122 = vand.u32 %v126, 4294901760
    %3123 = vmatpush.msra.mxu0 %v3122
    %v3124 = vand.u32 %v123, 4294901760
    %3125 = vmatpush.msra.mxu0 %v3124
    %v3126 = vand.u32 %v120, 4294901760
    %3127 = vmatpush.msra.mxu0 %v3126
    %v3128 = vand.u32 %v117, 4294901760
    %3129 = vmatpush.msra.mxu0 %v3128
    %v3130 = vand.u32 %v114, 4294901760
    %3131 = vmatpush.msra.mxu0 %v3130
    %v3132 = vand.u32 %v111, 4294901760
    %3133 = vmatpush.msra.mxu0 %v3132
    %v3134 = vand.u32 %v108, 4294901760
    %3135 = vmatpush.msra.mxu0 %v3134
    %v3136 = vand.u32 %v105, 4294901760
    %3137 = vmatpush.msra.mxu0 %v3136
    %v3138 = vand.u32 %v102, 4294901760
    %3139 = vmatpush.msra.mxu0 %v3138
    %v3140 = vand.u32 %v99, 4294901760
    %3141 = vmatpush.msra.mxu0 %v3140
    %v3142 = vand.u32 %v96, 4294901760
    %3143 = vmatpush.msra.mxu0 %v3142
    %v3144 = vand.u32 %v93, 4294901760
    %3145 = vmatpush.msra.mxu0 %v3144
    %v3146 = vand.u32 %v2768, 4294901760
    %v3147 = vsub.f32 %v2768, %v3146
    %v3148 = vand.u32 %v3147, 4294901760
    %v3149 = vsub.f32 %v3147, %v3148
    %v3150 = vand.u32 %v3149, 4294901760
    %3151 = vmatmul.f32.gmra.mxu0 %v3150
    %v3152 = vpop.f32.mrf.mxu0
    %v3153 = vadd.f32 %v3112, %v3152
    %3154 = vdwg.mxu0
    %v3155 = vand.u32 %v138, 4294901760
    %v3156 = vsub.f32 %v138, %v3155
    %v3157 = vand.u32 %v3156, 4294901760
    %v3158 = vsub.f32 %v3156, %v3157
    %v3159 = vand.u32 %v3158, 4294901760
    %3160 = vmatpush.msra.mxu0 %v3159
    %v3161 = vand.u32 %v135, 4294901760
    %v3162 = vsub.f32 %v135, %v3161
    %v3163 = vand.u32 %v3162, 4294901760
    %v3164 = vsub.f32 %v3162, %v3163
    %v3165 = vand.u32 %v3164, 4294901760
    %3166 = vmatpush.msra.mxu0 %v3165
    %v3167 = vand.u32 %v132, 4294901760
    %v3168 = vsub.f32 %v132, %v3167
    %v3169 = vand.u32 %v3168, 4294901760
    %v3170 = vsub.f32 %v3168, %v3169
    %v3171 = vand.u32 %v3170, 4294901760
    %3172 = vmatpush.msra.mxu0 %v3171
    %v3173 = vand.u32 %v129, 4294901760
    %v3174 = vsub.f32 %v129, %v3173
    %v3175 = vand.u32 %v3174, 4294901760
    %v3176 = vsub.f32 %v3174, %v3175
    %v3177 = vand.u32 %v3176, 4294901760
    %3178 = vmatpush.msra.mxu0 %v3177
    %v3179 = vand.u32 %v126, 4294901760
    %v3180 = vsub.f32 %v126, %v3179
    %v3181 = vand.u32 %v3180, 4294901760
    %v3182 = vsub.f32 %v3180, %v3181
    %v3183 = vand.u32 %v3182, 4294901760
    %3184 = vmatpush.msra.mxu0 %v3183
    %v3185 = vand.u32 %v123, 4294901760
    %v3186 = vsub.f32 %v123, %v3185
    %v3187 = vand.u32 %v3186, 4294901760
    %v3188 = vsub.f32 %v3186, %v3187
    %v3189 = vand.u32 %v3188, 4294901760
    %3190 = vmatpush.msra.mxu0 %v3189
    %v3191 = vand.u32 %v120, 4294901760
    %v3192 = vsub.f32 %v120, %v3191
    %v3193 = vand.u32 %v3192, 4294901760
    %v3194 = vsub.f32 %v3192, %v3193
    %v3195 = vand.u32 %v3194, 4294901760
    %3196 = vmatpush.msra.mxu0 %v3195
    %v3197 = vand.u32 %v117, 4294901760
    %v3198 = vsub.f32 %v117, %v3197
    %v3199 = vand.u32 %v3198, 4294901760
    %v3200 = vsub.f32 %v3198, %v3199
    %v3201 = vand.u32 %v3200, 4294901760
    %3202 = vmatpush.msra.mxu0 %v3201
    %v3203 = vand.u32 %v114, 4294901760
    %v3204 = vsub.f32 %v114, %v3203
    %v3205 = vand.u32 %v3204, 4294901760
    %v3206 = vsub.f32 %v3204, %v3205
    %v3207 = vand.u32 %v3206, 4294901760
    %3208 = vmatpush.msra.mxu0 %v3207
    %v3209 = vand.u32 %v111, 4294901760
    %v3210 = vsub.f32 %v111, %v3209
    %v3211 = vand.u32 %v3210, 4294901760
    %v3212 = vsub.f32 %v3210, %v3211
    %v3213 = vand.u32 %v3212, 4294901760
    %3214 = vmatpush.msra.mxu0 %v3213
    %v3215 = vand.u32 %v108, 4294901760
    %v3216 = vsub.f32 %v108, %v3215
    %v3217 = vand.u32 %v3216, 4294901760
    %v3218 = vsub.f32 %v3216, %v3217
    %v3219 = vand.u32 %v3218, 4294901760
    %3220 = vmatpush.msra.mxu0 %v3219
    %v3221 = vand.u32 %v105, 4294901760
    %v3222 = vsub.f32 %v105, %v3221
    %v3223 = vand.u32 %v3222, 4294901760
    %v3224 = vsub.f32 %v3222, %v3223
    %v3225 = vand.u32 %v3224, 4294901760
    %3226 = vmatpush.msra.mxu0 %v3225
    %v3227 = vand.u32 %v102, 4294901760
    %v3228 = vsub.f32 %v102, %v3227
    %v3229 = vand.u32 %v3228, 4294901760
    %v3230 = vsub.f32 %v3228, %v3229
    %v3231 = vand.u32 %v3230, 4294901760
    %3232 = vmatpush.msra.mxu0 %v3231
    %v3233 = vand.u32 %v99, 4294901760
    %v3234 = vsub.f32 %v99, %v3233
    %v3235 = vand.u32 %v3234, 4294901760
    %v3236 = vsub.f32 %v3234, %v3235
    %v3237 = vand.u32 %v3236, 4294901760
    %3238 = vmatpush.msra.mxu0 %v3237
    %v3239 = vand.u32 %v96, 4294901760
    %v3240 = vsub.f32 %v96, %v3239
    %v3241 = vand.u32 %v3240, 4294901760
    %v3242 = vsub.f32 %v3240, %v3241
    %v3243 = vand.u32 %v3242, 4294901760
    %3244 = vmatpush.msra.mxu0 %v3243
    %v3245 = vand.u32 %v93, 4294901760
    %v3246 = vsub.f32 %v93, %v3245
    %v3247 = vand.u32 %v3246, 4294901760
    %v3248 = vsub.f32 %v3246, %v3247
    %v3249 = vand.u32 %v3248, 4294901760
    %3250 = vmatpush.msra.mxu0 %v3249
    %v3251 = vand.u32 %v2768, 4294901760
    %3252 = vmatmul.f32.gmra.mxu0 %v3251
    %v3253 = vpop.f32.mrf.mxu0
    %v3254 = vadd.f32 %v3153, %v3253
    %3255 = vdwg.mxu0
    %v3256 = vand.u32 %v138, 4294901760
    %v3257 = vsub.f32 %v138, %v3256
    %3258 = vmatpush.msra.mxu0 %v3257
    %v3259 = vand.u32 %v135, 4294901760
    %v3260 = vsub.f32 %v135, %v3259
    %3261 = vmatpush.msra.mxu0 %v3260
    %v3262 = vand.u32 %v132, 4294901760
    %v3263 = vsub.f32 %v132, %v3262
    %3264 = vmatpush.msra.mxu0 %v3263
    %v3265 = vand.u32 %v129, 4294901760
    %v3266 = vsub.f32 %v129, %v3265
    %3267 = vmatpush.msra.mxu0 %v3266
    %v3268 = vand.u32 %v126, 4294901760
    %v3269 = vsub.f32 %v126, %v3268
    %3270 = vmatpush.msra.mxu0 %v3269
    %v3271 = vand.u32 %v123, 4294901760
    %v3272 = vsub.f32 %v123, %v3271
    %3273 = vmatpush.msra.mxu0 %v3272
    %v3274 = vand.u32 %v120, 4294901760
    %v3275 = vsub.f32 %v120, %v3274
    %3276 = vmatpush.msra.mxu0 %v3275
    %v3277 = vand.u32 %v117, 4294901760
    %v3278 = vsub.f32 %v117, %v3277
    %3279 = vmatpush.msra.mxu0 %v3278
    %v3280 = vand.u32 %v114, 4294901760
    %v3281 = vsub.f32 %v114, %v3280
    %3282 = vmatpush.msra.mxu0 %v3281
    %v3283 = vand.u32 %v111, 4294901760
    %v3284 = vsub.f32 %v111, %v3283
    %3285 = vmatpush.msra.mxu0 %v3284
    %v3286 = vand.u32 %v108, 4294901760
    %v3287 = vsub.f32 %v108, %v3286
    %3288 = vmatpush.msra.mxu0 %v3287
    %v3289 = vand.u32 %v105, 4294901760
    %v3290 = vsub.f32 %v105, %v3289
    %3291 = vmatpush.msra.mxu0 %v3290
    %v3292 = vand.u32 %v102, 4294901760
    %v3293 = vsub.f32 %v102, %v3292
    %3294 = vmatpush.msra.mxu0 %v3293
    %v3295 = vand.u32 %v99, 4294901760
    %v3296 = vsub.f32 %v99, %v3295
    %3297 = vmatpush.msra.mxu0 %v3296
    %v3298 = vand.u32 %v96, 4294901760
    %v3299 = vsub.f32 %v96, %v3298
    %3300 = vmatpush.msra.mxu0 %v3299
    %v3301 = vand.u32 %v93, 4294901760
    %v3302 = vsub.f32 %v93, %v3301
    %3303 = vmatpush.msra.mxu0 %v3302
    %v3304 = vand.u32 %v2768, 4294901760
    %v3305 = vsub.f32 %v2768, %v3304
    %3306 = vmatmul.f32.gmra.mxu0 %v3305
    %v3307 = vpop.f32.mrf.mxu0
    %v3308 = vadd.f32 %v3254, %v3307
    %3309 = vdwg.mxu0
    %v3310 = vand.u32 %v138, 4294901760
    %3311 = vmatpush.msra.mxu0 %v3310
    %v3312 = vand.u32 %v135, 4294901760
    %3313 = vmatpush.msra.mxu0 %v3312
    %v3314 = vand.u32 %v132, 4294901760
    %3315 = vmatpush.msra.mxu0 %v3314
    %v3316 = vand.u32 %v129, 4294901760
    %3317 = vmatpush.msra.mxu0 %v3316
    %v3318 = vand.u32 %v126, 4294901760
    %3319 = vmatpush.msra.mxu0 %v3318
    %v3320 = vand.u32 %v123, 4294901760
    %3321 = vmatpush.msra.mxu0 %v3320
    %v3322 = vand.u32 %v120, 4294901760
    %3323 = vmatpush.msra.mxu0 %v3322
    %v3324 = vand.u32 %v117, 4294901760
    %3325 = vmatpush.msra.mxu0 %v3324
    %v3326 = vand.u32 %v114, 4294901760
    %3327 = vmatpush.msra.mxu0 %v3326
    %v3328 = vand.u32 %v111, 4294901760
    %3329 = vmatpush.msra.mxu0 %v3328
    %v3330 = vand.u32 %v108, 4294901760
    %3331 = vmatpush.msra.mxu0 %v3330
    %v3332 = vand.u32 %v105, 4294901760
    %3333 = vmatpush.msra.mxu0 %v3332
    %v3334 = vand.u32 %v102, 4294901760
    %3335 = vmatpush.msra.mxu0 %v3334
    %v3336 = vand.u32 %v99, 4294901760
    %3337 = vmatpush.msra.mxu0 %v3336
    %v3338 = vand.u32 %v96, 4294901760
    %3339 = vmatpush.msra.mxu0 %v3338
    %v3340 = vand.u32 %v93, 4294901760
    %3341 = vmatpush.msra.mxu0 %v3340
    %v3342 = vand.u32 %v2768, 4294901760
    %v3343 = vsub.f32 %v2768, %v3342
    %v3344 = vand.u32 %v3343, 4294901760
    %3345 = vmatmul.f32.gmra.mxu0 %v3344
    %v3346 = vpop.f32.mrf.mxu0
    %v3347 = vadd.f32 %v3308, %v3346
    %3348 = vdwg.mxu0
    %v3349 = vand.u32 %v138, 4294901760
    %v3350 = vsub.f32 %v138, %v3349
    %v3351 = vand.u32 %v3350, 4294901760
    %3352 = vmatpush.msra.mxu0 %v3351
    %v3353 = vand.u32 %v135, 4294901760
    %v3354 = vsub.f32 %v135, %v3353
    %v3355 = vand.u32 %v3354, 4294901760
    %3356 = vmatpush.msra.mxu0 %v3355
    %v3357 = vand.u32 %v132, 4294901760
    %v3358 = vsub.f32 %v132, %v3357
    %v3359 = vand.u32 %v3358, 4294901760
    %3360 = vmatpush.msra.mxu0 %v3359
    %v3361 = vand.u32 %v129, 4294901760
    %v3362 = vsub.f32 %v129, %v3361
    %v3363 = vand.u32 %v3362, 4294901760
    %3364 = vmatpush.msra.mxu0 %v3363
    %v3365 = vand.u32 %v126, 4294901760
    %v3366 = vsub.f32 %v126, %v3365
    %v3367 = vand.u32 %v3366, 4294901760
    %3368 = vmatpush.msra.mxu0 %v3367
    %v3369 = vand.u32 %v123, 4294901760
    %v3370 = vsub.f32 %v123, %v3369
    %v3371 = vand.u32 %v3370, 4294901760
    %3372 = vmatpush.msra.mxu0 %v3371
    %v3373 = vand.u32 %v120, 4294901760
    %v3374 = vsub.f32 %v120, %v3373
    %v3375 = vand.u32 %v3374, 4294901760
    %3376 = vmatpush.msra.mxu0 %v3375
    %v3377 = vand.u32 %v117, 4294901760
    %v3378 = vsub.f32 %v117, %v3377
    %v3379 = vand.u32 %v3378, 4294901760
    %3380 = vmatpush.msra.mxu0 %v3379
    %v3381 = vand.u32 %v114, 4294901760
    %v3382 = vsub.f32 %v114, %v3381
    %v3383 = vand.u32 %v3382, 4294901760
    %3384 = vmatpush.msra.mxu0 %v3383
    %v3385 = vand.u32 %v111, 4294901760
    %v3386 = vsub.f32 %v111, %v3385
    %v3387 = vand.u32 %v3386, 4294901760
    %3388 = vmatpush.msra.mxu0 %v3387
    %v3389 = vand.u32 %v108, 4294901760
    %v3390 = vsub.f32 %v108, %v3389
    %v3391 = vand.u32 %v3390, 4294901760
    %3392 = vmatpush.msra.mxu0 %v3391
    %v3393 = vand.u32 %v105, 4294901760
    %v3394 = vsub.f32 %v105, %v3393
    %v3395 = vand.u32 %v3394, 4294901760
    %3396 = vmatpush.msra.mxu0 %v3395
    %v3397 = vand.u32 %v102, 4294901760
    %v3398 = vsub.f32 %v102, %v3397
    %v3399 = vand.u32 %v3398, 4294901760
    %3400 = vmatpush.msra.mxu0 %v3399
    %v3401 = vand.u32 %v99, 4294901760
    %v3402 = vsub.f32 %v99, %v3401
    %v3403 = vand.u32 %v3402, 4294901760
    %3404 = vmatpush.msra.mxu0 %v3403
    %v3405 = vand.u32 %v96, 4294901760
    %v3406 = vsub.f32 %v96, %v3405
    %v3407 = vand.u32 %v3406, 4294901760
    %3408 = vmatpush.msra.mxu0 %v3407
    %v3409 = vand.u32 %v93, 4294901760
    %v3410 = vsub.f32 %v93, %v3409
    %v3411 = vand.u32 %v3410, 4294901760
    %3412 = vmatpush.msra.mxu0 %v3411
    %v3413 = vand.u32 %v2768, 4294901760
    %3414 = vmatmul.f32.gmra.mxu0 %v3413
    %v3415 = vpop.f32.mrf.mxu0
    %v3416 = vadd.f32 %v3347, %v3415
    %3417 = vdwg.mxu0
    %v3418 = vand.u32 %v138, 4294901760
    %3419 = vmatpush.msra.mxu0 %v3418
    %v3420 = vand.u32 %v135, 4294901760
    %3421 = vmatpush.msra.mxu0 %v3420
    %v3422 = vand.u32 %v132, 4294901760
    %3423 = vmatpush.msra.mxu0 %v3422
    %v3424 = vand.u32 %v129, 4294901760
    %3425 = vmatpush.msra.mxu0 %v3424
    %v3426 = vand.u32 %v126, 4294901760
    %3427 = vmatpush.msra.mxu0 %v3426
    %v3428 = vand.u32 %v123, 4294901760
    %3429 = vmatpush.msra.mxu0 %v3428
    %v3430 = vand.u32 %v120, 4294901760
    %3431 = vmatpush.msra.mxu0 %v3430
    %v3432 = vand.u32 %v117, 4294901760
    %3433 = vmatpush.msra.mxu0 %v3432
    %v3434 = vand.u32 %v114, 4294901760
    %3435 = vmatpush.msra.mxu0 %v3434
    %v3436 = vand.u32 %v111, 4294901760
    %3437 = vmatpush.msra.mxu0 %v3436
    %v3438 = vand.u32 %v108, 4294901760
    %3439 = vmatpush.msra.mxu0 %v3438
    %v3440 = vand.u32 %v105, 4294901760
    %3441 = vmatpush.msra.mxu0 %v3440
    %v3442 = vand.u32 %v102, 4294901760
    %3443 = vmatpush.msra.mxu0 %v3442
    %v3444 = vand.u32 %v99, 4294901760
    %3445 = vmatpush.msra.mxu0 %v3444
    %v3446 = vand.u32 %v96, 4294901760
    %3447 = vmatpush.msra.mxu0 %v3446
    %v3448 = vand.u32 %v93, 4294901760
    %3449 = vmatpush.msra.mxu0 %v3448
    %v3450 = vand.u32 %v2768, 4294901760
    %3451 = vmatmul.f32.gmra.mxu0 %v3450
    %v3452 = vpop.f32.mrf.mxu0
    %v3453 = vadd.f32 %v3416, %v3452
    %3454 = vdwg.mxu0
    %3455 = vmatpush.msra.mxu0 0.0
    %3456 = vmatpush.msra.mxu0 0.0
    %3457 = vmatpush.msra.mxu0 0.0
    %3458 = vmatpush.msra.mxu0 0.0
    %3459 = vmatpush.msra.mxu0 0.0
    %3460 = vmatpush.msra.mxu0 0.0
    %3461 = vmatpush.msra.mxu0 0.0
    %3462 = vmatpush.msra.mxu0 0.0
    %3463 = vmatpush.msra.mxu0 0.0
    %3464 = vmatpush.msra.mxu0 0.0
    %3465 = vmatpush.msra.mxu0 0.0
    %3466 = vmatpush.msra.mxu0 0.0
    %v3467 = vand.u32 %v150, 4294901760
    %3468 = vmatpush.msra.mxu0 %v3467
    %v3469 = vand.u32 %v147, 4294901760
    %3470 = vmatpush.msra.mxu0 %v3469
    %v3471 = vand.u32 %v144, 4294901760
    %3472 = vmatpush.msra.mxu0 %v3471
    %v3473 = vand.u32 %v141, 4294901760
    %3474 = vmatpush.msra.mxu0 %v3473
    %v3475 = vand.u32 %v2771, 4294901760
    %v3476 = vsub.f32 %v2771, %v3475
    %v3477 = vand.u32 %v3476, 4294901760
    %v3478 = vsub.f32 %v3476, %v3477
    %v3479 = vand.u32 %v3478, 4294901760
    %3480 = vmatmul.f32.gmra.mxu0 %v3479
    %v3481 = vpop.f32.mrf.mxu0
    %v3482 = vadd.f32 %v3453, %v3481
    %3483 = vdwg.mxu0
    %3484 = vmatpush.msra.mxu0 0.0
    %3485 = vmatpush.msra.mxu0 0.0
    %3486 = vmatpush.msra.mxu0 0.0
    %3487 = vmatpush.msra.mxu0 0.0
    %3488 = vmatpush.msra.mxu0 0.0
    %3489 = vmatpush.msra.mxu0 0.0
    %3490 = vmatpush.msra.mxu0 0.0
    %3491 = vmatpush.msra.mxu0 0.0
    %3492 = vmatpush.msra.mxu0 0.0
    %3493 = vmatpush.msra.mxu0 0.0
    %3494 = vmatpush.msra.mxu0 0.0
    %3495 = vmatpush.msra.mxu0 0.0
    %v3496 = vand.u32 %v150, 4294901760
    %v3497 = vsub.f32 %v150, %v3496
    %v3498 = vand.u32 %v3497, 4294901760
    %v3499 = vsub.f32 %v3497, %v3498
    %v3500 = vand.u32 %v3499, 4294901760
    %3501 = vmatpush.msra.mxu0 %v3500
    %v3502 = vand.u32 %v147, 4294901760
    %v3503 = vsub.f32 %v147, %v3502
    %v3504 = vand.u32 %v3503, 4294901760
    %v3505 = vsub.f32 %v3503, %v3504
    %v3506 = vand.u32 %v3505, 4294901760
    %3507 = vmatpush.msra.mxu0 %v3506
    %v3508 = vand.u32 %v144, 4294901760
    %v3509 = vsub.f32 %v144, %v3508
    %v3510 = vand.u32 %v3509, 4294901760
    %v3511 = vsub.f32 %v3509, %v3510
    %v3512 = vand.u32 %v3511, 4294901760
    %3513 = vmatpush.msra.mxu0 %v3512
    %v3514 = vand.u32 %v141, 4294901760
    %v3515 = vsub.f32 %v141, %v3514
    %v3516 = vand.u32 %v3515, 4294901760
    %v3517 = vsub.f32 %v3515, %v3516
    %v3518 = vand.u32 %v3517, 4294901760
    %3519 = vmatpush.msra.mxu0 %v3518
    %v3520 = vand.u32 %v2771, 4294901760
    %3521 = vmatmul.f32.gmra.mxu0 %v3520
    %v3522 = vpop.f32.mrf.mxu0
    %v3523 = vadd.f32 %v3482, %v3522
    %3524 = vdwg.mxu0
    %3525 = vmatpush.msra.mxu0 0.0
    %3526 = vmatpush.msra.mxu0 0.0
    %3527 = vmatpush.msra.mxu0 0.0
    %3528 = vmatpush.msra.mxu0 0.0
    %3529 = vmatpush.msra.mxu0 0.0
    %3530 = vmatpush.msra.mxu0 0.0
    %3531 = vmatpush.msra.mxu0 0.0
    %3532 = vmatpush.msra.mxu0 0.0
    %3533 = vmatpush.msra.mxu0 0.0
    %3534 = vmatpush.msra.mxu0 0.0
    %3535 = vmatpush.msra.mxu0 0.0
    %3536 = vmatpush.msra.mxu0 0.0
    %v3537 = vand.u32 %v150, 4294901760
    %v3538 = vsub.f32 %v150, %v3537
    %3539 = vmatpush.msra.mxu0 %v3538
    %v3540 = vand.u32 %v147, 4294901760
    %v3541 = vsub.f32 %v147, %v3540
    %3542 = vmatpush.msra.mxu0 %v3541
    %v3543 = vand.u32 %v144, 4294901760
    %v3544 = vsub.f32 %v144, %v3543
    %3545 = vmatpush.msra.mxu0 %v3544
    %v3546 = vand.u32 %v141, 4294901760
    %v3547 = vsub.f32 %v141, %v3546
    %3548 = vmatpush.msra.mxu0 %v3547
    %v3549 = vand.u32 %v2771, 4294901760
    %v3550 = vsub.f32 %v2771, %v3549
    %3551 = vmatmul.f32.gmra.mxu0 %v3550
    %v3552 = vpop.f32.mrf.mxu0
    %v3553 = vadd.f32 %v3523, %v3552
    %3554 = vdwg.mxu0
    %3555 = vmatpush.msra.mxu0 0.0
    %3556 = vmatpush.msra.mxu0 0.0
    %3557 = vmatpush.msra.mxu0 0.0
    %3558 = vmatpush.msra.mxu0 0.0
    %3559 = vmatpush.msra.mxu0 0.0
    %3560 = vmatpush.msra.mxu0 0.0
    %3561 = vmatpush.msra.mxu0 0.0
    %3562 = vmatpush.msra.mxu0 0.0
    %3563 = vmatpush.msra.mxu0 0.0
    %3564 = vmatpush.msra.mxu0 0.0
    %3565 = vmatpush.msra.mxu0 0.0
    %3566 = vmatpush.msra.mxu0 0.0
    %v3567 = vand.u32 %v150, 4294901760
    %3568 = vmatpush.msra.mxu0 %v3567
    %v3569 = vand.u32 %v147, 4294901760
    %3570 = vmatpush.msra.mxu0 %v3569
    %v3571 = vand.u32 %v144, 4294901760
    %3572 = vmatpush.msra.mxu0 %v3571
    %v3573 = vand.u32 %v141, 4294901760
    %3574 = vmatpush.msra.mxu0 %v3573
    %v3575 = vand.u32 %v2771, 4294901760
    %v3576 = vsub.f32 %v2771, %v3575
    %v3577 = vand.u32 %v3576, 4294901760
    %3578 = vmatmul.f32.gmra.mxu0 %v3577
    %v3579 = vpop.f32.mrf.mxu0
    %v3580 = vadd.f32 %v3553, %v3579
    %3581 = vdwg.mxu0
    %3582 = vmatpush.msra.mxu0 0.0
    %3583 = vmatpush.msra.mxu0 0.0
    %3584 = vmatpush.msra.mxu0 0.0
    %3585 = vmatpush.msra.mxu0 0.0
    %3586 = vmatpush.msra.mxu0 0.0
    %3587 = vmatpush.msra.mxu0 0.0
    %3588 = vmatpush.msra.mxu0 0.0
    %3589 = vmatpush.msra.mxu0 0.0
    %3590 = vmatpush.msra.mxu0 0.0
    %3591 = vmatpush.msra.mxu0 0.0
    %3592 = vmatpush.msra.mxu0 0.0
    %3593 = vmatpush.msra.mxu0 0.0
    %v3594 = vand.u32 %v150, 4294901760
    %v3595 = vsub.f32 %v150, %v3594
    %v3596 = vand.u32 %v3595, 4294901760
    %3597 = vmatpush.msra.mxu0 %v3596
    %v3598 = vand.u32 %v147, 4294901760
    %v3599 = vsub.f32 %v147, %v3598
    %v3600 = vand.u32 %v3599, 4294901760
    %3601 = vmatpush.msra.mxu0 %v3600
    %v3602 = vand.u32 %v144, 4294901760
    %v3603 = vsub.f32 %v144, %v3602
    %v3604 = vand.u32 %v3603, 4294901760
    %3605 = vmatpush.msra.mxu0 %v3604
    %v3606 = vand.u32 %v141, 4294901760
    %v3607 = vsub.f32 %v141, %v3606
    %v3608 = vand.u32 %v3607, 4294901760
    %3609 = vmatpush.msra.mxu0 %v3608
    %v3610 = vand.u32 %v2771, 4294901760
    %3611 = vmatmul.f32.gmra.mxu0 %v3610
    %v3612 = vpop.f32.mrf.mxu0
    %v3613 = vadd.f32 %v3580, %v3612
    %3614 = vdwg.mxu0
    %3615 = vmatpush.msra.mxu0 0.0
    %3616 = vmatpush.msra.mxu0 0.0
    %3617 = vmatpush.msra.mxu0 0.0
    %3618 = vmatpush.msra.mxu0 0.0
    %3619 = vmatpush.msra.mxu0 0.0
    %3620 = vmatpush.msra.mxu0 0.0
    %3621 = vmatpush.msra.mxu0 0.0
    %3622 = vmatpush.msra.mxu0 0.0
    %3623 = vmatpush.msra.mxu0 0.0
    %3624 = vmatpush.msra.mxu0 0.0
    %3625 = vmatpush.msra.mxu0 0.0
    %3626 = vmatpush.msra.mxu0 0.0
    %v3627 = vand.u32 %v150, 4294901760
    %3628 = vmatpush.msra.mxu0 %v3627
    %v3629 = vand.u32 %v147, 4294901760
    %3630 = vmatpush.msra.mxu0 %v3629
    %v3631 = vand.u32 %v144, 4294901760
    %3632 = vmatpush.msra.mxu0 %v3631
    %v3633 = vand.u32 %v141, 4294901760
    %3634 = vmatpush.msra.mxu0 %v3633
    %v3635 = vand.u32 %v2771, 4294901760
    %3636 = vmatmul.f32.gmra.mxu0 %v3635
    %v3637 = vpop.f32.mrf.mxu0
    %v3638 = vadd.f32 %v3613, %v3637
    %3639 = vdwg.mxu0
    %v3640 = vand.u32 %v91, 4294901760
    %3641 = vmatpush.msra.mxu0 %v3640
    %v3642 = vand.u32 %v88, 4294901760
    %3643 = vmatpush.msra.mxu0 %v3642
    %v3644 = vand.u32 %v85, 4294901760
    %3645 = vmatpush.msra.mxu0 %v3644
    %v3646 = vand.u32 %v82, 4294901760
    %3647 = vmatpush.msra.mxu0 %v3646
    %v3648 = vand.u32 %v79, 4294901760
    %3649 = vmatpush.msra.mxu0 %v3648
    %v3650 = vand.u32 %v76, 4294901760
    %3651 = vmatpush.msra.mxu0 %v3650
    %v3652 = vand.u32 %v73, 4294901760
    %3653 = vmatpush.msra.mxu0 %v3652
    %v3654 = vand.u32 %v70, 4294901760
    %3655 = vmatpush.msra.mxu0 %v3654
    %v3656 = vand.u32 %v67, 4294901760
    %3657 = vmatpush.msra.mxu0 %v3656
    %v3658 = vand.u32 %v64, 4294901760
    %3659 = vmatpush.msra.mxu0 %v3658
    %v3660 = vand.u32 %v61, 4294901760
    %3661 = vmatpush.msra.mxu0 %v3660
    %v3662 = vand.u32 %v58, 4294901760
    %3663 = vmatpush.msra.mxu0 %v3662
    %v3664 = vand.u32 %v55, 4294901760
    %3665 = vmatpush.msra.mxu0 %v3664
    %v3666 = vand.u32 %v52, 4294901760
    %3667 = vmatpush.msra.mxu0 %v3666
    %v3668 = vand.u32 %v49, 4294901760
    %3669 = vmatpush.msra.mxu0 %v3668
    %v3670 = vand.u32 %v46, 4294901760
    %3671 = vmatpush.msra.mxu0 %v3670
    %v3672 = vand.u32 %v2767, 4294901760
    %v3673 = vsub.f32 %v2767, %v3672
    %v3674 = vand.u32 %v3673, 4294901760
    %v3675 = vsub.f32 %v3673, %v3674
    %v3676 = vand.u32 %v3675, 4294901760
    %3677 = vmatmul.f32.gmra.mxu0 %v3676
    %v3678 = vpop.f32.mrf.mxu0
    %v3679 = vadd.f32 0.0, %v3678
    %3680 = vdwg.mxu0
    %v3681 = vand.u32 %v91, 4294901760
    %v3682 = vsub.f32 %v91, %v3681
    %v3683 = vand.u32 %v3682, 4294901760
    %v3684 = vsub.f32 %v3682, %v3683
    %v3685 = vand.u32 %v3684, 4294901760
    %3686 = vmatpush.msra.mxu0 %v3685
    %v3687 = vand.u32 %v88, 4294901760
    %v3688 = vsub.f32 %v88, %v3687
    %v3689 = vand.u32 %v3688, 4294901760
    %v3690 = vsub.f32 %v3688, %v3689
    %v3691 = vand.u32 %v3690, 4294901760
    %3692 = vmatpush.msra.mxu0 %v3691
    %v3693 = vand.u32 %v85, 4294901760
    %v3694 = vsub.f32 %v85, %v3693
    %v3695 = vand.u32 %v3694, 4294901760
    %v3696 = vsub.f32 %v3694, %v3695
    %v3697 = vand.u32 %v3696, 4294901760
    %3698 = vmatpush.msra.mxu0 %v3697
    %v3699 = vand.u32 %v82, 4294901760
    %v3700 = vsub.f32 %v82, %v3699
    %v3701 = vand.u32 %v3700, 4294901760
    %v3702 = vsub.f32 %v3700, %v3701
    %v3703 = vand.u32 %v3702, 4294901760
    %3704 = vmatpush.msra.mxu0 %v3703
    %v3705 = vand.u32 %v79, 4294901760
    %v3706 = vsub.f32 %v79, %v3705
    %v3707 = vand.u32 %v3706, 4294901760
    %v3708 = vsub.f32 %v3706, %v3707
    %v3709 = vand.u32 %v3708, 4294901760
    %3710 = vmatpush.msra.mxu0 %v3709
    %v3711 = vand.u32 %v76, 4294901760
    %v3712 = vsub.f32 %v76, %v3711
    %v3713 = vand.u32 %v3712, 4294901760
    %v3714 = vsub.f32 %v3712, %v3713
    %v3715 = vand.u32 %v3714, 4294901760
    %3716 = vmatpush.msra.mxu0 %v3715
    %v3717 = vand.u32 %v73, 4294901760
    %v3718 = vsub.f32 %v73, %v3717
    %v3719 = vand.u32 %v3718, 4294901760
    %v3720 = vsub.f32 %v3718, %v3719
    %v3721 = vand.u32 %v3720, 4294901760
    %3722 = vmatpush.msra.mxu0 %v3721
    %v3723 = vand.u32 %v70, 4294901760
    %v3724 = vsub.f32 %v70, %v3723
    %v3725 = vand.u32 %v3724, 4294901760
    %v3726 = vsub.f32 %v3724, %v3725
    %v3727 = vand.u32 %v3726, 4294901760
    %3728 = vmatpush.msra.mxu0 %v3727
    %v3729 = vand.u32 %v67, 4294901760
    %v3730 = vsub.f32 %v67, %v3729
    %v3731 = vand.u32 %v3730, 4294901760
    %v3732 = vsub.f32 %v3730, %v3731
    %v3733 = vand.u32 %v3732, 4294901760
    %3734 = vmatpush.msra.mxu0 %v3733
    %v3735 = vand.u32 %v64, 4294901760
    %v3736 = vsub.f32 %v64, %v3735
    %v3737 = vand.u32 %v3736, 4294901760
    %v3738 = vsub.f32 %v3736, %v3737
    %v3739 = vand.u32 %v3738, 4294901760
    %3740 = vmatpush.msra.mxu0 %v3739
    %v3741 = vand.u32 %v61, 4294901760
    %v3742 = vsub.f32 %v61, %v3741
    %v3743 = vand.u32 %v3742, 4294901760
    %v3744 = vsub.f32 %v3742, %v3743
    %v3745 = vand.u32 %v3744, 4294901760
    %3746 = vmatpush.msra.mxu0 %v3745
    %v3747 = vand.u32 %v58, 4294901760
    %v3748 = vsub.f32 %v58, %v3747
    %v3749 = vand.u32 %v3748, 4294901760
    %v3750 = vsub.f32 %v3748, %v3749
    %v3751 = vand.u32 %v3750, 4294901760
    %3752 = vmatpush.msra.mxu0 %v3751
    %v3753 = vand.u32 %v55, 4294901760
    %v3754 = vsub.f32 %v55, %v3753
    %v3755 = vand.u32 %v3754, 4294901760
    %v3756 = vsub.f32 %v3754, %v3755
    %v3757 = vand.u32 %v3756, 4294901760
    %3758 = vmatpush.msra.mxu0 %v3757
    %v3759 = vand.u32 %v52, 4294901760
    %v3760 = vsub.f32 %v52, %v3759
    %v3761 = vand.u32 %v3760, 4294901760
    %v3762 = vsub.f32 %v3760, %v3761
    %v3763 = vand.u32 %v3762, 4294901760
    %3764 = vmatpush.msra.mxu0 %v3763
    %v3765 = vand.u32 %v49, 4294901760
    %v3766 = vsub.f32 %v49, %v3765
    %v3767 = vand.u32 %v3766, 4294901760
    %v3768 = vsub.f32 %v3766, %v3767
    %v3769 = vand.u32 %v3768, 4294901760
    %3770 = vmatpush.msra.mxu0 %v3769
    %v3771 = vand.u32 %v46, 4294901760
    %v3772 = vsub.f32 %v46, %v3771
    %v3773 = vand.u32 %v3772, 4294901760
    %v3774 = vsub.f32 %v3772, %v3773
    %v3775 = vand.u32 %v3774, 4294901760
    %3776 = vmatpush.msra.mxu0 %v3775
    %v3777 = vand.u32 %v2767, 4294901760
    %3778 = vmatmul.f32.gmra.mxu0 %v3777
    %v3779 = vpop.f32.mrf.mxu0
    %v3780 = vadd.f32 %v3679, %v3779
    %3781 = vdwg.mxu0
    %v3782 = vand.u32 %v91, 4294901760
    %v3783 = vsub.f32 %v91, %v3782
    %3784 = vmatpush.msra.mxu0 %v3783
    %v3785 = vand.u32 %v88, 4294901760
    %v3786 = vsub.f32 %v88, %v3785
    %3787 = vmatpush.msra.mxu0 %v3786
    %v3788 = vand.u32 %v85, 4294901760
    %v3789 = vsub.f32 %v85, %v3788
    %3790 = vmatpush.msra.mxu0 %v3789
    %v3791 = vand.u32 %v82, 4294901760
    %v3792 = vsub.f32 %v82, %v3791
    %3793 = vmatpush.msra.mxu0 %v3792
    %v3794 = vand.u32 %v79, 4294901760
    %v3795 = vsub.f32 %v79, %v3794
    %3796 = vmatpush.msra.mxu0 %v3795
    %v3797 = vand.u32 %v76, 4294901760
    %v3798 = vsub.f32 %v76, %v3797
    %3799 = vmatpush.msra.mxu0 %v3798
    %v3800 = vand.u32 %v73, 4294901760
    %v3801 = vsub.f32 %v73, %v3800
    %3802 = vmatpush.msra.mxu0 %v3801
    %v3803 = vand.u32 %v70, 4294901760
    %v3804 = vsub.f32 %v70, %v3803
    %3805 = vmatpush.msra.mxu0 %v3804
    %v3806 = vand.u32 %v67, 4294901760
    %v3807 = vsub.f32 %v67, %v3806
    %3808 = vmatpush.msra.mxu0 %v3807
    %v3809 = vand.u32 %v64, 4294901760
    %v3810 = vsub.f32 %v64, %v3809
    %3811 = vmatpush.msra.mxu0 %v3810
    %v3812 = vand.u32 %v61, 4294901760
    %v3813 = vsub.f32 %v61, %v3812
    %3814 = vmatpush.msra.mxu0 %v3813
    %v3815 = vand.u32 %v58, 4294901760
    %v3816 = vsub.f32 %v58, %v3815
    %3817 = vmatpush.msra.mxu0 %v3816
    %v3818 = vand.u32 %v55, 4294901760
    %v3819 = vsub.f32 %v55, %v3818
    %3820 = vmatpush.msra.mxu0 %v3819
    %v3821 = vand.u32 %v52, 4294901760
    %v3822 = vsub.f32 %v52, %v3821
    %3823 = vmatpush.msra.mxu0 %v3822
    %v3824 = vand.u32 %v49, 4294901760
    %v3825 = vsub.f32 %v49, %v3824
    %3826 = vmatpush.msra.mxu0 %v3825
    %v3827 = vand.u32 %v46, 4294901760
    %v3828 = vsub.f32 %v46, %v3827
    %3829 = vmatpush.msra.mxu0 %v3828
    %v3830 = vand.u32 %v2767, 4294901760
    %v3831 = vsub.f32 %v2767, %v3830
    %3832 = vmatmul.f32.gmra.mxu0 %v3831
    %v3833 = vpop.f32.mrf.mxu0
    %v3834 = vadd.f32 %v3780, %v3833
    %3835 = vdwg.mxu0
    %v3836 = vand.u32 %v91, 4294901760
    %3837 = vmatpush.msra.mxu0 %v3836
    %v3838 = vand.u32 %v88, 4294901760
    %3839 = vmatpush.msra.mxu0 %v3838
    %v3840 = vand.u32 %v85, 4294901760
    %3841 = vmatpush.msra.mxu0 %v3840
    %v3842 = vand.u32 %v82, 4294901760
    %3843 = vmatpush.msra.mxu0 %v3842
    %v3844 = vand.u32 %v79, 4294901760
    %3845 = vmatpush.msra.mxu0 %v3844
    %v3846 = vand.u32 %v76, 4294901760
    %3847 = vmatpush.msra.mxu0 %v3846
    %v3848 = vand.u32 %v73, 4294901760
    %3849 = vmatpush.msra.mxu0 %v3848
    %v3850 = vand.u32 %v70, 4294901760
    %3851 = vmatpush.msra.mxu0 %v3850
    %v3852 = vand.u32 %v67, 4294901760
    %3853 = vmatpush.msra.mxu0 %v3852
    %v3854 = vand.u32 %v64, 4294901760
    %3855 = vmatpush.msra.mxu0 %v3854
    %v3856 = vand.u32 %v61, 4294901760
    %3857 = vmatpush.msra.mxu0 %v3856
    %v3858 = vand.u32 %v58, 4294901760
    %3859 = vmatpush.msra.mxu0 %v3858
    %v3860 = vand.u32 %v55, 4294901760
    %3861 = vmatpush.msra.mxu0 %v3860
    %v3862 = vand.u32 %v52, 4294901760
    %3863 = vmatpush.msra.mxu0 %v3862
    %v3864 = vand.u32 %v49, 4294901760
    %3865 = vmatpush.msra.mxu0 %v3864
    %v3866 = vand.u32 %v46, 4294901760
    %3867 = vmatpush.msra.mxu0 %v3866
    %v3868 = vand.u32 %v2767, 4294901760
    %v3869 = vsub.f32 %v2767, %v3868
    %v3870 = vand.u32 %v3869, 4294901760
    %3871 = vmatmul.f32.gmra.mxu0 %v3870
    %v3872 = vpop.f32.mrf.mxu0
    %v3873 = vadd.f32 %v3834, %v3872
    %3874 = vdwg.mxu0
    %v3875 = vand.u32 %v91, 4294901760
    %v3876 = vsub.f32 %v91, %v3875
    %v3877 = vand.u32 %v3876, 4294901760
    %3878 = vmatpush.msra.mxu0 %v3877
    %v3879 = vand.u32 %v88, 4294901760
    %v3880 = vsub.f32 %v88, %v3879
    %v3881 = vand.u32 %v3880, 4294901760
    %3882 = vmatpush.msra.mxu0 %v3881
    %v3883 = vand.u32 %v85, 4294901760
    %v3884 = vsub.f32 %v85, %v3883
    %v3885 = vand.u32 %v3884, 4294901760
    %3886 = vmatpush.msra.mxu0 %v3885
    %v3887 = vand.u32 %v82, 4294901760
    %v3888 = vsub.f32 %v82, %v3887
    %v3889 = vand.u32 %v3888, 4294901760
    %3890 = vmatpush.msra.mxu0 %v3889
    %v3891 = vand.u32 %v79, 4294901760
    %v3892 = vsub.f32 %v79, %v3891
    %v3893 = vand.u32 %v3892, 4294901760
    %3894 = vmatpush.msra.mxu0 %v3893
    %v3895 = vand.u32 %v76, 4294901760
    %v3896 = vsub.f32 %v76, %v3895
    %v3897 = vand.u32 %v3896, 4294901760
    %3898 = vmatpush.msra.mxu0 %v3897
    %v3899 = vand.u32 %v73, 4294901760
    %v3900 = vsub.f32 %v73, %v3899
    %v3901 = vand.u32 %v3900, 4294901760
    %3902 = vmatpush.msra.mxu0 %v3901
    %v3903 = vand.u32 %v70, 4294901760
    %v3904 = vsub.f32 %v70, %v3903
    %v3905 = vand.u32 %v3904, 4294901760
    %3906 = vmatpush.msra.mxu0 %v3905
    %v3907 = vand.u32 %v67, 4294901760
    %v3908 = vsub.f32 %v67, %v3907
    %v3909 = vand.u32 %v3908, 4294901760
    %3910 = vmatpush.msra.mxu0 %v3909
    %v3911 = vand.u32 %v64, 4294901760
    %v3912 = vsub.f32 %v64, %v3911
    %v3913 = vand.u32 %v3912, 4294901760
    %3914 = vmatpush.msra.mxu0 %v3913
    %v3915 = vand.u32 %v61, 4294901760
    %v3916 = vsub.f32 %v61, %v3915
    %v3917 = vand.u32 %v3916, 4294901760
    %3918 = vmatpush.msra.mxu0 %v3917
    %v3919 = vand.u32 %v58, 4294901760
    %v3920 = vsub.f32 %v58, %v3919
    %v3921 = vand.u32 %v3920, 4294901760
    %3922 = vmatpush.msra.mxu0 %v3921
    %v3923 = vand.u32 %v55, 4294901760
    %v3924 = vsub.f32 %v55, %v3923
    %v3925 = vand.u32 %v3924, 4294901760
    %3926 = vmatpush.msra.mxu0 %v3925
    %v3927 = vand.u32 %v52, 4294901760
    %v3928 = vsub.f32 %v52, %v3927
    %v3929 = vand.u32 %v3928, 4294901760
    %3930 = vmatpush.msra.mxu0 %v3929
    %v3931 = vand.u32 %v49, 4294901760
    %v3932 = vsub.f32 %v49, %v3931
    %v3933 = vand.u32 %v3932, 4294901760
    %3934 = vmatpush.msra.mxu0 %v3933
    %v3935 = vand.u32 %v46, 4294901760
    %v3936 = vsub.f32 %v46, %v3935
    %v3937 = vand.u32 %v3936, 4294901760
    %3938 = vmatpush.msra.mxu0 %v3937
    %v3939 = vand.u32 %v2767, 4294901760
    %3940 = vmatmul.f32.gmra.mxu0 %v3939
    %v3941 = vpop.f32.mrf.mxu0
    %v3942 = vadd.f32 %v3873, %v3941
    %3943 = vdwg.mxu0
    %v3944 = vand.u32 %v91, 4294901760
    %3945 = vmatpush.msra.mxu0 %v3944
    %v3946 = vand.u32 %v88, 4294901760
    %3947 = vmatpush.msra.mxu0 %v3946
    %v3948 = vand.u32 %v85, 4294901760
    %3949 = vmatpush.msra.mxu0 %v3948
    %v3950 = vand.u32 %v82, 4294901760
    %3951 = vmatpush.msra.mxu0 %v3950
    %v3952 = vand.u32 %v79, 4294901760
    %3953 = vmatpush.msra.mxu0 %v3952
    %v3954 = vand.u32 %v76, 4294901760
    %3955 = vmatpush.msra.mxu0 %v3954
    %v3956 = vand.u32 %v73, 4294901760
    %3957 = vmatpush.msra.mxu0 %v3956
    %v3958 = vand.u32 %v70, 4294901760
    %3959 = vmatpush.msra.mxu0 %v3958
    %v3960 = vand.u32 %v67, 4294901760
    %3961 = vmatpush.msra.mxu0 %v3960
    %v3962 = vand.u32 %v64, 4294901760
    %3963 = vmatpush.msra.mxu0 %v3962
    %v3964 = vand.u32 %v61, 4294901760
    %3965 = vmatpush.msra.mxu0 %v3964
    %v3966 = vand.u32 %v58, 4294901760
    %3967 = vmatpush.msra.mxu0 %v3966
    %v3968 = vand.u32 %v55, 4294901760
    %3969 = vmatpush.msra.mxu0 %v3968
    %v3970 = vand.u32 %v52, 4294901760
    %3971 = vmatpush.msra.mxu0 %v3970
    %v3972 = vand.u32 %v49, 4294901760
    %3973 = vmatpush.msra.mxu0 %v3972
    %v3974 = vand.u32 %v46, 4294901760
    %3975 = vmatpush.msra.mxu0 %v3974
    %v3976 = vand.u32 %v2767, 4294901760
    %3977 = vmatmul.f32.gmra.mxu0 %v3976
    %v3978 = vpop.f32.mrf.mxu0
    %v3979 = vadd.f32 %v3942, %v3978
    %3980 = vdwg.mxu0
    %v3981 = vand.u32 %v139, 4294901760
    %3982 = vmatpush.msra.mxu0 %v3981
    %v3983 = vand.u32 %v136, 4294901760
    %3984 = vmatpush.msra.mxu0 %v3983
    %v3985 = vand.u32 %v133, 4294901760
    %3986 = vmatpush.msra.mxu0 %v3985
    %v3987 = vand.u32 %v130, 4294901760
    %3988 = vmatpush.msra.mxu0 %v3987
    %v3989 = vand.u32 %v127, 4294901760
    %3990 = vmatpush.msra.mxu0 %v3989
    %v3991 = vand.u32 %v124, 4294901760
    %3992 = vmatpush.msra.mxu0 %v3991
    %v3993 = vand.u32 %v121, 4294901760
    %3994 = vmatpush.msra.mxu0 %v3993
    %v3995 = vand.u32 %v118, 4294901760
    %3996 = vmatpush.msra.mxu0 %v3995
    %v3997 = vand.u32 %v115, 4294901760
    %3998 = vmatpush.msra.mxu0 %v3997
    %v3999 = vand.u32 %v112, 4294901760
    %4000 = vmatpush.msra.mxu0 %v3999
    %v4001 = vand.u32 %v109, 4294901760
    %4002 = vmatpush.msra.mxu0 %v4001
    %v4003 = vand.u32 %v106, 4294901760
    %4004 = vmatpush.msra.mxu0 %v4003
    %v4005 = vand.u32 %v103, 4294901760
    %4006 = vmatpush.msra.mxu0 %v4005
    %v4007 = vand.u32 %v100, 4294901760
    %4008 = vmatpush.msra.mxu0 %v4007
    %v4009 = vand.u32 %v97, 4294901760
    %4010 = vmatpush.msra.mxu0 %v4009
    %v4011 = vand.u32 %v94, 4294901760
    %4012 = vmatpush.msra.mxu0 %v4011
    %v4013 = vand.u32 %v2768, 4294901760
    %v4014 = vsub.f32 %v2768, %v4013
    %v4015 = vand.u32 %v4014, 4294901760
    %v4016 = vsub.f32 %v4014, %v4015
    %v4017 = vand.u32 %v4016, 4294901760
    %4018 = vmatmul.f32.gmra.mxu0 %v4017
    %v4019 = vpop.f32.mrf.mxu0
    %v4020 = vadd.f32 %v3979, %v4019
    %4021 = vdwg.mxu0
    %v4022 = vand.u32 %v139, 4294901760
    %v4023 = vsub.f32 %v139, %v4022
    %v4024 = vand.u32 %v4023, 4294901760
    %v4025 = vsub.f32 %v4023, %v4024
    %v4026 = vand.u32 %v4025, 4294901760
    %4027 = vmatpush.msra.mxu0 %v4026
    %v4028 = vand.u32 %v136, 4294901760
    %v4029 = vsub.f32 %v136, %v4028
    %v4030 = vand.u32 %v4029, 4294901760
    %v4031 = vsub.f32 %v4029, %v4030
    %v4032 = vand.u32 %v4031, 4294901760
    %4033 = vmatpush.msra.mxu0 %v4032
    %v4034 = vand.u32 %v133, 4294901760
    %v4035 = vsub.f32 %v133, %v4034
    %v4036 = vand.u32 %v4035, 4294901760
    %v4037 = vsub.f32 %v4035, %v4036
    %v4038 = vand.u32 %v4037, 4294901760
    %4039 = vmatpush.msra.mxu0 %v4038
    %v4040 = vand.u32 %v130, 4294901760
    %v4041 = vsub.f32 %v130, %v4040
    %v4042 = vand.u32 %v4041, 4294901760
    %v4043 = vsub.f32 %v4041, %v4042
    %v4044 = vand.u32 %v4043, 4294901760
    %4045 = vmatpush.msra.mxu0 %v4044
    %v4046 = vand.u32 %v127, 4294901760
    %v4047 = vsub.f32 %v127, %v4046
    %v4048 = vand.u32 %v4047, 4294901760
    %v4049 = vsub.f32 %v4047, %v4048
    %v4050 = vand.u32 %v4049, 4294901760
    %4051 = vmatpush.msra.mxu0 %v4050
    %v4052 = vand.u32 %v124, 4294901760
    %v4053 = vsub.f32 %v124, %v4052
    %v4054 = vand.u32 %v4053, 4294901760
    %v4055 = vsub.f32 %v4053, %v4054
    %v4056 = vand.u32 %v4055, 4294901760
    %4057 = vmatpush.msra.mxu0 %v4056
    %v4058 = vand.u32 %v121, 4294901760
    %v4059 = vsub.f32 %v121, %v4058
    %v4060 = vand.u32 %v4059, 4294901760
    %v4061 = vsub.f32 %v4059, %v4060
    %v4062 = vand.u32 %v4061, 4294901760
    %4063 = vmatpush.msra.mxu0 %v4062
    %v4064 = vand.u32 %v118, 4294901760
    %v4065 = vsub.f32 %v118, %v4064
    %v4066 = vand.u32 %v4065, 4294901760
    %v4067 = vsub.f32 %v4065, %v4066
    %v4068 = vand.u32 %v4067, 4294901760
    %4069 = vmatpush.msra.mxu0 %v4068
    %v4070 = vand.u32 %v115, 4294901760
    %v4071 = vsub.f32 %v115, %v4070
    %v4072 = vand.u32 %v4071, 4294901760
    %v4073 = vsub.f32 %v4071, %v4072
    %v4074 = vand.u32 %v4073, 4294901760
    %4075 = vmatpush.msra.mxu0 %v4074
    %v4076 = vand.u32 %v112, 4294901760
    %v4077 = vsub.f32 %v112, %v4076
    %v4078 = vand.u32 %v4077, 4294901760
    %v4079 = vsub.f32 %v4077, %v4078
    %v4080 = vand.u32 %v4079, 4294901760
    %4081 = vmatpush.msra.mxu0 %v4080
    %v4082 = vand.u32 %v109, 4294901760
    %v4083 = vsub.f32 %v109, %v4082
    %v4084 = vand.u32 %v4083, 4294901760
    %v4085 = vsub.f32 %v4083, %v4084
    %v4086 = vand.u32 %v4085, 4294901760
    %4087 = vmatpush.msra.mxu0 %v4086
    %v4088 = vand.u32 %v106, 4294901760
    %v4089 = vsub.f32 %v106, %v4088
    %v4090 = vand.u32 %v4089, 4294901760
    %v4091 = vsub.f32 %v4089, %v4090
    %v4092 = vand.u32 %v4091, 4294901760
    %4093 = vmatpush.msra.mxu0 %v4092
    %v4094 = vand.u32 %v103, 4294901760
    %v4095 = vsub.f32 %v103, %v4094
    %v4096 = vand.u32 %v4095, 4294901760
    %v4097 = vsub.f32 %v4095, %v4096
    %v4098 = vand.u32 %v4097, 4294901760
    %4099 = vmatpush.msra.mxu0 %v4098
    %v4100 = vand.u32 %v100, 4294901760
    %v4101 = vsub.f32 %v100, %v4100
    %v4102 = vand.u32 %v4101, 4294901760
    %v4103 = vsub.f32 %v4101, %v4102
    %v4104 = vand.u32 %v4103, 4294901760
    %4105 = vmatpush.msra.mxu0 %v4104
    %v4106 = vand.u32 %v97, 4294901760
    %v4107 = vsub.f32 %v97, %v4106
    %v4108 = vand.u32 %v4107, 4294901760
    %v4109 = vsub.f32 %v4107, %v4108
    %v4110 = vand.u32 %v4109, 4294901760
    %4111 = vmatpush.msra.mxu0 %v4110
    %v4112 = vand.u32 %v94, 4294901760
    %v4113 = vsub.f32 %v94, %v4112
    %v4114 = vand.u32 %v4113, 4294901760
    %v4115 = vsub.f32 %v4113, %v4114
    %v4116 = vand.u32 %v4115, 4294901760
    %4117 = vmatpush.msra.mxu0 %v4116
    %v4118 = vand.u32 %v2768, 4294901760
    %4119 = vmatmul.f32.gmra.mxu0 %v4118
    %v4120 = vpop.f32.mrf.mxu0
    %v4121 = vadd.f32 %v4020, %v4120
    %4122 = vdwg.mxu0
    %v4123 = vand.u32 %v139, 4294901760
    %v4124 = vsub.f32 %v139, %v4123
    %4125 = vmatpush.msra.mxu0 %v4124
    %v4126 = vand.u32 %v136, 4294901760
    %v4127 = vsub.f32 %v136, %v4126
    %4128 = vmatpush.msra.mxu0 %v4127
    %v4129 = vand.u32 %v133, 4294901760
    %v4130 = vsub.f32 %v133, %v4129
    %4131 = vmatpush.msra.mxu0 %v4130
    %v4132 = vand.u32 %v130, 4294901760
    %v4133 = vsub.f32 %v130, %v4132
    %4134 = vmatpush.msra.mxu0 %v4133
    %v4135 = vand.u32 %v127, 4294901760
    %v4136 = vsub.f32 %v127, %v4135
    %4137 = vmatpush.msra.mxu0 %v4136
    %v4138 = vand.u32 %v124, 4294901760
    %v4139 = vsub.f32 %v124, %v4138
    %4140 = vmatpush.msra.mxu0 %v4139
    %v4141 = vand.u32 %v121, 4294901760
    %v4142 = vsub.f32 %v121, %v4141
    %4143 = vmatpush.msra.mxu0 %v4142
    %v4144 = vand.u32 %v118, 4294901760
    %v4145 = vsub.f32 %v118, %v4144
    %4146 = vmatpush.msra.mxu0 %v4145
    %v4147 = vand.u32 %v115, 4294901760
    %v4148 = vsub.f32 %v115, %v4147
    %4149 = vmatpush.msra.mxu0 %v4148
    %v4150 = vand.u32 %v112, 4294901760
    %v4151 = vsub.f32 %v112, %v4150
    %4152 = vmatpush.msra.mxu0 %v4151
    %v4153 = vand.u32 %v109, 4294901760
    %v4154 = vsub.f32 %v109, %v4153
    %4155 = vmatpush.msra.mxu0 %v4154
    %v4156 = vand.u32 %v106, 4294901760
    %v4157 = vsub.f32 %v106, %v4156
    %4158 = vmatpush.msra.mxu0 %v4157
    %v4159 = vand.u32 %v103, 4294901760
    %v4160 = vsub.f32 %v103, %v4159
    %4161 = vmatpush.msra.mxu0 %v4160
    %v4162 = vand.u32 %v100, 4294901760
    %v4163 = vsub.f32 %v100, %v4162
    %4164 = vmatpush.msra.mxu0 %v4163
    %v4165 = vand.u32 %v97, 4294901760
    %v4166 = vsub.f32 %v97, %v4165
    %4167 = vmatpush.msra.mxu0 %v4166
    %v4168 = vand.u32 %v94, 4294901760
    %v4169 = vsub.f32 %v94, %v4168
    %4170 = vmatpush.msra.mxu0 %v4169
    %v4171 = vand.u32 %v2768, 4294901760
    %v4172 = vsub.f32 %v2768, %v4171
    %4173 = vmatmul.f32.gmra.mxu0 %v4172
    %v4174 = vpop.f32.mrf.mxu0
    %v4175 = vadd.f32 %v4121, %v4174
    %4176 = vdwg.mxu0
    %v4177 = vand.u32 %v139, 4294901760
    %4178 = vmatpush.msra.mxu0 %v4177
    %v4179 = vand.u32 %v136, 4294901760
    %4180 = vmatpush.msra.mxu0 %v4179
    %v4181 = vand.u32 %v133, 4294901760
    %4182 = vmatpush.msra.mxu0 %v4181
    %v4183 = vand.u32 %v130, 4294901760
    %4184 = vmatpush.msra.mxu0 %v4183
    %v4185 = vand.u32 %v127, 4294901760
    %4186 = vmatpush.msra.mxu0 %v4185
    %v4187 = vand.u32 %v124, 4294901760
    %4188 = vmatpush.msra.mxu0 %v4187
    %v4189 = vand.u32 %v121, 4294901760
    %4190 = vmatpush.msra.mxu0 %v4189
    %v4191 = vand.u32 %v118, 4294901760
    %4192 = vmatpush.msra.mxu0 %v4191
    %v4193 = vand.u32 %v115, 4294901760
    %4194 = vmatpush.msra.mxu0 %v4193
    %v4195 = vand.u32 %v112, 4294901760
    %4196 = vmatpush.msra.mxu0 %v4195
    %v4197 = vand.u32 %v109, 4294901760
    %4198 = vmatpush.msra.mxu0 %v4197
    %v4199 = vand.u32 %v106, 4294901760
    %4200 = vmatpush.msra.mxu0 %v4199
    %v4201 = vand.u32 %v103, 4294901760
    %4202 = vmatpush.msra.mxu0 %v4201
    %v4203 = vand.u32 %v100, 4294901760
    %4204 = vmatpush.msra.mxu0 %v4203
    %v4205 = vand.u32 %v97, 4294901760
    %4206 = vmatpush.msra.mxu0 %v4205
    %v4207 = vand.u32 %v94, 4294901760
    %4208 = vmatpush.msra.mxu0 %v4207
    %v4209 = vand.u32 %v2768, 4294901760
    %v4210 = vsub.f32 %v2768, %v4209
    %v4211 = vand.u32 %v4210, 4294901760
    %4212 = vmatmul.f32.gmra.mxu0 %v4211
    %v4213 = vpop.f32.mrf.mxu0
    %v4214 = vadd.f32 %v4175, %v4213
    %4215 = vdwg.mxu0
    %v4216 = vand.u32 %v139, 4294901760
    %v4217 = vsub.f32 %v139, %v4216
    %v4218 = vand.u32 %v4217, 4294901760
    %4219 = vmatpush.msra.mxu0 %v4218
    %v4220 = vand.u32 %v136, 4294901760
    %v4221 = vsub.f32 %v136, %v4220
    %v4222 = vand.u32 %v4221, 4294901760
    %4223 = vmatpush.msra.mxu0 %v4222
    %v4224 = vand.u32 %v133, 4294901760
    %v4225 = vsub.f32 %v133, %v4224
    %v4226 = vand.u32 %v4225, 4294901760
    %4227 = vmatpush.msra.mxu0 %v4226
    %v4228 = vand.u32 %v130, 4294901760
    %v4229 = vsub.f32 %v130, %v4228
    %v4230 = vand.u32 %v4229, 4294901760
    %4231 = vmatpush.msra.mxu0 %v4230
    %v4232 = vand.u32 %v127, 4294901760
    %v4233 = vsub.f32 %v127, %v4232
    %v4234 = vand.u32 %v4233, 4294901760
    %4235 = vmatpush.msra.mxu0 %v4234
    %v4236 = vand.u32 %v124, 4294901760
    %v4237 = vsub.f32 %v124, %v4236
    %v4238 = vand.u32 %v4237, 4294901760
    %4239 = vmatpush.msra.mxu0 %v4238
    %v4240 = vand.u32 %v121, 4294901760
    %v4241 = vsub.f32 %v121, %v4240
    %v4242 = vand.u32 %v4241, 4294901760
    %4243 = vmatpush.msra.mxu0 %v4242
    %v4244 = vand.u32 %v118, 4294901760
    %v4245 = vsub.f32 %v118, %v4244
    %v4246 = vand.u32 %v4245, 4294901760
    %4247 = vmatpush.msra.mxu0 %v4246
    %v4248 = vand.u32 %v115, 4294901760
    %v4249 = vsub.f32 %v115, %v4248
    %v4250 = vand.u32 %v4249, 4294901760
    %4251 = vmatpush.msra.mxu0 %v4250
    %v4252 = vand.u32 %v112, 4294901760
    %v4253 = vsub.f32 %v112, %v4252
    %v4254 = vand.u32 %v4253, 4294901760
    %4255 = vmatpush.msra.mxu0 %v4254
    %v4256 = vand.u32 %v109, 4294901760
    %v4257 = vsub.f32 %v109, %v4256
    %v4258 = vand.u32 %v4257, 4294901760
    %4259 = vmatpush.msra.mxu0 %v4258
    %v4260 = vand.u32 %v106, 4294901760
    %v4261 = vsub.f32 %v106, %v4260
    %v4262 = vand.u32 %v4261, 4294901760
    %4263 = vmatpush.msra.mxu0 %v4262
    %v4264 = vand.u32 %v103, 4294901760
    %v4265 = vsub.f32 %v103, %v4264
    %v4266 = vand.u32 %v4265, 4294901760
    %4267 = vmatpush.msra.mxu0 %v4266
    %v4268 = vand.u32 %v100, 4294901760
    %v4269 = vsub.f32 %v100, %v4268
    %v4270 = vand.u32 %v4269, 4294901760
    %4271 = vmatpush.msra.mxu0 %v4270
    %v4272 = vand.u32 %v97, 4294901760
    %v4273 = vsub.f32 %v97, %v4272
    %v4274 = vand.u32 %v4273, 4294901760
    %4275 = vmatpush.msra.mxu0 %v4274
    %v4276 = vand.u32 %v94, 4294901760
    %v4277 = vsub.f32 %v94, %v4276
    %v4278 = vand.u32 %v4277, 4294901760
    %4279 = vmatpush.msra.mxu0 %v4278
    %v4280 = vand.u32 %v2768, 4294901760
    %4281 = vmatmul.f32.gmra.mxu0 %v4280
    %v4282 = vpop.f32.mrf.mxu0
    %v4283 = vadd.f32 %v4214, %v4282
    %4284 = vdwg.mxu0
    %v4285 = vand.u32 %v139, 4294901760
    %4286 = vmatpush.msra.mxu0 %v4285
    %v4287 = vand.u32 %v136, 4294901760
    %4288 = vmatpush.msra.mxu0 %v4287
    %v4289 = vand.u32 %v133, 4294901760
    %4290 = vmatpush.msra.mxu0 %v4289
    %v4291 = vand.u32 %v130, 4294901760
    %4292 = vmatpush.msra.mxu0 %v4291
    %v4293 = vand.u32 %v127, 4294901760
    %4294 = vmatpush.msra.mxu0 %v4293
    %v4295 = vand.u32 %v124, 4294901760
    %4296 = vmatpush.msra.mxu0 %v4295
    %v4297 = vand.u32 %v121, 4294901760
    %4298 = vmatpush.msra.mxu0 %v4297
    %v4299 = vand.u32 %v118, 4294901760
    %4300 = vmatpush.msra.mxu0 %v4299
    %v4301 = vand.u32 %v115, 4294901760
    %4302 = vmatpush.msra.mxu0 %v4301
    %v4303 = vand.u32 %v112, 4294901760
    %4304 = vmatpush.msra.mxu0 %v4303
    %v4305 = vand.u32 %v109, 4294901760
    %4306 = vmatpush.msra.mxu0 %v4305
    %v4307 = vand.u32 %v106, 4294901760
    %4308 = vmatpush.msra.mxu0 %v4307
    %v4309 = vand.u32 %v103, 4294901760
    %4310 = vmatpush.msra.mxu0 %v4309
    %v4311 = vand.u32 %v100, 4294901760
    %4312 = vmatpush.msra.mxu0 %v4311
    %v4313 = vand.u32 %v97, 4294901760
    %4314 = vmatpush.msra.mxu0 %v4313
    %v4315 = vand.u32 %v94, 4294901760
    %4316 = vmatpush.msra.mxu0 %v4315
    %v4317 = vand.u32 %v2768, 4294901760
    %4318 = vmatmul.f32.gmra.mxu0 %v4317
    %v4319 = vpop.f32.mrf.mxu0
    %v4320 = vadd.f32 %v4283, %v4319
    %4321 = vdwg.mxu0
    %4322 = vmatpush.msra.mxu0 0.0
    %4323 = vmatpush.msra.mxu0 0.0
    %4324 = vmatpush.msra.mxu0 0.0
    %4325 = vmatpush.msra.mxu0 0.0
    %4326 = vmatpush.msra.mxu0 0.0
    %4327 = vmatpush.msra.mxu0 0.0
    %4328 = vmatpush.msra.mxu0 0.0
    %4329 = vmatpush.msra.mxu0 0.0
    %4330 = vmatpush.msra.mxu0 0.0
    %4331 = vmatpush.msra.mxu0 0.0
    %4332 = vmatpush.msra.mxu0 0.0
    %4333 = vmatpush.msra.mxu0 0.0
    %v4334 = vand.u32 %v151, 4294901760
    %4335 = vmatpush.msra.mxu0 %v4334
    %v4336 = vand.u32 %v148, 4294901760
    %4337 = vmatpush.msra.mxu0 %v4336
    %v4338 = vand.u32 %v145, 4294901760
    %4339 = vmatpush.msra.mxu0 %v4338
    %v4340 = vand.u32 %v142, 4294901760
    %4341 = vmatpush.msra.mxu0 %v4340
    %v4342 = vand.u32 %v2771, 4294901760
    %v4343 = vsub.f32 %v2771, %v4342
    %v4344 = vand.u32 %v4343, 4294901760
    %v4345 = vsub.f32 %v4343, %v4344
    %v4346 = vand.u32 %v4345, 4294901760
    %4347 = vmatmul.f32.gmra.mxu0 %v4346
    %v4348 = vpop.f32.mrf.mxu0
    %v4349 = vadd.f32 %v4320, %v4348
    %4350 = vdwg.mxu0
    %4351 = vmatpush.msra.mxu0 0.0
    %4352 = vmatpush.msra.mxu0 0.0
    %4353 = vmatpush.msra.mxu0 0.0
    %4354 = vmatpush.msra.mxu0 0.0
    %4355 = vmatpush.msra.mxu0 0.0
    %4356 = vmatpush.msra.mxu0 0.0
    %4357 = vmatpush.msra.mxu0 0.0
    %4358 = vmatpush.msra.mxu0 0.0
    %4359 = vmatpush.msra.mxu0 0.0
    %4360 = vmatpush.msra.mxu0 0.0
    %4361 = vmatpush.msra.mxu0 0.0
    %4362 = vmatpush.msra.mxu0 0.0
    %v4363 = vand.u32 %v151, 4294901760
    %v4364 = vsub.f32 %v151, %v4363
    %v4365 = vand.u32 %v4364, 4294901760
    %v4366 = vsub.f32 %v4364, %v4365
    %v4367 = vand.u32 %v4366, 4294901760
    %4368 = vmatpush.msra.mxu0 %v4367
    %v4369 = vand.u32 %v148, 4294901760
    %v4370 = vsub.f32 %v148, %v4369
    %v4371 = vand.u32 %v4370, 4294901760
    %v4372 = vsub.f32 %v4370, %v4371
    %v4373 = vand.u32 %v4372, 4294901760
    %4374 = vmatpush.msra.mxu0 %v4373
    %v4375 = vand.u32 %v145, 4294901760
    %v4376 = vsub.f32 %v145, %v4375
    %v4377 = vand.u32 %v4376, 4294901760
    %v4378 = vsub.f32 %v4376, %v4377
    %v4379 = vand.u32 %v4378, 4294901760
    %4380 = vmatpush.msra.mxu0 %v4379
    %v4381 = vand.u32 %v142, 4294901760
    %v4382 = vsub.f32 %v142, %v4381
    %v4383 = vand.u32 %v4382, 4294901760
    %v4384 = vsub.f32 %v4382, %v4383
    %v4385 = vand.u32 %v4384, 4294901760
    %4386 = vmatpush.msra.mxu0 %v4385
    %v4387 = vand.u32 %v2771, 4294901760
    %4388 = vmatmul.f32.gmra.mxu0 %v4387
    %v4389 = vpop.f32.mrf.mxu0
    %v4390 = vadd.f32 %v4349, %v4389
    %4391 = vdwg.mxu0
    %4392 = vmatpush.msra.mxu0 0.0
    %4393 = vmatpush.msra.mxu0 0.0
    %4394 = vmatpush.msra.mxu0 0.0
    %4395 = vmatpush.msra.mxu0 0.0
    %4396 = vmatpush.msra.mxu0 0.0
    %4397 = vmatpush.msra.mxu0 0.0
    %4398 = vmatpush.msra.mxu0 0.0
    %4399 = vmatpush.msra.mxu0 0.0
    %4400 = vmatpush.msra.mxu0 0.0
    %4401 = vmatpush.msra.mxu0 0.0
    %4402 = vmatpush.msra.mxu0 0.0
    %4403 = vmatpush.msra.mxu0 0.0
    %v4404 = vand.u32 %v151, 4294901760
    %v4405 = vsub.f32 %v151, %v4404
    %4406 = vmatpush.msra.mxu0 %v4405
    %v4407 = vand.u32 %v148, 4294901760
    %v4408 = vsub.f32 %v148, %v4407
    %4409 = vmatpush.msra.mxu0 %v4408
    %v4410 = vand.u32 %v145, 4294901760
    %v4411 = vsub.f32 %v145, %v4410
    %4412 = vmatpush.msra.mxu0 %v4411
    %v4413 = vand.u32 %v142, 4294901760
    %v4414 = vsub.f32 %v142, %v4413
    %4415 = vmatpush.msra.mxu0 %v4414
    %v4416 = vand.u32 %v2771, 4294901760
    %v4417 = vsub.f32 %v2771, %v4416
    %4418 = vmatmul.f32.gmra.mxu0 %v4417
    %v4419 = vpop.f32.mrf.mxu0
    %v4420 = vadd.f32 %v4390, %v4419
    %4421 = vdwg.mxu0
    %4422 = vmatpush.msra.mxu0 0.0
    %4423 = vmatpush.msra.mxu0 0.0
    %4424 = vmatpush.msra.mxu0 0.0
    %4425 = vmatpush.msra.mxu0 0.0
    %4426 = vmatpush.msra.mxu0 0.0
    %4427 = vmatpush.msra.mxu0 0.0
    %4428 = vmatpush.msra.mxu0 0.0
    %4429 = vmatpush.msra.mxu0 0.0
    %4430 = vmatpush.msra.mxu0 0.0
    %4431 = vmatpush.msra.mxu0 0.0
    %4432 = vmatpush.msra.mxu0 0.0
    %4433 = vmatpush.msra.mxu0 0.0
    %v4434 = vand.u32 %v151, 4294901760
    %4435 = vmatpush.msra.mxu0 %v4434
    %v4436 = vand.u32 %v148, 4294901760
    %4437 = vmatpush.msra.mxu0 %v4436
    %v4438 = vand.u32 %v145, 4294901760
    %4439 = vmatpush.msra.mxu0 %v4438
    %v4440 = vand.u32 %v142, 4294901760
    %4441 = vmatpush.msra.mxu0 %v4440
    %v4442 = vand.u32 %v2771, 4294901760
    %v4443 = vsub.f32 %v2771, %v4442
    %v4444 = vand.u32 %v4443, 4294901760
    %4445 = vmatmul.f32.gmra.mxu0 %v4444
    %v4446 = vpop.f32.mrf.mxu0
    %v4447 = vadd.f32 %v4420, %v4446
    %4448 = vdwg.mxu0
    %4449 = vmatpush.msra.mxu0 0.0
    %4450 = vmatpush.msra.mxu0 0.0
    %4451 = vmatpush.msra.mxu0 0.0
    %4452 = vmatpush.msra.mxu0 0.0
    %4453 = vmatpush.msra.mxu0 0.0
    %4454 = vmatpush.msra.mxu0 0.0
    %4455 = vmatpush.msra.mxu0 0.0
    %4456 = vmatpush.msra.mxu0 0.0
    %4457 = vmatpush.msra.mxu0 0.0
    %4458 = vmatpush.msra.mxu0 0.0
    %4459 = vmatpush.msra.mxu0 0.0
    %4460 = vmatpush.msra.mxu0 0.0
    %v4461 = vand.u32 %v151, 4294901760
    %v4462 = vsub.f32 %v151, %v4461
    %v4463 = vand.u32 %v4462, 4294901760
    %4464 = vmatpush.msra.mxu0 %v4463
    %v4465 = vand.u32 %v148, 4294901760
    %v4466 = vsub.f32 %v148, %v4465
    %v4467 = vand.u32 %v4466, 4294901760
    %4468 = vmatpush.msra.mxu0 %v4467
    %v4469 = vand.u32 %v145, 4294901760
    %v4470 = vsub.f32 %v145, %v4469
    %v4471 = vand.u32 %v4470, 4294901760
    %4472 = vmatpush.msra.mxu0 %v4471
    %v4473 = vand.u32 %v142, 4294901760
    %v4474 = vsub.f32 %v142, %v4473
    %v4475 = vand.u32 %v4474, 4294901760
    %4476 = vmatpush.msra.mxu0 %v4475
    %v4477 = vand.u32 %v2771, 4294901760
    %4478 = vmatmul.f32.gmra.mxu0 %v4477
    %v4479 = vpop.f32.mrf.mxu0
    %v4480 = vadd.f32 %v4447, %v4479
    %4481 = vdwg.mxu0
    %4482 = vmatpush.msra.mxu0 0.0
    %4483 = vmatpush.msra.mxu0 0.0
    %4484 = vmatpush.msra.mxu0 0.0
    %4485 = vmatpush.msra.mxu0 0.0
    %4486 = vmatpush.msra.mxu0 0.0
    %4487 = vmatpush.msra.mxu0 0.0
    %4488 = vmatpush.msra.mxu0 0.0
    %4489 = vmatpush.msra.mxu0 0.0
    %4490 = vmatpush.msra.mxu0 0.0
    %4491 = vmatpush.msra.mxu0 0.0
    %4492 = vmatpush.msra.mxu0 0.0
    %4493 = vmatpush.msra.mxu0 0.0
    %v4494 = vand.u32 %v151, 4294901760
    %4495 = vmatpush.msra.mxu0 %v4494
    %v4496 = vand.u32 %v148, 4294901760
    %4497 = vmatpush.msra.mxu0 %v4496
    %v4498 = vand.u32 %v145, 4294901760
    %4499 = vmatpush.msra.mxu0 %v4498
    %v4500 = vand.u32 %v142, 4294901760
    %4501 = vmatpush.msra.mxu0 %v4500
    %v4502 = vand.u32 %v2771, 4294901760
    %4503 = vmatmul.f32.gmra.mxu0 %v4502
    %v4504 = vpop.f32.mrf.mxu0
    %v4505 = vadd.f32 %v4480, %v4504
    %4506 = vdwg.mxu0
    %4509 = vrot.lane.b32.xlu0 %v3638, 32
    %v4510 = vpop.permute.xlu0 %4509
    %4511 = vrot.lane.b32.xlu0 %v4505, 32
    %v4512 = vpop.permute.xlu0 %4511
    %v4513 = vsel %vm153, %v4510, %v4512
    %v4517 = vmul.f32 %v2767, %v4510
    %v4518 = vmul.f32 %v2768, %v4513
    %v4519 = vmul.f32 %v2769, %v4512
    %vm4520 = vcmp.gt.f32.partialorder %v4517, 0.0
    %vm4521 = vcmp.gt.f32.partialorder %v4518, 0.0
    %vm4522 = vcmp.gt.f32.partialorder %v4519, 0.0
    %v4523 = vmul.f32 %v4517, 0.01
    %v4524 = vmul.f32 %v4518, 0.01
    %v4525 = vmul.f32 %v4519, 0.01
    %v4526 = vsel %vm4520, %v4517, %v4523
    %v4527 = vsel %vm4521, %v4518, %v4524
    %v4528 = vsel %vm4522, %v4519, %v4525
    %4532 = vrot.lane.b32.xlu0 %v4526, 96
    %v4533 = vpop.permute.xlu0 %4532
    %4534 = vrot.lane.b32.xlu0 %v4527, 96
    %v4535 = vpop.permute.xlu0 %4534
    %4536 = vrot.lane.b32.xlu0 %v4528, 96
    %v4537 = vpop.permute.xlu0 %4536
    %vm4538 = vcmask 785408
    %v4539 = vsel %vm4538, %v4533, %v4535
    %v4540 = vsel %vm4538, %v4535, %v4537
    %4543 = vst [vmem:[#allocation7] sm:$0xff] %v4539
    %4544 = vst [vmem:[#allocation7 + $0x8] sm:$0xff] %v4540
    // Predicated region
    $region18: #{tpu_custom_call.1} parent=1 // pred_check
      _
    $region19: #{tpu_custom_call.1} parent=1 // pred_check_branch
      %4546 = sbr.rel (0) target = $region21
    $region20: #{tpu_custom_call.1} parent=1 // pred_region
      %4548 = vsyncadd [#allocation4], 0
      %s4550 = sshll.u32 [#allocation7], 4
      %s4551 = int_to_ptr.vmem [resolvable:$true] %s4550
      %s4552 = sshll.u32 %s2, 4
      %s4553 = int_to_ptr.hbm [resolvable:$true] %s4552
      %4555 = dma.vmem_to_hbm [thread:$0]  %s4551, 256, %s4553, [#allocation4]
    $region21: #{tpu_custom_call.1} parent=1 // pred_fallthru
      _
    // Predicated region
    $region22: #{tpu_custom_call.1} parent=1 // pred_check
      _
    $region23: #{tpu_custom_call.1} parent=1 // pred_check_branch
      %4557 = sbr.rel (0) target = $region25
    $region24: #{tpu_custom_call.1} parent=1 // pred_region
      %4559 = dma.done [#allocation4], 256
    $region25: #{tpu_custom_call.1} parent=1 // pred_fallthru
      _
    %4560 = vsyncpa [#allocation3], 1
    %4561 = vsyncpa [#allocation6], 1
    %4562 = vsyncpa [#allocation4], 1

// kernel: tpu_custom_call.1
$region0: #{tpu_custom_call.1}
  #allocation0 [shape = 'u32[]', space=smem, size = 0x4, offset = 0x4, fixed_abs, tag = 'smem constant byte address 0x4 - core index']
  #allocation1 [shape = 'u32[72,128]{1,0:T(1,128)}', space=vmem, size = 0x9000, scoped, tag = 'internal scratch']
  %s0 = inlined_call_operand.hbm [shape: f32[8,288], index: 0, kind: input, shape index: {}]
  %s1 = inlined_call_operand.hbm [shape: f32[288,288], index: 1, kind: input, shape index: {}]
  %s2 = inlined_call_operand.hbm [shape: f32[8,256], index: 2, kind: output, shape index: {}]
  %s3 = sld [smem:[#allocation0]]
  $region26: #{tpu_custom_call.1} parent=0
    _
  %s5 = ssub.s32 1, %s3
  %s6 = scalar_select 0, %s5, %s3
  $region1: #{tpu_custom_call.1} parent=0
    #allocation2 [shape = 'u8[12288]{0}', space=vmem, size = 0x3000, scoped, tag = 'input window, operand 0, single buffered']
    #allocation3 [shape = 's32[1]{0}', space=sflag, size = 0x4, scoped, tag = 'scoped memory for tpu_custom_call.1']
    #allocation4 [shape = 's32[1]{0}', space=sflag, size = 0x4, scoped, tag = 'scoped memory for tpu_custom_call.1']
    #allocation5 [shape = 'u8[442368]{0}', space=vmem, size = 0x6c000, scoped, tag = 'input window, operand 1, single buffered']
    #allocation6 [shape = 's32[1]{0}', space=sflag, size = 0x4, scoped, tag = 'scoped memory for tpu_custom_call.1']
    #allocation7 [shape = 'u8[8192]{0}', space=vmem, size = 0x2000, scoped, tag = 'output window, operand 0, single buffered']
    %7 = vsyncpa [#allocation3], 0
    %8 = vsyncpa [#allocation6], 0
    %9 = vsyncpa [#allocation4], 0
    // Predicated region
    $region2: #{tpu_custom_call.1} parent=1 // pred_check
      _
    $region3: #{tpu_custom_call.1} parent=1 // pred_check_branch
      %11 = sbr.rel (0) target = $region5
    $region4: #{tpu_custom_call.1} parent=1 // pred_region
      %13 = vsyncadd [#allocation3], 0
      %s15 = sshll.u32 %s0, 4
      %s16 = int_to_ptr.hbm [resolvable:$true] %s15
      %s17 = sshll.u32 [#allocation2], 4
      %s18 = int_to_ptr.vmem [resolvable:$true] %s17
      %20 = dma.hbm_to_vmem [thread:$0]  %s16, 384, %s18, [#allocation3]
    $region5: #{tpu_custom_call.1} parent=1 // pred_fallthru
      _
    // Predicated region
    $region6: #{tpu_custom_call.1} parent=1 // pred_check
      _
    $region7: #{tpu_custom_call.1} parent=1 // pred_check_branch
      %22 = sbr.rel (0) target = $region9
    $region8: #{tpu_custom_call.1} parent=1 // pred_region
      %24 = vsyncadd [#allocation6], 0
      %s25 = sshll.u32 %s1, 4
      %s26 = int_to_ptr.hbm [resolvable:$true] %s25
      %s27 = sshll.u32 [#allocation5], 4
      %s28 = int_to_ptr.vmem [resolvable:$true] %s27
      %33 = dma.hbm_to_vmem [thread:$0]  %s26, 13824, %s28, [#allocation6], 384, 384, 24
    $region9: #{tpu_custom_call.1} parent=1 // pred_fallthru
      _
    // Predicated region
    $region10: #{tpu_custom_call.1} parent=1 // pred_check
      _
    $region11: #{tpu_custom_call.1} parent=1 // pred_check_branch
      %35 = sbr.rel (0) target = $region13
    $region12: #{tpu_custom_call.1} parent=1 // pred_region
      %37 = dma.done [#allocation3], 384
    $region13: #{tpu_custom_call.1} parent=1 // pred_fallthru
      _
    // Predicated region
    $region14: #{tpu_custom_call.1} parent=1 // pred_check
      _
    $region15: #{tpu_custom_call.1} parent=1 // pred_check_branch
      %39 = sbr.rel (0) target = $region17
    $region16: #{tpu_custom_call.1} parent=1 // pred_region
      %41 = dma.done [#allocation6], 13824
    $region17: #{tpu_custom_call.1} parent=1 // pred_fallthru
      _
    %v42 = vld [vmem:[#allocation2] sm:$0xff]
    %v43 = vld [vmem:[#allocation2 + $0x8] sm:$0xff]
    %v44 = vld [vmem:[#allocation2 + $0x10] sm:$0xff]
    %v45 = vld [vmem:[#allocation5] sm:$0xff]
    %v46 = vld [vmem:[#allocation5 + $0x8] sm:$0xff]
    %v47 = vld [vmem:[#allocation5 + $0x10] sm:$0xff]
    %v48 = vld [vmem:[#allocation5 + $0x18] sm:$0xff]
    %v49 = vld [vmem:[#allocation5 + $0x20] sm:$0xff]
    %v50 = vld [vmem:[#allocation5 + $0x28] sm:$0xff]
    %v51 = vld [vmem:[#allocation5 + $0x30] sm:$0xff]
    %v52 = vld [vmem:[#allocation5 + $0x38] sm:$0xff]
    %v53 = vld [vmem:[#allocation5 + $0x40] sm:$0xff]
    %v54 = vld [vmem:[#allocation5 + $0x48] sm:$0xff]
    %v55 = vld [vmem:[#allocation5 + $0x50] sm:$0xff]
    %v56 = vld [vmem:[#allocation5 + $0x58] sm:$0xff]
    %v57 = vld [vmem:[#allocation5 + $0x60] sm:$0xff]
    %v58 = vld [vmem:[#allocation5 + $0x68] sm:$0xff]
    %v59 = vld [vmem:[#allocation5 + $0x70] sm:$0xff]
    %v60 = vld [vmem:[#allocation5 + $0x78] sm:$0xff]
    %v61 = vld [vmem:[#allocation5 + $0x80] sm:$0xff]
    %v62 = vld [vmem:[#allocation5 + $0x88] sm:$0xff]
    %v63 = vld [vmem:[#allocation5 + $0x90] sm:$0xff]
    %v64 = vld [vmem:[#allocation5 + $0x98] sm:$0xff]
    %v65 = vld [vmem:[#allocation5 + $0xa0] sm:$0xff]
    %v66 = vld [vmem:[#allocation5 + $0xa8] sm:$0xff]
    %v67 = vld [vmem:[#allocation5 + $0xb0] sm:$0xff]
    %v68 = vld [vmem:[#allocation5 + $0xb8] sm:$0xff]
    %v69 = vld [vmem:[#allocation5 + $0xc0] sm:$0xff]
    %v70 = vld [vmem:[#allocation5 + $0xc8] sm:$0xff]
    %v71 = vld [vmem:[#allocation5 + $0xd0] sm:$0xff]
    %v72 = vld [vmem:[#allocation5 + $0xd8] sm:$0xff]
    %v73 = vld [vmem:[#allocation5 + $0xe0] sm:$0xff]
    %v74 = vld [vmem:[#allocation5 + $0xe8] sm:$0xff]
    %v75 = vld [vmem:[#allocation5 + $0xf0] sm:$0xff]
    %v76 = vld [vmem:[#allocation5 + $0xf8] sm:$0xff]
    %v77 = vld [vmem:[#allocation5 + $0x100] sm:$0xff]
    %v78 = vld [vmem:[#allocation5 + $0x108] sm:$0xff]
    %v79 = vld [vmem:[#allocation5 + $0x110] sm:$0xff]
    %v80 = vld [vmem:[#allocation5 + $0x118] sm:$0xff]
    %v81 = vld [vmem:[#allocation5 + $0x120] sm:$0xff]
    %v82 = vld [vmem:[#allocation5 + $0x128] sm:$0xff]
    %v83 = vld [vmem:[#allocation5 + $0x130] sm:$0xff]
    %v84 = vld [vmem:[#allocation5 + $0x138] sm:$0xff]
    %v85 = vld [vmem:[#allocation5 + $0x140] sm:$0xff]
    %v86 = vld [vmem:[#allocation5 + $0x148] sm:$0xff]
    %v87 = vld [vmem:[#allocation5 + $0x150] sm:$0xff]
    %v88 = vld [vmem:[#allocation5 + $0x158] sm:$0xff]
    %v89 = vld [vmem:[#allocation5 + $0x160] sm:$0xff]
    %v90 = vld [vmem:[#allocation5 + $0x168] sm:$0xff]
    %v91 = vld [vmem:[#allocation5 + $0x170] sm:$0xff]
    %v92 = vld [vmem:[#allocation5 + $0x178] sm:$0xff]
    %v93 = vld [vmem:[#allocation5 + $0x180] sm:$0xff]
    %v94 = vld [vmem:[#allocation5 + $0x188] sm:$0xff]
    %v95 = vld [vmem:[#allocation5 + $0x190] sm:$0xff]
    %v96 = vld [vmem:[#allocation5 + $0x198] sm:$0xff]
    %v97 = vld [vmem:[#allocation5 + $0x1a0] sm:$0xff]
    %v98 = vld [vmem:[#allocation5 + $0x1a8] sm:$0xff]
    %v99 = vld [vmem:[#allocation5 + $0x1b0] sm:$0xff]
    %v100 = vld [vmem:[#allocation5 + $0x1b8] sm:$0xff]
    %v101 = vld [vmem:[#allocation5 + $0x1c0] sm:$0xff]
    %v102 = vld [vmem:[#allocation5 + $0x1c8] sm:$0xff]
    %v103 = vld [vmem:[#allocation5 + $0x1d0] sm:$0xff]
    %v104 = vld [vmem:[#allocation5 + $0x1d8] sm:$0xff]
    %v105 = vld [vmem:[#allocation5 + $0x1e0] sm:$0xff]
    %v106 = vld [vmem:[#allocation5 + $0x1e8] sm:$0xff]
    %v107 = vld [vmem:[#allocation5 + $0x1f0] sm:$0xff]
    %v108 = vld [vmem:[#allocation5 + $0x1f8] sm:$0xff]
    %v109 = vld [vmem:[#allocation5 + $0x200] sm:$0xff]
    %v110 = vld [vmem:[#allocation5 + $0x208] sm:$0xff]
    %v111 = vld [vmem:[#allocation5 + $0x210] sm:$0xff]
    %v112 = vld [vmem:[#allocation5 + $0x218] sm:$0xff]
    %v113 = vld [vmem:[#allocation5 + $0x220] sm:$0xff]
    %v114 = vld [vmem:[#allocation5 + $0x228] sm:$0xff]
    %v115 = vld [vmem:[#allocation5 + $0x230] sm:$0xff]
    %v116 = vld [vmem:[#allocation5 + $0x238] sm:$0xff]
    %v117 = vld [vmem:[#allocation5 + $0x240] sm:$0xff]
    %v118 = vld [vmem:[#allocation5 + $0x248] sm:$0xff]
    %v119 = vld [vmem:[#allocation5 + $0x250] sm:$0xff]
    %v120 = vld [vmem:[#allocation5 + $0x258] sm:$0xff]
    %v121 = vld [vmem:[#allocation5 + $0x260] sm:$0xff]
    %v122 = vld [vmem:[#allocation5 + $0x268] sm:$0xff]
    %v123 = vld [vmem:[#allocation5 + $0x270] sm:$0xff]
    %v124 = vld [vmem:[#allocation5 + $0x278] sm:$0xff]
    %v125 = vld [vmem:[#allocation5 + $0x280] sm:$0xff]
    %v126 = vld [vmem:[#allocation5 + $0x288] sm:$0xff]
    %v127 = vld [vmem:[#allocation5 + $0x290] sm:$0xff]
    %v128 = vld [vmem:[#allocation5 + $0x298] sm:$0xff]
    %v129 = vld [vmem:[#allocation5 + $0x2a0] sm:$0xff]
    %v130 = vld [vmem:[#allocation5 + $0x2a8] sm:$0xff]
    %v131 = vld [vmem:[#allocation5 + $0x2b0] sm:$0xff]
    %v132 = vld [vmem:[#allocation5 + $0x2b8] sm:$0xff]
    %v133 = vld [vmem:[#allocation5 + $0x2c0] sm:$0xff]
    %v134 = vld [vmem:[#allocation5 + $0x2c8] sm:$0xff]
    %v135 = vld [vmem:[#allocation5 + $0x2d0] sm:$0xff]
    %v136 = vld [vmem:[#allocation5 + $0x2d8] sm:$0xff]
    %v137 = vld [vmem:[#allocation5 + $0x2e0] sm:$0xff]
    %v138 = vld [vmem:[#allocation5 + $0x2e8] sm:$0xff]
    %v139 = vld [vmem:[#allocation5 + $0x2f0] sm:$0xff]
    %v140 = vld [vmem:[#allocation5 + $0x2f8] sm:$0xff]
    %v141 = vld [vmem:[#allocation5 + $0x300] sm:$0xff]
    %v142 = vld [vmem:[#allocation5 + $0x308] sm:$0xff]
    %v143 = vld [vmem:[#allocation5 + $0x310] sm:$0xff]
    %v144 = vld [vmem:[#allocation5 + $0x318] sm:$0xff]
    %v145 = vld [vmem:[#allocation5 + $0x320] sm:$0xff]
    %v146 = vld [vmem:[#allocation5 + $0x328] sm:$0xff]
    %v147 = vld [vmem:[#allocation5 + $0x330] sm:$0xff]
    %v148 = vld [vmem:[#allocation5 + $0x338] sm:$0xff]
    %v149 = vld [vmem:[#allocation5 + $0x340] sm:$0xff]
    %v150 = vld [vmem:[#allocation5 + $0x348] sm:$0xff]
    %v151 = vld [vmem:[#allocation5 + $0x350] sm:$0xff]
    %v152 = vld [vmem:[#allocation5 + $0x358] sm:$0xff]
    %vm153 = vcmask 261120
    %v155 = vsel %vm153, %v44, 0
    %157 = vmatpush.msra.mxu0 %v90
    %158 = vmatpush.msra.mxu0 %v87
    %159 = vmatpush.msra.mxu0 %v84
    %160 = vmatpush.msra.mxu0 %v81
    %161 = vmatpush.msra.mxu0 %v78
    %162 = vmatpush.msra.mxu0 %v75
    %163 = vmatpush.msra.mxu0 %v72
    %164 = vmatpush.msra.mxu0 %v69
    %165 = vmatpush.msra.mxu0 %v66
    %166 = vmatpush.msra.mxu0 %v63
    %167 = vmatpush.msra.mxu0 %v60
    %168 = vmatpush.msra.mxu0 %v57
    %169 = vmatpush.msra.mxu0 %v54
    %170 = vmatpush.msra.mxu0 %v51
    %171 = vmatpush.msra.mxu0 %v48
    %172 = vmatpush.msra.mxu0 %v45
    %173 = vmatmul.f32.gmra.mxu0 %v42
    %v174 = vpop.f32.mrf.mxu0
    %v175 = vadd.f32 0.0, %v174
    %176 = vdwg.mxu0
    %177 = vmatpush.msra.mxu0 %v138
    %178 = vmatpush.msra.mxu0 %v135
    %179 = vmatpush.msra.mxu0 %v132
    %180 = vmatpush.msra.mxu0 %v129
    %181 = vmatpush.msra.mxu0 %v126
    %182 = vmatpush.msra.mxu0 %v123
    %183 = vmatpush.msra.mxu0 %v120
    %184 = vmatpush.msra.mxu0 %v117
    %185 = vmatpush.msra.mxu0 %v114
    %186 = vmatpush.msra.mxu0 %v111
    %187 = vmatpush.msra.mxu0 %v108
    %188 = vmatpush.msra.mxu0 %v105
    %189 = vmatpush.msra.mxu0 %v102
    %190 = vmatpush.msra.mxu0 %v99
    %191 = vmatpush.msra.mxu0 %v96
    %192 = vmatpush.msra.mxu0 %v93
    %193 = vmatmul.f32.gmra.mxu0 %v43
    %v194 = vpop.f32.mrf.mxu0
    %v195 = vadd.f32 %v175, %v194
    %196 = vdwg.mxu0
    %197 = vmatpush.msra.mxu0 0.0
    %198 = vmatpush.msra.mxu0 0.0
    %199 = vmatpush.msra.mxu0 0.0
    %200 = vmatpush.msra.mxu0 0.0
    %201 = vmatpush.msra.mxu0 0.0
    %202 = vmatpush.msra.mxu0 0.0
    %203 = vmatpush.msra.mxu0 0.0
    %204 = vmatpush.msra.mxu0 0.0
    %205 = vmatpush.msra.mxu0 0.0
    %206 = vmatpush.msra.mxu0 0.0
    %207 = vmatpush.msra.mxu0 0.0
    %208 = vmatpush.msra.mxu0 0.0
    %209 = vmatpush.msra.mxu0 %v150
    %210 = vmatpush.msra.mxu0 %v147
    %211 = vmatpush.msra.mxu0 %v144
    %212 = vmatpush.msra.mxu0 %v141
    %213 = vmatmul.f32.gmra.mxu0 %v155
    %v214 = vpop.f32.mrf.mxu0
    %v215 = vadd.f32 %v195, %v214
    %216 = vdwg.mxu0
    %217 = vmatpush.msra.mxu0 %v91
    %218 = vmatpush.msra.mxu0 %v88
    %219 = vmatpush.msra.mxu0 %v85
    %220 = vmatpush.msra.mxu0 %v82
    %221 = vmatpush.msra.mxu0 %v79
    %222 = vmatpush.msra.mxu0 %v76
    %223 = vmatpush.msra.mxu0 %v73
    %224 = vmatpush.msra.mxu0 %v70
    %225 = vmatpush.msra.mxu0 %v67
    %226 = vmatpush.msra.mxu0 %v64
    %227 = vmatpush.msra.mxu0 %v61
    %228 = vmatpush.msra.mxu0 %v58
    %229 = vmatpush.msra.mxu0 %v55
    %230 = vmatpush.msra.mxu0 %v52
    %231 = vmatpush.msra.mxu0 %v49
    %232 = vmatpush.msra.mxu0 %v46
    %233 = vmatmul.f32.gmra.mxu0 %v42
    %v234 = vpop.f32.mrf.mxu0
    %v235 = vadd.f32 0.0, %v234
    %236 = vdwg.mxu0
    %237 = vmatpush.msra.mxu0 %v139
    %238 = vmatpush.msra.mxu0 %v136
    %239 = vmatpush.msra.mxu0 %v133
    %240 = vmatpush.msra.mxu0 %v130
    %241 = vmatpush.msra.mxu0 %v127
    %242 = vmatpush.msra.mxu0 %v124
    %243 = vmatpush.msra.mxu0 %v121
    %244 = vmatpush.msra.mxu0 %v118
    %245 = vmatpush.msra.mxu0 %v115
    %246 = vmatpush.msra.mxu0 %v112
    %247 = vmatpush.msra.mxu0 %v109
    %248 = vmatpush.msra.mxu0 %v106
    %249 = vmatpush.msra.mxu0 %v103
    %250 = vmatpush.msra.mxu0 %v100
    %251 = vmatpush.msra.mxu0 %v97
    %252 = vmatpush.msra.mxu0 %v94
    %253 = vmatmul.f32.gmra.mxu0 %v43
    %v254 = vpop.f32.mrf.mxu0
    %v255 = vadd.f32 %v235, %v254
    %256 = vdwg.mxu0
    %257 = vmatpush.msra.mxu0 0.0
    %258 = vmatpush.msra.mxu0 0.0
    %259 = vmatpush.msra.mxu0 0.0
    %260 = vmatpush.msra.mxu0 0.0
    %261 = vmatpush.msra.mxu0 0.0
    %262 = vmatpush.msra.mxu0 0.0
    %263 = vmatpush.msra.mxu0 0.0
    %264 = vmatpush.msra.mxu0 0.0
    %265 = vmatpush.msra.mxu0 0.0
    %266 = vmatpush.msra.mxu0 0.0
    %267 = vmatpush.msra.mxu0 0.0
    %268 = vmatpush.msra.mxu0 0.0
    %269 = vmatpush.msra.mxu0 %v151
    %270 = vmatpush.msra.mxu0 %v148
    %271 = vmatpush.msra.mxu0 %v145
    %272 = vmatpush.msra.mxu0 %v142
    %273 = vmatmul.f32.gmra.mxu0 %v155
    %v274 = vpop.f32.mrf.mxu0
    %v275 = vadd.f32 %v255, %v274
    %276 = vdwg.mxu0
    %277 = vmatpush.msra.mxu0 %v92
    %278 = vmatpush.msra.mxu0 %v89
    %279 = vmatpush.msra.mxu0 %v86
    %280 = vmatpush.msra.mxu0 %v83
    %281 = vmatpush.msra.mxu0 %v80
    %282 = vmatpush.msra.mxu0 %v77
    %283 = vmatpush.msra.mxu0 %v74
    %284 = vmatpush.msra.mxu0 %v71
    %285 = vmatpush.msra.mxu0 %v68
    %286 = vmatpush.msra.mxu0 %v65
    %287 = vmatpush.msra.mxu0 %v62
    %288 = vmatpush.msra.mxu0 %v59
    %289 = vmatpush.msra.mxu0 %v56
    %290 = vmatpush.msra.mxu0 %v53
    %291 = vmatpush.msra.mxu0 %v50
    %292 = vmatpush.msra.mxu0 %v47
    %293 = vmatmul.f32.gmra.mxu0 %v42
    %v294 = vpop.f32.mrf.mxu0
    %v295 = vadd.f32 0.0, %v294
    %296 = vdwg.mxu0
    %297 = vmatpush.msra.mxu0 %v140
    %298 = vmatpush.msra.mxu0 %v137
    %299 = vmatpush.msra.mxu0 %v134
    %300 = vmatpush.msra.mxu0 %v131
    %301 = vmatpush.msra.mxu0 %v128
    %302 = vmatpush.msra.mxu0 %v125
    %303 = vmatpush.msra.mxu0 %v122
    %304 = vmatpush.msra.mxu0 %v119
    %305 = vmatpush.msra.mxu0 %v116
    %306 = vmatpush.msra.mxu0 %v113
    %307 = vmatpush.msra.mxu0 %v110
    %308 = vmatpush.msra.mxu0 %v107
    %309 = vmatpush.msra.mxu0 %v104
    %310 = vmatpush.msra.mxu0 %v101
    %311 = vmatpush.msra.mxu0 %v98
    %312 = vmatpush.msra.mxu0 %v95
    %313 = vmatmul.f32.gmra.mxu0 %v43
    %v314 = vpop.f32.mrf.mxu0
    %v315 = vadd.f32 %v295, %v314
    %316 = vdwg.mxu0
    %317 = vmatpush.msra.mxu0 0.0
    %318 = vmatpush.msra.mxu0 0.0
    %319 = vmatpush.msra.mxu0 0.0
    %320 = vmatpush.msra.mxu0 0.0
    %321 = vmatpush.msra.mxu0 0.0
    %322 = vmatpush.msra.mxu0 0.0
    %323 = vmatpush.msra.mxu0 0.0
    %324 = vmatpush.msra.mxu0 0.0
    %325 = vmatpush.msra.mxu0 0.0
    %326 = vmatpush.msra.mxu0 0.0
    %327 = vmatpush.msra.mxu0 0.0
    %328 = vmatpush.msra.mxu0 0.0
    %329 = vmatpush.msra.mxu0 %v152
    %330 = vmatpush.msra.mxu0 %v149
    %331 = vmatpush.msra.mxu0 %v146
    %332 = vmatpush.msra.mxu0 %v143
    %333 = vmatmul.f32.gmra.mxu0 %v155
    %v334 = vpop.f32.mrf.mxu0
    %v335 = vadd.f32 %v315, %v334
    %336 = vdwg.mxu0
    %v337 = vmul.f32 %v42, %v215
    %v338 = vmul.f32 %v43, %v275
    %v339 = vmul.f32 %v44, %v335
    %vm340 = vcmp.gt.f32.partialorder %v337, 0.0
    %vm341 = vcmp.gt.f32.partialorder %v338, 0.0
    %vm342 = vcmp.gt.f32.partialorder %v339, 0.0
    %v343 = vmul.f32 %v337, 0.01
    %v344 = vmul.f32 %v338, 0.01
    %v345 = vmul.f32 %v339, 0.01
    %v346 = vsel %vm340, %v337, %v343
    %v347 = vsel %vm341, %v338, %v344
    %v348 = vsel %vm342, %v339, %v345
    %v350 = vsel %vm153, %v348, 0
    %352 = vmatpush.msra.mxu0 %v90
    %353 = vmatpush.msra.mxu0 %v87
    %354 = vmatpush.msra.mxu0 %v84
    %355 = vmatpush.msra.mxu0 %v81
    %356 = vmatpush.msra.mxu0 %v78
    %357 = vmatpush.msra.mxu0 %v75
    %358 = vmatpush.msra.mxu0 %v72
    %359 = vmatpush.msra.mxu0 %v69
    %360 = vmatpush.msra.mxu0 %v66
    %361 = vmatpush.msra.mxu0 %v63
    %362 = vmatpush.msra.mxu0 %v60
    %363 = vmatpush.msra.mxu0 %v57
    %364 = vmatpush.msra.mxu0 %v54
    %365 = vmatpush.msra.mxu0 %v51
    %366 = vmatpush.msra.mxu0 %v48
    %367 = vmatpush.msra.mxu0 %v45
    %368 = vmatmul.f32.gmra.mxu0 %v346
    %v369 = vpop.f32.mrf.mxu0
    %v370 = vadd.f32 0.0, %v369
    %371 = vdwg.mxu0
    %372 = vmatpush.msra.mxu0 %v138
    %373 = vmatpush.msra.mxu0 %v135
    %374 = vmatpush.msra.mxu0 %v132
    %375 = vmatpush.msra.mxu0 %v129
    %376 = vmatpush.msra.mxu0 %v126
    %377 = vmatpush.msra.mxu0 %v123
    %378 = vmatpush.msra.mxu0 %v120
    %379 = vmatpush.msra.mxu0 %v117
    %380 = vmatpush.msra.mxu0 %v114
    %381 = vmatpush.msra.mxu0 %v111
    %382 = vmatpush.msra.mxu0 %v108
    %383 = vmatpush.msra.mxu0 %v105
    %384 = vmatpush.msra.mxu0 %v102
    %385 = vmatpush.msra.mxu0 %v99
    %386 = vmatpush.msra.mxu0 %v96
    %387 = vmatpush.msra.mxu0 %v93
    %388 = vmatmul.f32.gmra.mxu0 %v347
    %v389 = vpop.f32.mrf.mxu0
    %v390 = vadd.f32 %v370, %v389
    %391 = vdwg.mxu0
    %392 = vmatpush.msra.mxu0 0.0
    %393 = vmatpush.msra.mxu0 0.0
    %394 = vmatpush.msra.mxu0 0.0
    %395 = vmatpush.msra.mxu0 0.0
    %396 = vmatpush.msra.mxu0 0.0
    %397 = vmatpush.msra.mxu0 0.0
    %398 = vmatpush.msra.mxu0 0.0
    %399 = vmatpush.msra.mxu0 0.0
    %400 = vmatpush.msra.mxu0 0.0
    %401 = vmatpush.msra.mxu0 0.0
    %402 = vmatpush.msra.mxu0 0.0
    %403 = vmatpush.msra.mxu0 0.0
    %404 = vmatpush.msra.mxu0 %v150
    %405 = vmatpush.msra.mxu0 %v147
    %406 = vmatpush.msra.mxu0 %v144
    %407 = vmatpush.msra.mxu0 %v141
    %408 = vmatmul.f32.gmra.mxu0 %v350
    %v409 = vpop.f32.mrf.mxu0
    %v410 = vadd.f32 %v390, %v409
    %411 = vdwg.mxu0
    %412 = vmatpush.msra.mxu0 %v91
    %413 = vmatpush.msra.mxu0 %v88
    %414 = vmatpush.msra.mxu0 %v85
    %415 = vmatpush.msra.mxu0 %v82
    %416 = vmatpush.msra.mxu0 %v79
    %417 = vmatpush.msra.mxu0 %v76
    %418 = vmatpush.msra.mxu0 %v73
    %419 = vmatpush.msra.mxu0 %v70
    %420 = vmatpush.msra.mxu0 %v67
    %421 = vmatpush.msra.mxu0 %v64
    %422 = vmatpush.msra.mxu0 %v61
    %423 = vmatpush.msra.mxu0 %v58
    %424 = vmatpush.msra.mxu0 %v55
    %425 = vmatpush.msra.mxu0 %v52
    %426 = vmatpush.msra.mxu0 %v49
    %427 = vmatpush.msra.mxu0 %v46
    %428 = vmatmul.f32.gmra.mxu0 %v346
    %v429 = vpop.f32.mrf.mxu0
    %v430 = vadd.f32 0.0, %v429
    %431 = vdwg.mxu0
    %432 = vmatpush.msra.mxu0 %v139
    %433 = vmatpush.msra.mxu0 %v136
    %434 = vmatpush.msra.mxu0 %v133
    %435 = vmatpush.msra.mxu0 %v130
    %436 = vmatpush.msra.mxu0 %v127
    %437 = vmatpush.msra.mxu0 %v124
    %438 = vmatpush.msra.mxu0 %v121
    %439 = vmatpush.msra.mxu0 %v118
    %440 = vmatpush.msra.mxu0 %v115
    %441 = vmatpush.msra.mxu0 %v112
    %442 = vmatpush.msra.mxu0 %v109
    %443 = vmatpush.msra.mxu0 %v106
    %444 = vmatpush.msra.mxu0 %v103
    %445 = vmatpush.msra.mxu0 %v100
    %446 = vmatpush.msra.mxu0 %v97
    %447 = vmatpush.msra.mxu0 %v94
    %448 = vmatmul.f32.gmra.mxu0 %v347
    %v449 = vpop.f32.mrf.mxu0
    %v450 = vadd.f32 %v430, %v449
    %451 = vdwg.mxu0
    %452 = vmatpush.msra.mxu0 0.0
    %453 = vmatpush.msra.mxu0 0.0
    %454 = vmatpush.msra.mxu0 0.0
    %455 = vmatpush.msra.mxu0 0.0
    %456 = vmatpush.msra.mxu0 0.0
    %457 = vmatpush.msra.mxu0 0.0
    %458 = vmatpush.msra.mxu0 0.0
    %459 = vmatpush.msra.mxu0 0.0
    %460 = vmatpush.msra.mxu0 0.0
    %461 = vmatpush.msra.mxu0 0.0
    %462 = vmatpush.msra.mxu0 0.0
    %463 = vmatpush.msra.mxu0 0.0
    %464 = vmatpush.msra.mxu0 %v151
    %465 = vmatpush.msra.mxu0 %v148
    %466 = vmatpush.msra.mxu0 %v145
    %467 = vmatpush.msra.mxu0 %v142
    %468 = vmatmul.f32.gmra.mxu0 %v350
    %v469 = vpop.f32.mrf.mxu0
    %v470 = vadd.f32 %v450, %v469
    %471 = vdwg.mxu0
    %474 = vrot.lane.b32.xlu0 %v410, 32
    %v475 = vpop.permute.xlu0 %474
    %476 = vrot.lane.b32.xlu0 %v470, 32
    %v477 = vpop.permute.xlu0 %476
    %v478 = vsel %vm153, %v475, %v477
    %v482 = vmul.f32 %v346, %v475
    %v483 = vmul.f32 %v347, %v478
    %v484 = vmul.f32 %v348, %v477
    %vm485 = vcmp.gt.f32.partialorder %v482, 0.0
    %vm486 = vcmp.gt.f32.partialorder %v483, 0.0
    %vm487 = vcmp.gt.f32.partialorder %v484, 0.0
    %v488 = vmul.f32 %v482, 0.01
    %v489 = vmul.f32 %v483, 0.01
    %v490 = vmul.f32 %v484, 0.01
    %v491 = vsel %vm485, %v482, %v488
    %v492 = vsel %vm486, %v483, %v489
    %v493 = vsel %vm487, %v484, %v490
    %497 = vrot.lane.b32.xlu0 %v491, 96
    %v498 = vpop.permute.xlu0 %497
    %499 = vrot.lane.b32.xlu0 %v492, 96
    %v500 = vpop.permute.xlu0 %499
    %501 = vrot.lane.b32.xlu0 %v493, 96
    %v502 = vpop.permute.xlu0 %501
    %vm503 = vcmask 785408
    %v504 = vsel %vm503, %v498, %v500
    %v505 = vsel %vm503, %v500, %v502
    %508 = vst [vmem:[#allocation7] sm:$0xff] %v504
    %509 = vst [vmem:[#allocation7 + $0x8] sm:$0xff] %v505
    // Predicated region
    $region18: #{tpu_custom_call.1} parent=1 // pred_check
      _
    $region19: #{tpu_custom_call.1} parent=1 // pred_check_branch
      %511 = sbr.rel (0) target = $region21
    $region20: #{tpu_custom_call.1} parent=1 // pred_region
      %513 = vsyncadd [#allocation4], 0
      %s515 = sshll.u32 [#allocation7], 4
      %s516 = int_to_ptr.vmem [resolvable:$true] %s515
      %s517 = sshll.u32 %s2, 4
      %s518 = int_to_ptr.hbm [resolvable:$true] %s517
      %520 = dma.vmem_to_hbm [thread:$0]  %s516, 256, %s518, [#allocation4]
    $region21: #{tpu_custom_call.1} parent=1 // pred_fallthru
      _
    // Predicated region
    $region22: #{tpu_custom_call.1} parent=1 // pred_check
      _
    $region23: #{tpu_custom_call.1} parent=1 // pred_check_branch
      %522 = sbr.rel (0) target = $region25
    $region24: #{tpu_custom_call.1} parent=1 // pred_region
      %524 = dma.done [#allocation4], 256
    $region25: #{tpu_custom_call.1} parent=1 // pred_fallthru
      _
    %525 = vsyncpa [#allocation3], 1
    %526 = vsyncpa [#allocation6], 1
    %527 = vsyncpa [#allocation4], 1

</llo_original>
